<compile_context>
chip_gen: v7x
topology: tpu7x:2x2x1
jax: 0.10.0
libtpu: 0.0.40
codegen_flags: <defaults>
</compile_context>

<pallas_src>
import functools

import jax
import jax.numpy as jnp
from jax.experimental import pallas as pl
from jax.experimental.pallas import tpu as pltpu


# ----------------------------------------------------------------------------
# Fused kernel: conv1(+Wg) -> adjacency -> conv2 -> BN (batch stats) -> ReLU
# Everything lives in VMEM; activations are (B*T, N*C) lane-dense.
# ----------------------------------------------------------------------------
def _stgcn_fused_kernel(xc_ref, w1_ref, b1_ref, a_ref, bg_ref, w2_ref, b2_ref,
                        gamma_ref, beta_ref, r_ref, o_ref, gpad_ref, *,
                        n_nodes):
    B, T, NC = o_ref.shape
    BT = B * T
    K = w2_ref.shape[0]
    pad = K // 2

    # --- conv1 (GCN weight Wg folded in): one MXU matmul, im2col'ed input ---
    xcols = xc_ref[...].astype(jnp.bfloat16).reshape(BT, xc_ref.shape[2])
    y = jnp.dot(xcols, w1_ref[...], preferred_element_type=jnp.float32)
    y = y + b1_ref[...]                                     # (B*T, N*C) f32

    # --- GCN node mixing for all (b, t): one lane-dense 512-wide matmul ---
    g = jnp.dot(y.astype(jnp.bfloat16), a_ref[...],
                preferred_element_type=jnp.float32) + bg_ref[...]

    # --- conv2: slide K taps over a zero-padded VMEM scratch (no concat of
    #     zeros); each tap is a full-depth (contraction = N*C) MXU matmul ---
    gpad_ref[...] = jnp.zeros_like(gpad_ref)
    gpad_ref[:, pad:pad + T, :] = g.reshape(B, T, NC)
    gpb = gpad_ref[...].astype(jnp.bfloat16)                # (B, T+2*pad, N*C)
    z = jnp.zeros((BT, NC), jnp.float32)
    for k in range(K):                                      # K = 3, static
        z = z + jnp.dot(gpb[:, k:k + T, :].reshape(BT, NC), w2_ref[k],
                        preferred_element_type=jnp.float32)
    z = z + b2_ref[...]

    # --- BatchNorm2d (training-mode batch stats, biased var) + ReLU, f32 ---
    # Per-channel stats over (B, T, N): rows reduced with jnp.sum, the N node
    # groups of lanes reduced (and broadcast back to all lanes) with the 0/1
    # matrix R = kron(ones(N,N), I_C) via an f32 MXU matmul.
    cnt = float(BT * n_nodes)
    mean = jnp.sum(jnp.dot(z, r_ref[...], preferred_element_type=jnp.float32),
                   axis=0, keepdims=True) / cnt             # (1, N*C)
    centered = z - mean
    var = jnp.sum(jnp.dot(centered * centered, r_ref[...],
                          preferred_element_type=jnp.float32),
                  axis=0, keepdims=True) / cnt              # biased variance
    inv = jax.lax.rsqrt(var + 1e-5)
    out = jnp.maximum(centered * inv * gamma_ref[...] + beta_ref[...], 0.0)
    o_ref[...] = out.reshape(B, T, NC).astype(o_ref.dtype)


# ----------------------------------------------------------------------------
# Wrapper: trace-time parameter prep (kron expansion, Wg fold, im2col) + call
# ----------------------------------------------------------------------------
def stgcn_block(x, params, adj):
    B, T, N, Cin = x.shape
    K, _, Cout = params['w1'].shape
    assert K % 2 == 1, "odd temporal kernel assumed (so T is preserved)"
    pad = K // 2
    Tp = T + 2 * pad
    NC = N * Cout

    f32 = jnp.float32
    eyeN = jnp.eye(N, dtype=f32)
    eyeC = jnp.eye(Cout, dtype=f32)

    # Fold GCN weight into conv1, kron-expand per-node weights so activations
    # stay in the lane-dense (rows, N*C) layout for every matmul.
    w1g = jnp.einsum('kio,od->kid', params['w1'], params['wg'])   # (K,Cin,Cout)
    W1_big = jnp.concatenate([jnp.kron(eyeN, w1g[k]) for k in range(K)],
                             axis=0).astype(jnp.bfloat16)     # (K*N*Cin, N*C)
    W2_big = jnp.stack([jnp.kron(eyeN, params['w2'][k]) for k in range(K)],
                       axis=0).astype(jnp.bfloat16)           # (K, N*C, N*C)
    A_big = jnp.kron(adj.T.astype(f32), eyeC).astype(jnp.bfloat16)  # (N*C, N*C)
    R = jnp.kron(jnp.ones((N, N), f32), eyeC)                 # (N*C, N*C) f32

    b1_big = jnp.tile(params['b1'] @ params['wg'], (1, N))    # (1, N*C)
    bg_big = jnp.tile(params['bg'], (1, N))
    b2_big = jnp.tile(params['b2'], (1, N))
    gamma_big = jnp.tile(params['gamma'], (1, N))
    beta_big = jnp.tile(params['beta'], (1, N))

    # Wrapper-side im2col of the input: lanes ordered (k, n, cin) to match
    # W1_big's row order -> conv1 is a single in-kernel dot.
    xpad = jnp.pad(x, ((0, 0), (pad, pad), (0, 0), (0, 0)))   # (B, Tp, N, Cin)
    xcols = jnp.stack([xpad[:, k:k + T] for k in range(K)], axis=2)
    xcols = xcols.reshape(B, T, K * N * Cin)

    out = pl.pallas_call(
        functools.partial(_stgcn_fused_kernel, n_nodes=N),
        out_shape=jax.ShapeDtypeStruct((B, T, NC), jnp.float32),
        grid=(1,),
        in_specs=[
            pl.BlockSpec((B, T, K * N * Cin), lambda i: (0, 0, 0)),
            pl.BlockSpec((K * N * Cin, NC), lambda i: (0, 0)),
            pl.BlockSpec((1, NC), lambda i: (0, 0)),
            pl.BlockSpec((NC, NC), lambda i: (0, 0)),
            pl.BlockSpec((1, NC), lambda i: (0, 0)),
            pl.BlockSpec((K, NC, NC), lambda i: (0, 0, 0)),
            pl.BlockSpec((1, NC), lambda i: (0, 0)),
            pl.BlockSpec((1, NC), lambda i: (0, 0)),
            pl.BlockSpec((1, NC), lambda i: (0, 0)),
            pl.BlockSpec((NC, NC), lambda i: (0, 0)),
        ],
        out_specs=pl.BlockSpec((B, T, NC), lambda i: (0, 0, 0)),
        scratch_shapes=[pltpu.VMEM((B, Tp, NC), jnp.float32)],
        compiler_params=pltpu.CompilerParams(
            # Fully fused single step: the whole block fits in VMEM, so there
            # is no batch grid axis.  For large B, grid over B with
            # ("parallel",) (v7x megacore) + a separate BN-stats pass.
            dimension_semantics=("arbitrary",)),
    )(xcols, W1_big, b1_big, A_big, bg_big, W2_big, b2_big,
      gamma_big, beta_big, R)

    return out.reshape(B, T, N, Cout)


# ----------------------------------------------------------------------------
# Glue: dense GCN-normalized adjacency from edge_index / edge_weights
# ----------------------------------------------------------------------------
def gcn_norm_adj(edge_index, edge_weights, num_nodes):
    src, dst = edge_index[0], edge_index[1]
    w = (edge_weights if edge_weights is not None
         else jnp.ones(src.shape[0], jnp.float32))
    A = jnp.zeros((num_nodes, num_nodes), jnp.float32).at[dst, src].add(w)
    A = A + jnp.eye(num_nodes, dtype=jnp.float32)             # add_self_loops
    deg = jnp.sum(A, axis=1)
    dinv = jnp.where(deg > 0, 1.0 / jnp.sqrt(deg), 0.0)
    return dinv[:, None] * A * dinv[None, :]


# ----------------------------------------------------------------------------
# Pure-JAX f32 reference (module semantics) for a sanity check
# ----------------------------------------------------------------------------
def reference(x, params, adj):
    K = params['w1'].shape[0]
    pad = K // 2
    T = x.shape[1]
    xpad = jnp.pad(x, ((0, 0), (pad, pad), (0, 0), (0, 0)))
    y = sum(jnp.einsum('btni,io->btno', xpad[:, k:k + T], params['w1'][k])
            for k in range(K)) + params['b1'][0]
    y = jnp.einsum('nm,btmc->btnc', adj, y)
    y = jnp.einsum('btnc,cd->btnd', y, params['wg']) + params['bg'][0]
    ypad = jnp.pad(y, ((0, 0), (pad, pad), (0, 0), (0, 0)))
    z = sum(jnp.einsum('btni,io->btno', ypad[:, k:k + T], params['w2'][k])
            for k in range(K)) + params['b2'][0]
    mean = jnp.mean(z, axis=(0, 1, 2), keepdims=True)
    var = jnp.mean((z - mean) ** 2, axis=(0, 1, 2), keepdims=True)
    out = (z - mean) / jnp.sqrt(var + 1e-5) * params['gamma'][0] + params['beta'][0]
    return jnp.maximum(out, 0.0)


if __name__ == "__main__":
    B, T, N, C_in, C_out, K = 2, 8, 16, 4, 32, 3

    key = jax.random.PRNGKey(0)
    ks = jax.random.split(key, 8)
    params = dict(
        w1=0.1 * jax.random.normal(ks[0], (K, C_in, C_out), jnp.float32),
        b1=0.1 * jax.random.normal(ks[1], (1, C_out), jnp.float32),
        wg=0.1 * jax.random.normal(ks[2], (C_out, C_out), jnp.float32),
        bg=0.1 * jax.random.normal(ks[3], (1, C_out), jnp.float32),
        w2=0.1 * jax.random.normal(ks[4], (K, C_out, C_out), jnp.float32),
        b2=0.1 * jax.random.normal(ks[5], (1, C_out), jnp.float32),
        gamma=jnp.ones((1, C_out), jnp.float32),
        beta=jnp.zeros((1, C_out), jnp.float32),
    )
    x = jax.random.normal(ks[6], (B, T, N, C_in), jnp.float32)

    # bidirectional ring graph over N nodes, unit edge weights
    nodes = jnp.arange(N)
    edge_index = jnp.stack([
        jnp.concatenate([nodes, (nodes + 1) % N]),
        jnp.concatenate([(nodes + 1) % N, nodes]),
    ])
    edge_weights = None
    adj = gcn_norm_adj(edge_index, edge_weights, N)

    out = stgcn_block(x, params, adj)
    out = jax.block_until_ready(out)

    ref = reference(x, params, adj)
    assert out.shape == (B, T, N, C_out)
    # Kernel uses bf16 MXU operands (f32 accumulation) per perf guidance; the
    # reference is pure f32 and BN normalizes z to O(1), so allow ~2% abs diff.
    assert float(jnp.max(jnp.abs(out - ref))) < 7.5e-2

    print("KERNEL_OK")
</pallas_src>

<mosaic_0001>
module attributes {stable_mosaic.version = 11 : i64} {
  func.func @_stgcn_fused_kernel(%arg0: i32, %arg1: memref<2x8x192xf32, #tpu.memory_space<vmem>>, %arg2: memref<192x512xbf16, #tpu.memory_space<vmem>>, %arg3: memref<1x512xf32, #tpu.memory_space<vmem>>, %arg4: memref<512x512xbf16, #tpu.memory_space<vmem>>, %arg5: memref<1x512xf32, #tpu.memory_space<vmem>>, %arg6: memref<3x512x512xbf16, #tpu.memory_space<vmem>>, %arg7: memref<1x512xf32, #tpu.memory_space<vmem>>, %arg8: memref<1x512xf32, #tpu.memory_space<vmem>>, %arg9: memref<1x512xf32, #tpu.memory_space<vmem>>, %arg10: memref<512x512xf32, #tpu.memory_space<vmem>>, %arg11: memref<2x8x512xf32, #tpu.memory_space<vmem>>, %arg12: memref<2x10x512xf32, #tpu.memory_space<vmem>>) attributes {dimension_semantics = [#tpu.dimension_semantics<arbitrary>], iteration_bounds = array<i64: 1>, scalar_prefetch = 0 : i64, scratch_operands = 1 : i64, tpu.core_type = #tpu.core_type<tc>, window_params = [{pipeline_mode = #tpu.pipeline_mode<synchronous>, transform_indices = @transform_0, window_bounds = array<i64: 2, 8, 192>}, {pipeline_mode = #tpu.pipeline_mode<synchronous>, transform_indices = @transform_1, window_bounds = array<i64: 192, 512>}, {pipeline_mode = #tpu.pipeline_mode<synchronous>, transform_indices = @transform_2, window_bounds = array<i64: 1, 512>}, {pipeline_mode = #tpu.pipeline_mode<synchronous>, transform_indices = @transform_3, window_bounds = array<i64: 512, 512>}, {pipeline_mode = #tpu.pipeline_mode<synchronous>, transform_indices = @transform_4, window_bounds = array<i64: 1, 512>}, {pipeline_mode = #tpu.pipeline_mode<synchronous>, transform_indices = @transform_5, window_bounds = array<i64: 3, 512, 512>}, {pipeline_mode = #tpu.pipeline_mode<synchronous>, transform_indices = @transform_6, window_bounds = array<i64: 1, 512>}, {pipeline_mode = #tpu.pipeline_mode<synchronous>, transform_indices = @transform_7, window_bounds = array<i64: 1, 512>}, {pipeline_mode = #tpu.pipeline_mode<synchronous>, transform_indices = @transform_8, window_bounds = array<i64: 1, 512>}, {pipeline_mode = #tpu.pipeline_mode<synchronous>, transform_indices = @transform_9, window_bounds = array<i64: 512, 512>}, {pipeline_mode = #tpu.pipeline_mode<synchronous>, transform_indices = @transform_10, window_bounds = array<i64: 2, 8, 512>}]} {
    %c0 = arith.constant 0 : index
    %c0_0 = arith.constant 0 : index
    %c0_1 = arith.constant 0 : index
    %0 = vector.load %arg1[%c0, %c0_0, %c0_1] : memref<2x8x192xf32, #tpu.memory_space<vmem>>, vector<2x8x192xf32>
    %1 = arith.truncf %0 : vector<2x8x192xf32> to vector<2x8x192xbf16>
    %2 = vector.shape_cast %1 : vector<2x8x192xbf16> to vector<16x192xbf16>
    %c0_2 = arith.constant 0 : index
    %c0_3 = arith.constant 0 : index
    %3 = vector.load %arg2[%c0_2, %c0_3] : memref<192x512xbf16, #tpu.memory_space<vmem>>, vector<192x512xbf16>
    %cst = arith.constant dense<0.000000e+00> : vector<16x512xf32>
    %4 = tpu.matmul %2, %3, %cst {dimension_numbers = #tpu.dot_dimension_numbers<[1], [0], [0], [1], [0, 0, 1, 1], [], []>} : vector<16x192xbf16>, vector<192x512xbf16>, vector<16x512xf32> -> vector<16x512xf32>
    %c0_4 = arith.constant 0 : index
    %c0_5 = arith.constant 0 : index
    %5 = vector.load %arg3[%c0_4, %c0_5] : memref<1x512xf32, #tpu.memory_space<vmem>>, vector<1x512xf32>
    %6 = vector.broadcast %5 : vector<1x512xf32> to vector<16x512xf32>
    %7 = arith.addf %4, %6 : vector<16x512xf32>
    %8 = arith.truncf %7 : vector<16x512xf32> to vector<16x512xbf16>
    %c0_6 = arith.constant 0 : index
    %c0_7 = arith.constant 0 : index
    %9 = vector.load %arg4[%c0_6, %c0_7] : memref<512x512xbf16, #tpu.memory_space<vmem>>, vector<512x512xbf16>
    %cst_8 = arith.constant dense<0.000000e+00> : vector<16x512xf32>
    %10 = tpu.matmul %8, %9, %cst_8 {dimension_numbers = #tpu.dot_dimension_numbers<[1], [0], [0], [1], [0, 0, 1, 1], [], []>} : vector<16x512xbf16>, vector<512x512xbf16>, vector<16x512xf32> -> vector<16x512xf32>
    %c0_9 = arith.constant 0 : index
    %c0_10 = arith.constant 0 : index
    %11 = vector.load %arg5[%c0_9, %c0_10] : memref<1x512xf32, #tpu.memory_space<vmem>>, vector<1x512xf32>
    %12 = vector.broadcast %11 : vector<1x512xf32> to vector<16x512xf32>
    %13 = arith.addf %10, %12 : vector<16x512xf32>
    %cst_11 = arith.constant 0.000000e+00 : f32
    %14 = vector.broadcast %cst_11 : f32 to vector<2x10x512xf32>
    %c0_12 = arith.constant 0 : index
    %c0_13 = arith.constant 0 : index
    %c0_14 = arith.constant 0 : index
    %15 = vector.load %arg12[%c0_12, %c0_13, %c0_14] : memref<2x10x512xf32, #tpu.memory_space<vmem>>, vector<2x10x512xf32>
    tpu.vector_store %arg12[%c0_12, %c0_13, %c0_14], %14 {strides = array<i32>} : memref<2x10x512xf32, #tpu.memory_space<vmem>>, vector<2x10x512xf32>,
    %16 = vector.shape_cast %13 : vector<16x512xf32> to vector<2x8x512xf32>
    %c0_15 = arith.constant 0 : index
    %c1 = arith.constant 1 : index
    %c0_16 = arith.constant 0 : index
    %17 = vector.load %arg12[%c0_15, %c1, %c0_16] : memref<2x10x512xf32, #tpu.memory_space<vmem>>, vector<2x8x512xf32>
    tpu.vector_store %arg12[%c0_15, %c1, %c0_16], %16 {strides = array<i32>} : memref<2x10x512xf32, #tpu.memory_space<vmem>>, vector<2x8x512xf32>,
    %c0_17 = arith.constant 0 : index
    %c0_18 = arith.constant 0 : index
    %c0_19 = arith.constant 0 : index
    %18 = vector.load %arg12[%c0_17, %c0_18, %c0_19] : memref<2x10x512xf32, #tpu.memory_space<vmem>>, vector<2x10x512xf32>
    %19 = arith.truncf %18 : vector<2x10x512xf32> to vector<2x10x512xbf16>
    %cst_20 = arith.constant 0.000000e+00 : f32
    %20 = vector.broadcast %cst_20 : f32 to vector<16x512xf32>
    %21 = vector.extract_strided_slice %19 {offsets = [0, 0, 0], sizes = [2, 8, 512], strides = [1, 1, 1]} : vector<2x10x512xbf16> to vector<2x8x512xbf16>
    %22 = vector.shape_cast %21 : vector<2x8x512xbf16> to vector<16x512xbf16>
    %c0_21 = arith.constant 0 : index
    %c0_22 = arith.constant 0 : index
    %c0_23 = arith.constant 0 : index
    %23 = vector.load %arg6[%c0_21, %c0_22, %c0_23] : memref<3x512x512xbf16, #tpu.memory_space<vmem>>, vector<1x512x512xbf16>
    %24 = vector.shape_cast %23 : vector<1x512x512xbf16> to vector<512x512xbf16>
    %cst_24 = arith.constant dense<0.000000e+00> : vector<16x512xf32>
    %25 = tpu.matmul %22, %24, %cst_24 {dimension_numbers = #tpu.dot_dimension_numbers<[1], [0], [0], [1], [0, 0, 1, 1], [], []>} : vector<16x512xbf16>, vector<512x512xbf16>, vector<16x512xf32> -> vector<16x512xf32>
    %26 = arith.addf %20, %25 : vector<16x512xf32>
    %27 = vector.extract_strided_slice %19 {offsets = [0, 1, 0], sizes = [2, 8, 512], strides = [1, 1, 1]} : vector<2x10x512xbf16> to vector<2x8x512xbf16>
    %28 = vector.shape_cast %27 : vector<2x8x512xbf16> to vector<16x512xbf16>
    %c1_25 = arith.constant 1 : index
    %c0_26 = arith.constant 0 : index
    %c0_27 = arith.constant 0 : index
    %29 = vector.load %arg6[%c1_25, %c0_26, %c0_27] : memref<3x512x512xbf16, #tpu.memory_space<vmem>>, vector<1x512x512xbf16>
    %30 = vector.shape_cast %29 : vector<1x512x512xbf16> to vector<512x512xbf16>
    %cst_28 = arith.constant dense<0.000000e+00> : vector<16x512xf32>
    %31 = tpu.matmul %28, %30, %cst_28 {dimension_numbers = #tpu.dot_dimension_numbers<[1], [0], [0], [1], [0, 0, 1, 1], [], []>} : vector<16x512xbf16>, vector<512x512xbf16>, vector<16x512xf32> -> vector<16x512xf32>
    %32 = arith.addf %26, %31 : vector<16x512xf32>
    %33 = vector.extract_strided_slice %19 {offsets = [0, 2, 0], sizes = [2, 8, 512], strides = [1, 1, 1]} : vector<2x10x512xbf16> to vector<2x8x512xbf16>
    %34 = vector.shape_cast %33 : vector<2x8x512xbf16> to vector<16x512xbf16>
    %c2 = arith.constant 2 : index
    %c0_29 = arith.constant 0 : index
    %c0_30 = arith.constant 0 : index
    %35 = vector.load %arg6[%c2, %c0_29, %c0_30] : memref<3x512x512xbf16, #tpu.memory_space<vmem>>, vector<1x512x512xbf16>
    %36 = vector.shape_cast %35 : vector<1x512x512xbf16> to vector<512x512xbf16>
    %cst_31 = arith.constant dense<0.000000e+00> : vector<16x512xf32>
    %37 = tpu.matmul %34, %36, %cst_31 {dimension_numbers = #tpu.dot_dimension_numbers<[1], [0], [0], [1], [0, 0, 1, 1], [], []>} : vector<16x512xbf16>, vector<512x512xbf16>, vector<16x512xf32> -> vector<16x512xf32>
    %38 = arith.addf %32, %37 : vector<16x512xf32>
    %c0_32 = arith.constant 0 : index
    %c0_33 = arith.constant 0 : index
    %39 = vector.load %arg7[%c0_32, %c0_33] : memref<1x512xf32, #tpu.memory_space<vmem>>, vector<1x512xf32>
    %40 = vector.broadcast %39 : vector<1x512xf32> to vector<16x512xf32>
    %41 = arith.addf %38, %40 : vector<16x512xf32>
    %c0_34 = arith.constant 0 : index
    %c0_35 = arith.constant 0 : index
    %42 = vector.load %arg10[%c0_34, %c0_35] : memref<512x512xf32, #tpu.memory_space<vmem>>, vector<512x512xf32>
    %cst_36 = arith.constant dense<0.000000e+00> : vector<16x512xf32>
    %43 = tpu.matmul %41, %42, %cst_36 {dimension_numbers = #tpu.dot_dimension_numbers<[1], [0], [0], [1], [0, 0, 1, 1], [], []>} : vector<16x512xf32>, vector<512x512xf32>, vector<16x512xf32> -> vector<16x512xf32>
    %cst_37 = arith.constant dense<0.000000e+00> : vector<512xf32>
    %44 = vector.multi_reduction <add>, %43, %cst_37 [0] : vector<16x512xf32> to vector<512xf32>
    %45 = vector.shape_cast %44 : vector<512xf32> to vector<1x512xf32>
    %cst_38 = arith.constant 2.560000e+02 : f32
    %46 = vector.broadcast %cst_38 : f32 to vector<1x512xf32>
    %47 = arith.divf %45, %46 : vector<1x512xf32>
    %48 = vector.broadcast %47 : vector<1x512xf32> to vector<16x512xf32>
    %49 = arith.subf %41, %48 : vector<16x512xf32>
    %50 = arith.mulf %49, %49 : vector<16x512xf32>
    %c0_39 = arith.constant 0 : index
    %c0_40 = arith.constant 0 : index
    %51 = vector.load %arg10[%c0_39, %c0_40] : memref<512x512xf32, #tpu.memory_space<vmem>>, vector<512x512xf32>
    %cst_41 = arith.constant dense<0.000000e+00> : vector<16x512xf32>
    %52 = tpu.matmul %50, %51, %cst_41 {dimension_numbers = #tpu.dot_dimension_numbers<[1], [0], [0], [1], [0, 0, 1, 1], [], []>} : vector<16x512xf32>, vector<512x512xf32>, vector<16x512xf32> -> vector<16x512xf32>
    %cst_42 = arith.constant dense<0.000000e+00> : vector<512xf32>
    %53 = vector.multi_reduction <add>, %52, %cst_42 [0] : vector<16x512xf32> to vector<512xf32>
    %54 = vector.shape_cast %53 : vector<512xf32> to vector<1x512xf32>
    %cst_43 = arith.constant 2.560000e+02 : f32
    %55 = vector.broadcast %cst_43 : f32 to vector<1x512xf32>
    %56 = arith.divf %54, %55 : vector<1x512xf32>
    %cst_44 = arith.constant 9.99999974E-6 : f32
    %57 = vector.broadcast %cst_44 : f32 to vector<1x512xf32>
    %58 = arith.addf %56, %57 : vector<1x512xf32>
    %59 = math.rsqrt %58 : vector<1x512xf32>
    %60 = vector.broadcast %59 : vector<1x512xf32> to vector<16x512xf32>
    %61 = arith.mulf %49, %60 : vector<16x512xf32>
    %c0_45 = arith.constant 0 : index
    %c0_46 = arith.constant 0 : index
    %62 = vector.load %arg8[%c0_45, %c0_46] : memref<1x512xf32, #tpu.memory_space<vmem>>, vector<1x512xf32>
    %63 = vector.broadcast %62 : vector<1x512xf32> to vector<16x512xf32>
    %64 = arith.mulf %61, %63 : vector<16x512xf32>
    %c0_47 = arith.constant 0 : index
    %c0_48 = arith.constant 0 : index
    %65 = vector.load %arg9[%c0_47, %c0_48] : memref<1x512xf32, #tpu.memory_space<vmem>>, vector<1x512xf32>
    %66 = vector.broadcast %65 : vector<1x512xf32> to vector<16x512xf32>
    %67 = arith.addf %64, %66 : vector<16x512xf32>
    %cst_49 = arith.constant 0.000000e+00 : f32
    %68 = vector.broadcast %cst_49 : f32 to vector<16x512xf32>
    %69 = arith.maximumf %67, %68 : vector<16x512xf32>
    %70 = vector.shape_cast %69 : vector<16x512xf32> to vector<2x8x512xf32>
    %c0_50 = arith.constant 0 : index
    %c0_51 = arith.constant 0 : index
    %c0_52 = arith.constant 0 : index
    %71 = vector.load %arg11[%c0_50, %c0_51, %c0_52] : memref<2x8x512xf32, #tpu.memory_space<vmem>>, vector<2x8x512xf32>
    tpu.vector_store %arg11[%c0_50, %c0_51, %c0_52], %70 {strides = array<i32>} : memref<2x8x512xf32, #tpu.memory_space<vmem>>, vector<2x8x512xf32>,
    return
  }
  func.func @transform_0(%arg0: i32) -> (i32, i32, i32) {
    %c0_i32 = arith.constant 0 : i32
    %c0_i32_0 = arith.constant 0 : i32
    %c0_i32_1 = arith.constant 0 : i32
    %c0_i32_2 = arith.constant 0 : i32
    return %c0_i32, %c0_i32_0, %c0_i32_1 : i32, i32, i32
  }
  func.func @transform_1(%arg0: i32) -> (i32, i32) {
    %c0_i32 = arith.constant 0 : i32
    %c0_i32_0 = arith.constant 0 : i32
    %c0_i32_1 = arith.constant 0 : i32
    return %c0_i32, %c0_i32_0 : i32, i32
  }
  func.func @transform_2(%arg0: i32) -> (i32, i32) {
    %c0_i32 = arith.constant 0 : i32
    %c0_i32_0 = arith.constant 0 : i32
    %c0_i32_1 = arith.constant 0 : i32
    return %c0_i32, %c0_i32_0 : i32, i32
  }
  func.func @transform_3(%arg0: i32) -> (i32, i32) {
    %c0_i32 = arith.constant 0 : i32
    %c0_i32_0 = arith.constant 0 : i32
    %c0_i32_1 = arith.constant 0 : i32
    return %c0_i32, %c0_i32_0 : i32, i32
  }
  func.func @transform_4(%arg0: i32) -> (i32, i32) {
    %c0_i32 = arith.constant 0 : i32
    %c0_i32_0 = arith.constant 0 : i32
    %c0_i32_1 = arith.constant 0 : i32
    return %c0_i32, %c0_i32_0 : i32, i32
  }
  func.func @transform_5(%arg0: i32) -> (i32, i32, i32) {
    %c0_i32 = arith.constant 0 : i32
    %c0_i32_0 = arith.constant 0 : i32
    %c0_i32_1 = arith.constant 0 : i32
    %c0_i32_2 = arith.constant 0 : i32
    return %c0_i32, %c0_i32_0, %c0_i32_1 : i32, i32, i32
  }
  func.func @transform_6(%arg0: i32) -> (i32, i32) {
    %c0_i32 = arith.constant 0 : i32
    %c0_i32_0 = arith.constant 0 : i32
    %c0_i32_1 = arith.constant 0 : i32
    return %c0_i32, %c0_i32_0 : i32, i32
  }
  func.func @transform_7(%arg0: i32) -> (i32, i32) {
    %c0_i32 = arith.constant 0 : i32
    %c0_i32_0 = arith.constant 0 : i32
    %c0_i32_1 = arith.constant 0 : i32
    return %c0_i32, %c0_i32_0 : i32, i32
  }
  func.func @transform_8(%arg0: i32) -> (i32, i32) {
    %c0_i32 = arith.constant 0 : i32
    %c0_i32_0 = arith.constant 0 : i32
    %c0_i32_1 = arith.constant 0 : i32
    return %c0_i32, %c0_i32_0 : i32, i32
  }
  func.func @transform_9(%arg0: i32) -> (i32, i32) {
    %c0_i32 = arith.constant 0 : i32
    %c0_i32_0 = arith.constant 0 : i32
    %c0_i32_1 = arith.constant 0 : i32
    return %c0_i32, %c0_i32_0 : i32, i32
  }
  func.func @transform_10(%arg0: i32) -> (i32, i32, i32) {
    %c0_i32 = arith.constant 0 : i32
    %c0_i32_0 = arith.constant 0 : i32
    %c0_i32_1 = arith.constant 0 : i32
    %c0_i32_2 = arith.constant 0 : i32
    return %c0_i32, %c0_i32_0, %c0_i32_1 : i32, i32, i32
  }
}

</mosaic_0001>

<llo_original>
// kernel: tpu_custom_call.1
$region0: #{tpu_custom_call.1}
  #allocation0 [shape = 'u32[]', space=smem, size = 0x4, offset = 0x4, fixed_abs, tag = 'smem constant byte address 0x4 - core index']
  #allocation1 [shape = 'u32[144,128]{1,0:T(1,128)}', space=vmem, size = 0x12000, scoped, tag = 'internal scratch']
  #allocation2 [shape = 'f32[2,10,512]{2,1,0:T(8,128)}', space=vmem, size = 0x10000, scoped, tag = 'scratch operand']
  %s0 = inlined_call_operand.hbm [shape: f32[2,8,192], index: 0, kind: input, shape index: {}]
  %s1 = inlined_call_operand.hbm [shape: bf16[192,512], index: 1, kind: input, shape index: {}]
  %s2 = inlined_call_operand.hbm [shape: f32[1,512], index: 2, kind: input, shape index: {}]
  %s3 = inlined_call_operand.hbm [shape: bf16[512,512], index: 3, kind: input, shape index: {}]
  %s4 = inlined_call_operand.hbm [shape: f32[1,512], index: 4, kind: input, shape index: {}]
  %s5 = inlined_call_operand.hbm [shape: bf16[3,512,512], index: 5, kind: input, shape index: {}]
  %s6 = inlined_call_operand.hbm [shape: f32[1,512], index: 6, kind: input, shape index: {}]
  %s7 = inlined_call_operand.hbm [shape: f32[1,512], index: 7, kind: input, shape index: {}]
  %s8 = inlined_call_operand.hbm [shape: f32[1,512], index: 8, kind: input, shape index: {}]
  %s9 = inlined_call_operand.hbm [shape: f32[512,512], index: 9, kind: input, shape index: {}]
  %s10 = inlined_call_operand.hbm [shape: f32[2,8,512], index: 10, kind: output, shape index: {}]
  %s11 = sld [smem:[#allocation0]]
  $region90: #{tpu_custom_call.1} parent=0
    _
  %s13 = ssub.s32 1, %s11
  %s14 = scalar_select 0, %s13, %s11
  $region1: #{tpu_custom_call.1} parent=0
    #allocation3 [shape = 'u8[16384]{0}', space=vmem, size = 0x4000, scoped, tag = 'input window, operand 0, single buffered']
    #allocation4 [shape = 's32[1]{0}', space=sflag, size = 0x4, scoped, tag = 'scoped memory for tpu_custom_call.1']
    #allocation5 [shape = 's32[1]{0}', space=sflag, size = 0x4, scoped, tag = 'scoped memory for tpu_custom_call.1']
    #allocation6 [shape = 'u8[196608]{0}', space=vmem, size = 0x30000, scoped, tag = 'input window, operand 1, single buffered']
    #allocation7 [shape = 's32[1]{0}', space=sflag, size = 0x4, scoped, tag = 'scoped memory for tpu_custom_call.1']
    #allocation8 [shape = 'u8[2048]{0}', space=vmem, size = 0x800, scoped, tag = 'input window, operand 2, single buffered']
    #allocation9 [shape = 'u8[524288]{0}', space=vmem, size = 0x80000, scoped, tag = 'input window, operand 3, single buffered']
    #allocation10 [shape = 's32[1]{0}', space=sflag, size = 0x4, scoped, tag = 'scoped memory for tpu_custom_call.1']
    #allocation11 [shape = 'u8[2048]{0}', space=vmem, size = 0x800, scoped, tag = 'input window, operand 4, single buffered']
    #allocation12 [shape = 'u8[1572864]{0}', space=vmem, size = 0x180000, scoped, tag = 'input window, operand 5, single buffered']
    #allocation13 [shape = 's32[1]{0}', space=sflag, size = 0x4, scoped, tag = 'scoped memory for tpu_custom_call.1']
    #allocation14 [shape = 'u8[2048]{0}', space=vmem, size = 0x800, scoped, tag = 'input window, operand 6, single buffered']
    #allocation15 [shape = 'u8[2048]{0}', space=vmem, size = 0x800, scoped, tag = 'input window, operand 7, single buffered']
    #allocation16 [shape = 's32[1]{0}', space=sflag, size = 0x4, scoped, tag = 'scoped memory for tpu_custom_call.1']
    #allocation17 [shape = 'u8[2048]{0}', space=vmem, size = 0x800, scoped, tag = 'input window, operand 8, single buffered']
    #allocation18 [shape = 'u8[1048576]{0}', space=vmem, size = 0x100000, scoped, tag = 'input window, operand 9, single buffered']
    #allocation19 [shape = 's32[1]{0}', space=sflag, size = 0x4, scoped, tag = 'scoped memory for tpu_custom_call.1']
    #allocation20 [shape = 'u8[32768]{0}', space=vmem, size = 0x8000, scoped, tag = 'output window, operand 0, single buffered']
    %15 = vsyncpa [#allocation4], 0
    %16 = vsyncpa [#allocation7], 0
    %17 = vsyncpa [#allocation10], 0
    %18 = vsyncpa [#allocation13], 0
    %19 = vsyncpa [#allocation16], 0
    %20 = vsyncpa [#allocation19], 0
    %21 = vsyncpa [#allocation5], 0
    // Predicated region
    $region2: #{tpu_custom_call.1} parent=1 // pred_check
      _
    $region3: #{tpu_custom_call.1} parent=1 // pred_check_branch
      %23 = sbr.rel (0) target = $region5
    $region4: #{tpu_custom_call.1} parent=1 // pred_region
      %s25 = ssub.s32 512, 512
      %26 = vsyncadd [#allocation4], %s25
      %s27 = sshll.u32 [#allocation3], 4
      %s28 = int_to_ptr.vmem [resolvable:$true] %s27
      %33 = dma.hbm_to_vmem [thread:$0]  %s0, 512, %s28, [#allocation4], 256, 256, 16
    $region5: #{tpu_custom_call.1} parent=1 // pred_fallthru
      _
    // Predicated region
    $region6: #{tpu_custom_call.1} parent=1 // pred_check
      _
    $region7: #{tpu_custom_call.1} parent=1 // pred_check_branch
      %35 = sbr.rel (0) target = $region9
    $region8: #{tpu_custom_call.1} parent=1 // pred_region
      %s37 = ssub.s32 6144, 6144
      %38 = vsyncadd [#allocation7], %s37
      %s39 = sshll.u32 [#allocation6], 4
      %s40 = int_to_ptr.vmem [resolvable:$true] %s39
      %45 = dma.hbm_to_vmem [thread:$0]  %s1, 6144, %s40, [#allocation7], 256, 256, 16
    $region9: #{tpu_custom_call.1} parent=1 // pred_fallthru
      _
    // Predicated region
    $region10: #{tpu_custom_call.1} parent=1 // pred_check
      _
    $region11: #{tpu_custom_call.1} parent=1 // pred_check_branch
      %47 = sbr.rel (0) target = $region13
    $region12: #{tpu_custom_call.1} parent=1 // pred_region
      %s49 = ssub.s32 64, 64
      %50 = vsyncadd [#allocation7], %s49
      %s52 = sshll.u32 [#allocation8], 4
      %s53 = int_to_ptr.vmem [resolvable:$true] %s52
      %55 = dma.hbm_to_vmem [thread:$0]  %s2, 64, %s53, [#allocation7]
    $region13: #{tpu_custom_call.1} parent=1 // pred_fallthru
      _
    // Predicated region
    $region14: #{tpu_custom_call.1} parent=1 // pred_check
      _
    $region15: #{tpu_custom_call.1} parent=1 // pred_check_branch
      %57 = sbr.rel (0) target = $region17
    $region16: #{tpu_custom_call.1} parent=1 // pred_region
      %s59 = ssub.s32 16384, 16384
      %60 = vsyncadd [#allocation10], %s59
      %s61 = sshll.u32 [#allocation9], 4
      %s62 = int_to_ptr.vmem [resolvable:$true] %s61
      %67 = dma.hbm_to_vmem [thread:$0]  %s3, 16384, %s62, [#allocation10], 256, 256, 16
    $region17: #{tpu_custom_call.1} parent=1 // pred_fallthru
      _
    // Predicated region
    $region18: #{tpu_custom_call.1} parent=1 // pred_check
      _
    $region19: #{tpu_custom_call.1} parent=1 // pred_check_branch
      %69 = sbr.rel (0) target = $region21
    $region20: #{tpu_custom_call.1} parent=1 // pred_region
      %s71 = ssub.s32 64, 64
      %72 = vsyncadd [#allocation10], %s71
      %s74 = sshll.u32 [#allocation11], 4
      %s75 = int_to_ptr.vmem [resolvable:$true] %s74
      %77 = dma.hbm_to_vmem [thread:$0]  %s4, 64, %s75, [#allocation10]
    $region21: #{tpu_custom_call.1} parent=1 // pred_fallthru
      _
    // Predicated region
    $region22: #{tpu_custom_call.1} parent=1 // pred_check
      _
    $region23: #{tpu_custom_call.1} parent=1 // pred_check_branch
      %79 = sbr.rel (0) target = $region25
    $region24: #{tpu_custom_call.1} parent=1 // pred_region
      %s81 = ssub.s32 49152, 49152
      %82 = vsyncadd [#allocation13], %s81
      %s83 = sshll.u32 [#allocation12], 4
      %s84 = int_to_ptr.vmem [resolvable:$true] %s83
      %89 = dma.hbm_to_vmem [thread:$0]  %s5, 49152, %s84, [#allocation13], 256, 256, 16
    $region25: #{tpu_custom_call.1} parent=1 // pred_fallthru
      _
    // Predicated region
    $region26: #{tpu_custom_call.1} parent=1 // pred_check
      _
    $region27: #{tpu_custom_call.1} parent=1 // pred_check_branch
      %91 = sbr.rel (0) target = $region29
    $region28: #{tpu_custom_call.1} parent=1 // pred_region
      %s93 = ssub.s32 64, 64
      %94 = vsyncadd [#allocation13], %s93
      %s96 = sshll.u32 [#allocation14], 4
      %s97 = int_to_ptr.vmem [resolvable:$true] %s96
      %99 = dma.hbm_to_vmem [thread:$0]  %s6, 64, %s97, [#allocation13]
    $region29: #{tpu_custom_call.1} parent=1 // pred_fallthru
      _
    // Predicated region
    $region30: #{tpu_custom_call.1} parent=1 // pred_check
      _
    $region31: #{tpu_custom_call.1} parent=1 // pred_check_branch
      %101 = sbr.rel (0) target = $region33
    $region32: #{tpu_custom_call.1} parent=1 // pred_region
      %s103 = ssub.s32 64, 64
      %104 = vsyncadd [#allocation16], %s103
      %s106 = sshll.u32 [#allocation15], 4
      %s107 = int_to_ptr.vmem [resolvable:$true] %s106
      %109 = dma.hbm_to_vmem [thread:$0]  %s7, 64, %s107, [#allocation16]
    $region33: #{tpu_custom_call.1} parent=1 // pred_fallthru
      _
    // Predicated region
    $region34: #{tpu_custom_call.1} parent=1 // pred_check
      _
    $region35: #{tpu_custom_call.1} parent=1 // pred_check_branch
      %111 = sbr.rel (0) target = $region37
    $region36: #{tpu_custom_call.1} parent=1 // pred_region
      %s113 = ssub.s32 64, 64
      %114 = vsyncadd [#allocation16], %s113
      %s116 = sshll.u32 [#allocation17], 4
      %s117 = int_to_ptr.vmem [resolvable:$true] %s116
      %119 = dma.hbm_to_vmem [thread:$0]  %s8, 64, %s117, [#allocation16]
    $region37: #{tpu_custom_call.1} parent=1 // pred_fallthru
      _
    // Predicated region
    $region38: #{tpu_custom_call.1} parent=1 // pred_check
      _
    $region39: #{tpu_custom_call.1} parent=1 // pred_check_branch
      %121 = sbr.rel (0) target = $region41
    $region40: #{tpu_custom_call.1} parent=1 // pred_region
      %s123 = ssub.s32 32768, 32768
      %124 = vsyncadd [#allocation19], %s123
      %s125 = sshll.u32 [#allocation18], 4
      %s126 = int_to_ptr.vmem [resolvable:$true] %s125
      %131 = dma.hbm_to_vmem [thread:$0]  %s9, 32768, %s126, [#allocation19], 512, 512, 32
    $region41: #{tpu_custom_call.1} parent=1 // pred_fallthru
      _
    // Predicated region
    $region42: #{tpu_custom_call.1} parent=1 // pred_check
      _
    $region43: #{tpu_custom_call.1} parent=1 // pred_check_branch
      %133 = sbr.rel (0) target = $region45
    $region44: #{tpu_custom_call.1} parent=1 // pred_region
      %134 = dma.done [#allocation4], 512
    $region45: #{tpu_custom_call.1} parent=1 // pred_fallthru
      _
    // Predicated region
    $region46: #{tpu_custom_call.1} parent=1 // pred_check
      _
    $region47: #{tpu_custom_call.1} parent=1 // pred_check_branch
      %136 = sbr.rel (0) target = $region49
    $region48: #{tpu_custom_call.1} parent=1 // pred_region
      %137 = dma.done [#allocation7], 6144
    $region49: #{tpu_custom_call.1} parent=1 // pred_fallthru
      _
    // Predicated region
    $region50: #{tpu_custom_call.1} parent=1 // pred_check
      _
    $region51: #{tpu_custom_call.1} parent=1 // pred_check_branch
      %139 = sbr.rel (0) target = $region53
    $region52: #{tpu_custom_call.1} parent=1 // pred_region
      %140 = dma.done [#allocation7], 64
    $region53: #{tpu_custom_call.1} parent=1 // pred_fallthru
      _
    // Predicated region
    $region54: #{tpu_custom_call.1} parent=1 // pred_check
      _
    $region55: #{tpu_custom_call.1} parent=1 // pred_check_branch
      %142 = sbr.rel (0) target = $region57
    $region56: #{tpu_custom_call.1} parent=1 // pred_region
      %143 = dma.done [#allocation10], 16384
    $region57: #{tpu_custom_call.1} parent=1 // pred_fallthru
      _
    // Predicated region
    $region58: #{tpu_custom_call.1} parent=1 // pred_check
      _
    $region59: #{tpu_custom_call.1} parent=1 // pred_check_branch
      %145 = sbr.rel (0) target = $region61
    $region60: #{tpu_custom_call.1} parent=1 // pred_region
      %146 = dma.done [#allocation10], 64
    $region61: #{tpu_custom_call.1} parent=1 // pred_fallthru
      _
    // Predicated region
    $region62: #{tpu_custom_call.1} parent=1 // pred_check
      _
    $region63: #{tpu_custom_call.1} parent=1 // pred_check_branch
      %148 = sbr.rel (0) target = $region65
    $region64: #{tpu_custom_call.1} parent=1 // pred_region
      %149 = dma.done [#allocation13], 49152
    $region65: #{tpu_custom_call.1} parent=1 // pred_fallthru
      _
    // Predicated region
    $region66: #{tpu_custom_call.1} parent=1 // pred_check
      _
    $region67: #{tpu_custom_call.1} parent=1 // pred_check_branch
      %151 = sbr.rel (0) target = $region69
    $region68: #{tpu_custom_call.1} parent=1 // pred_region
      %152 = dma.done [#allocation13], 64
    $region69: #{tpu_custom_call.1} parent=1 // pred_fallthru
      _
    // Predicated region
    $region70: #{tpu_custom_call.1} parent=1 // pred_check
      _
    $region71: #{tpu_custom_call.1} parent=1 // pred_check_branch
      %154 = sbr.rel (0) target = $region73
    $region72: #{tpu_custom_call.1} parent=1 // pred_region
      %155 = dma.done [#allocation16], 64
    $region73: #{tpu_custom_call.1} parent=1 // pred_fallthru
      _
    // Predicated region
    $region74: #{tpu_custom_call.1} parent=1 // pred_check
      _
    $region75: #{tpu_custom_call.1} parent=1 // pred_check_branch
      %157 = sbr.rel (0) target = $region77
    $region76: #{tpu_custom_call.1} parent=1 // pred_region
      %158 = dma.done [#allocation16], 64
    $region77: #{tpu_custom_call.1} parent=1 // pred_fallthru
      _
    // Predicated region
    $region78: #{tpu_custom_call.1} parent=1 // pred_check
      _
    $region79: #{tpu_custom_call.1} parent=1 // pred_check_branch
      %160 = sbr.rel (0) target = $region81
    $region80: #{tpu_custom_call.1} parent=1 // pred_region
      %161 = dma.done [#allocation19], 32768
    $region81: #{tpu_custom_call.1} parent=1 // pred_fallthru
      _
    %v163 = vld [vmem:[#allocation3] sm:$0xff]
    %v164 = vld [vmem:[#allocation3 + $0x8] sm:$0xff]
    %v165 = vld [vmem:[#allocation3 + $0x10] sm:$0xff]
    %v166 = vld [vmem:[#allocation3 + $0x18] sm:$0xff]
    %v167 = vpack.c.bf16 %v163, %v163
    %v168 = vpack.c.bf16 %v164, %v164
    %v169 = vpack.c.bf16 %v165, %v165
    %v170 = vpack.c.bf16 %v166, %v166
    %v175 = vunpack.c.l.b16 %v167
    %v176 = vunpack.c.l.b16 %v168
    %v177 = vunpack.c.l.b16 %v169
    %v178 = vunpack.c.l.b16 %v170
    %v179 = vld [vmem:[#allocation6] sm:$0xff]
    %v180 = vld [vmem:[#allocation6 + $0x8] sm:$0xff]
    %v181 = vld [vmem:[#allocation6 + $0x10] sm:$0xff]
    %v182 = vld [vmem:[#allocation6 + $0x18] sm:$0xff]
    %v183 = vld [vmem:[#allocation6 + $0x20] sm:$0xff]
    %v184 = vld [vmem:[#allocation6 + $0x28] sm:$0xff]
    %v185 = vld [vmem:[#allocation6 + $0x30] sm:$0xff]
    %v186 = vld [vmem:[#allocation6 + $0x38] sm:$0xff]
    %v187 = vld [vmem:[#allocation6 + $0x40] sm:$0xff]
    %v188 = vld [vmem:[#allocation6 + $0x48] sm:$0xff]
    %v189 = vld [vmem:[#allocation6 + $0x50] sm:$0xff]
    %v190 = vld [vmem:[#allocation6 + $0x58] sm:$0xff]
    %v191 = vld [vmem:[#allocation6 + $0x60] sm:$0xff]
    %v192 = vld [vmem:[#allocation6 + $0x68] sm:$0xff]
    %v193 = vld [vmem:[#allocation6 + $0x70] sm:$0xff]
    %v194 = vld [vmem:[#allocation6 + $0x78] sm:$0xff]
    %v195 = vld [vmem:[#allocation6 + $0x80] sm:$0xff]
    %v196 = vld [vmem:[#allocation6 + $0x88] sm:$0xff]
    %v197 = vld [vmem:[#allocation6 + $0x90] sm:$0xff]
    %v198 = vld [vmem:[#allocation6 + $0x98] sm:$0xff]
    %v199 = vld [vmem:[#allocation6 + $0xa0] sm:$0xff]
    %v200 = vld [vmem:[#allocation6 + $0xa8] sm:$0xff]
    %v201 = vld [vmem:[#allocation6 + $0xb0] sm:$0xff]
    %v202 = vld [vmem:[#allocation6 + $0xb8] sm:$0xff]
    %v203 = vld [vmem:[#allocation6 + $0xc0] sm:$0xff]
    %v204 = vld [vmem:[#allocation6 + $0xc8] sm:$0xff]
    %v205 = vld [vmem:[#allocation6 + $0xd0] sm:$0xff]
    %v206 = vld [vmem:[#allocation6 + $0xd8] sm:$0xff]
    %v207 = vld [vmem:[#allocation6 + $0xe0] sm:$0xff]
    %v208 = vld [vmem:[#allocation6 + $0xe8] sm:$0xff]
    %v209 = vld [vmem:[#allocation6 + $0xf0] sm:$0xff]
    %v210 = vld [vmem:[#allocation6 + $0xf8] sm:$0xff]
    %v211 = vld [vmem:[#allocation6 + $0x100] sm:$0xff]
    %v212 = vld [vmem:[#allocation6 + $0x108] sm:$0xff]
    %v213 = vld [vmem:[#allocation6 + $0x110] sm:$0xff]
    %v214 = vld [vmem:[#allocation6 + $0x118] sm:$0xff]
    %v215 = vld [vmem:[#allocation6 + $0x120] sm:$0xff]
    %v216 = vld [vmem:[#allocation6 + $0x128] sm:$0xff]
    %v217 = vld [vmem:[#allocation6 + $0x130] sm:$0xff]
    %v218 = vld [vmem:[#allocation6 + $0x138] sm:$0xff]
    %v219 = vld [vmem:[#allocation6 + $0x140] sm:$0xff]
    %v220 = vld [vmem:[#allocation6 + $0x148] sm:$0xff]
    %v221 = vld [vmem:[#allocation6 + $0x150] sm:$0xff]
    %v222 = vld [vmem:[#allocation6 + $0x158] sm:$0xff]
    %v223 = vld [vmem:[#allocation6 + $0x160] sm:$0xff]
    %v224 = vld [vmem:[#allocation6 + $0x168] sm:$0xff]
    %v225 = vld [vmem:[#allocation6 + $0x170] sm:$0xff]
    %v226 = vld [vmem:[#allocation6 + $0x178] sm:$0xff]
    %v227 = vld [vmem:[#allocation8] sm:$0xf]
    %v229 = vlaneseq
    %v230 = vshrl.u32 %v229, 7
    %v231 = vsub.s32 0, %v230
    %v232 = vrot.slane %v227, %v231
    %v233 = vlaneseq
    %v234 = vshrl.u32 %v233, 7
    %v235 = vsub.s32 1, %v234
    %v236 = vrot.slane %v227, %v235
    %v237 = vlaneseq
    %v238 = vshrl.u32 %v237, 7
    %v239 = vsub.s32 2, %v238
    %v240 = vrot.slane %v227, %v239
    %v241 = vlaneseq
    %v242 = vshrl.u32 %v241, 7
    %v243 = vsub.s32 3, %v242
    %v244 = vrot.slane %v227, %v243
    %v249 = vpack.c.b16 %v177, %v175
    %v250 = vpack.c.b16 %v178, %v176
    %v300 = vunpack.c.l.b16 %v179
    %v301 = vunpack.c.h.b16 %v179
    %v302 = vunpack.c.l.b16 %v180
    %v303 = vunpack.c.h.b16 %v180
    %v304 = vunpack.c.l.b16 %v181
    %v305 = vunpack.c.h.b16 %v181
    %v306 = vunpack.c.l.b16 %v182
    %v307 = vunpack.c.h.b16 %v182
    %v308 = vunpack.c.l.b16 %v183
    %v309 = vunpack.c.h.b16 %v183
    %v310 = vunpack.c.l.b16 %v184
    %v311 = vunpack.c.h.b16 %v184
    %v312 = vunpack.c.l.b16 %v185
    %v313 = vunpack.c.h.b16 %v185
    %v314 = vunpack.c.l.b16 %v186
    %v315 = vunpack.c.h.b16 %v186
    %v316 = vunpack.c.l.b16 %v187
    %v317 = vunpack.c.h.b16 %v187
    %v318 = vunpack.c.l.b16 %v188
    %v319 = vunpack.c.h.b16 %v188
    %v320 = vunpack.c.l.b16 %v189
    %v321 = vunpack.c.h.b16 %v189
    %v322 = vunpack.c.l.b16 %v190
    %v323 = vunpack.c.h.b16 %v190
    %v324 = vunpack.c.l.b16 %v191
    %v325 = vunpack.c.h.b16 %v191
    %v326 = vunpack.c.l.b16 %v192
    %v327 = vunpack.c.h.b16 %v192
    %v328 = vunpack.c.l.b16 %v193
    %v329 = vunpack.c.h.b16 %v193
    %v330 = vunpack.c.l.b16 %v194
    %v331 = vunpack.c.h.b16 %v194
    %v332 = vunpack.c.l.b16 %v195
    %v333 = vunpack.c.h.b16 %v195
    %v334 = vunpack.c.l.b16 %v196
    %v335 = vunpack.c.h.b16 %v196
    %v336 = vunpack.c.l.b16 %v197
    %v337 = vunpack.c.h.b16 %v197
    %v338 = vunpack.c.l.b16 %v198
    %v339 = vunpack.c.h.b16 %v198
    %v340 = vunpack.c.l.b16 %v199
    %v341 = vunpack.c.h.b16 %v199
    %v342 = vunpack.c.l.b16 %v200
    %v343 = vunpack.c.h.b16 %v200
    %v344 = vunpack.c.l.b16 %v201
    %v345 = vunpack.c.h.b16 %v201
    %v346 = vunpack.c.l.b16 %v202
    %v347 = vunpack.c.h.b16 %v202
    %v348 = vunpack.c.l.b16 %v203
    %v349 = vunpack.c.h.b16 %v203
    %v350 = vunpack.c.l.b16 %v204
    %v351 = vunpack.c.h.b16 %v204
    %v352 = vunpack.c.l.b16 %v205
    %v353 = vunpack.c.h.b16 %v205
    %v354 = vunpack.c.l.b16 %v206
    %v355 = vunpack.c.h.b16 %v206
    %v356 = vunpack.c.l.b16 %v207
    %v357 = vunpack.c.h.b16 %v207
    %v358 = vunpack.c.l.b16 %v208
    %v359 = vunpack.c.h.b16 %v208
    %v360 = vunpack.c.l.b16 %v209
    %v361 = vunpack.c.h.b16 %v209
    %v362 = vunpack.c.l.b16 %v210
    %v363 = vunpack.c.h.b16 %v210
    %v364 = vunpack.c.l.b16 %v211
    %v365 = vunpack.c.h.b16 %v211
    %v366 = vunpack.c.l.b16 %v212
    %v367 = vunpack.c.h.b16 %v212
    %v368 = vunpack.c.l.b16 %v213
    %v369 = vunpack.c.h.b16 %v213
    %v370 = vunpack.c.l.b16 %v214
    %v371 = vunpack.c.h.b16 %v214
    %v372 = vunpack.c.l.b16 %v215
    %v373 = vunpack.c.h.b16 %v215
    %v374 = vunpack.c.l.b16 %v216
    %v375 = vunpack.c.h.b16 %v216
    %v376 = vunpack.c.l.b16 %v217
    %v377 = vunpack.c.h.b16 %v217
    %v378 = vunpack.c.l.b16 %v218
    %v379 = vunpack.c.h.b16 %v218
    %v380 = vunpack.c.l.b16 %v219
    %v381 = vunpack.c.h.b16 %v219
    %v382 = vunpack.c.l.b16 %v220
    %v383 = vunpack.c.h.b16 %v220
    %v384 = vunpack.c.l.b16 %v221
    %v385 = vunpack.c.h.b16 %v221
    %v386 = vunpack.c.l.b16 %v222
    %v387 = vunpack.c.h.b16 %v222
    %v388 = vunpack.c.l.b16 %v223
    %v389 = vunpack.c.h.b16 %v223
    %v390 = vunpack.c.l.b16 %v224
    %v391 = vunpack.c.h.b16 %v224
    %v392 = vunpack.c.l.b16 %v225
    %v393 = vunpack.c.h.b16 %v225
    %v394 = vunpack.c.l.b16 %v226
    %v395 = vunpack.c.h.b16 %v226
    %v396 = vpack.c.b16 %v304, %v300
    %v397 = vpack.c.b16 %v305, %v301
    %v398 = vpack.c.b16 %v306, %v302
    %v399 = vpack.c.b16 %v307, %v303
    %v400 = vpack.c.b16 %v312, %v308
    %v401 = vpack.c.b16 %v313, %v309
    %v402 = vpack.c.b16 %v314, %v310
    %v403 = vpack.c.b16 %v315, %v311
    %v404 = vpack.c.b16 %v320, %v316
    %v405 = vpack.c.b16 %v321, %v317
    %v406 = vpack.c.b16 %v322, %v318
    %v407 = vpack.c.b16 %v323, %v319
    %v408 = vpack.c.b16 %v328, %v324
    %v409 = vpack.c.b16 %v329, %v325
    %v410 = vpack.c.b16 %v330, %v326
    %v411 = vpack.c.b16 %v331, %v327
    %v412 = vpack.c.b16 %v336, %v332
    %v413 = vpack.c.b16 %v337, %v333
    %v414 = vpack.c.b16 %v338, %v334
    %v415 = vpack.c.b16 %v339, %v335
    %v416 = vpack.c.b16 %v344, %v340
    %v417 = vpack.c.b16 %v345, %v341
    %v418 = vpack.c.b16 %v346, %v342
    %v419 = vpack.c.b16 %v347, %v343
    %v420 = vpack.c.b16 %v352, %v348
    %v421 = vpack.c.b16 %v353, %v349
    %v422 = vpack.c.b16 %v354, %v350
    %v423 = vpack.c.b16 %v355, %v351
    %v424 = vpack.c.b16 %v360, %v356
    %v425 = vpack.c.b16 %v361, %v357
    %v426 = vpack.c.b16 %v362, %v358
    %v427 = vpack.c.b16 %v363, %v359
    %v428 = vpack.c.b16 %v368, %v364
    %v429 = vpack.c.b16 %v369, %v365
    %v430 = vpack.c.b16 %v370, %v366
    %v431 = vpack.c.b16 %v371, %v367
    %v432 = vpack.c.b16 %v376, %v372
    %v433 = vpack.c.b16 %v377, %v373
    %v434 = vpack.c.b16 %v378, %v374
    %v435 = vpack.c.b16 %v379, %v375
    %v436 = vpack.c.b16 %v384, %v380
    %v437 = vpack.c.b16 %v385, %v381
    %v438 = vpack.c.b16 %v386, %v382
    %v439 = vpack.c.b16 %v387, %v383
    %v440 = vpack.c.b16 %v392, %v388
    %v441 = vpack.c.b16 %v393, %v389
    %v442 = vpack.c.b16 %v394, %v390
    %v443 = vpack.c.b16 %v395, %v391
    %vm492 = vcmask 523264
    %v494 = vsel %vm492, %v250, 0
    %496 = vmatprep.subr.bf16.mxu0 %v397
    %497 = vmatpush1.bf16.msra.mxu0 %v396
    %498 = vmatprep.subr.bf16.mxu0 %v401
    %499 = vmatpush1.bf16.msra.mxu0 %v400
    %500 = vmatprep.subr.bf16.mxu0 %v405
    %501 = vmatpush1.bf16.msra.mxu0 %v404
    %502 = vmatprep.subr.bf16.mxu0 %v409
    %503 = vmatpush1.bf16.msra.mxu0 %v408
    %504 = vmatprep.subr.bf16.mxu0 %v413
    %505 = vmatpush1.bf16.msra.mxu0 %v412
    %506 = vmatprep.subr.bf16.mxu0 %v417
    %507 = vmatpush1.bf16.msra.mxu0 %v416
    %508 = vmatprep.subr.bf16.mxu0 %v421
    %509 = vmatpush1.bf16.msra.mxu0 %v420
    %510 = vmatprep.subr.bf16.mxu0 %v425
    %511 = vmatpush1.bf16.msra.mxu0 %v424
    %512 = vmatprep.subr.bf16.mxu0 %v429
    %513 = vmatpush1.bf16.msra.mxu0 %v428
    %514 = vmatprep.subr.bf16.mxu0 %v433
    %515 = vmatpush1.bf16.msra.mxu0 %v432
    %516 = vmatprep.subr.bf16.mxu0 %v437
    %517 = vmatpush1.bf16.msra.mxu0 %v436
    %518 = vmatprep.subr.bf16.mxu0 %v441
    %519 = vmatpush1.bf16.msra.mxu0 %v440
    %520 = vmatprep.subr.bf16.mxu0 0
    %521 = vmatpush1.bf16.msra.mxu0 0
    %522 = vmatprep.subr.bf16.mxu0 0
    %523 = vmatpush1.bf16.msra.mxu0 0
    %524 = vmatprep.subr.bf16.mxu0 0
    %525 = vmatpush1.bf16.msra.mxu0 0
    %526 = vmatprep.subr.bf16.mxu0 0
    %527 = vmatpush1.bf16.msra.mxu0 0
    %528 = vmatprep.mubr.bf16.mxu0 %v494
    %529 = vmatmul.mubr.bf16.gmra.mrb[0].mxu0 %v249
    %v530 = vpop.f32.mrb[0].mxu0
    %v531 = vadd.f32 %v232, %v530
    %v532 = vpop.f32.mrb[0].mxu0
    %v533 = vadd.f32 %v236, %v532
    %v534 = vpop.f32.mrb[0].mxu0
    %v535 = vadd.f32 %v232, %v534
    %v536 = vpop.f32.mrb[0].mxu0
    %v537 = vadd.f32 %v236, %v536
    %538 = vdwg.mxu0
    %539 = vmatprep.subr.bf16.mxu0 %v399
    %540 = vmatpush1.bf16.msra.mxu0 %v398
    %541 = vmatprep.subr.bf16.mxu0 %v403
    %542 = vmatpush1.bf16.msra.mxu0 %v402
    %543 = vmatprep.subr.bf16.mxu0 %v407
    %544 = vmatpush1.bf16.msra.mxu0 %v406
    %545 = vmatprep.subr.bf16.mxu0 %v411
    %546 = vmatpush1.bf16.msra.mxu0 %v410
    %547 = vmatprep.subr.bf16.mxu0 %v415
    %548 = vmatpush1.bf16.msra.mxu0 %v414
    %549 = vmatprep.subr.bf16.mxu0 %v419
    %550 = vmatpush1.bf16.msra.mxu0 %v418
    %551 = vmatprep.subr.bf16.mxu0 %v423
    %552 = vmatpush1.bf16.msra.mxu0 %v422
    %553 = vmatprep.subr.bf16.mxu0 %v427
    %554 = vmatpush1.bf16.msra.mxu0 %v426
    %555 = vmatprep.subr.bf16.mxu0 %v431
    %556 = vmatpush1.bf16.msra.mxu0 %v430
    %557 = vmatprep.subr.bf16.mxu0 %v435
    %558 = vmatpush1.bf16.msra.mxu0 %v434
    %559 = vmatprep.subr.bf16.mxu0 %v439
    %560 = vmatpush1.bf16.msra.mxu0 %v438
    %561 = vmatprep.subr.bf16.mxu0 %v443
    %562 = vmatpush1.bf16.msra.mxu0 %v442
    %563 = vmatprep.subr.bf16.mxu0 0
    %564 = vmatpush1.bf16.msra.mxu0 0
    %565 = vmatprep.subr.bf16.mxu0 0
    %566 = vmatpush1.bf16.msra.mxu0 0
    %567 = vmatprep.subr.bf16.mxu0 0
    %568 = vmatpush1.bf16.msra.mxu0 0
    %569 = vmatprep.subr.bf16.mxu0 0
    %570 = vmatpush1.bf16.msra.mxu0 0
    %571 = vmatprep.mubr.bf16.mxu0 %v494
    %572 = vmatmul.mubr.bf16.gmra.mrb[0].mxu0 %v249
    %v573 = vpop.f32.mrb[0].mxu0
    %v574 = vadd.f32 %v240, %v573
    %v575 = vpop.f32.mrb[0].mxu0
    %v576 = vadd.f32 %v244, %v575
    %v577 = vpop.f32.mrb[0].mxu0
    %v578 = vadd.f32 %v240, %v577
    %v579 = vpop.f32.mrb[0].mxu0
    %v580 = vadd.f32 %v244, %v579
    %581 = vdwg.mxu0
    %v582 = vpack.c.bf16 %v535, %v531
    %v583 = vpack.c.bf16 %v537, %v533
    %v584 = vpack.c.bf16 %v578, %v574
    %v585 = vpack.c.bf16 %v580, %v576
    %v586 = vld [vmem:[#allocation9] sm:$0xff]
    %v587 = vld [vmem:[#allocation9 + $0x8] sm:$0xff]
    %v588 = vld [vmem:[#allocation9 + $0x10] sm:$0xff]
    %v589 = vld [vmem:[#allocation9 + $0x18] sm:$0xff]
    %v590 = vld [vmem:[#allocation9 + $0x20] sm:$0xff]
    %v591 = vld [vmem:[#allocation9 + $0x28] sm:$0xff]
    %v592 = vld [vmem:[#allocation9 + $0x30] sm:$0xff]
    %v593 = vld [vmem:[#allocation9 + $0x38] sm:$0xff]
    %v594 = vld [vmem:[#allocation9 + $0x40] sm:$0xff]
    %v595 = vld [vmem:[#allocation9 + $0x48] sm:$0xff]
    %v596 = vld [vmem:[#allocation9 + $0x50] sm:$0xff]
    %v597 = vld [vmem:[#allocation9 + $0x58] sm:$0xff]
    %v598 = vld [vmem:[#allocation9 + $0x60] sm:$0xff]
    %v599 = vld [vmem:[#allocation9 + $0x68] sm:$0xff]
    %v600 = vld [vmem:[#allocation9 + $0x70] sm:$0xff]
    %v601 = vld [vmem:[#allocation9 + $0x78] sm:$0xff]
    %v602 = vld [vmem:[#allocation9 + $0x80] sm:$0xff]
    %v603 = vld [vmem:[#allocation9 + $0x88] sm:$0xff]
    %v604 = vld [vmem:[#allocation9 + $0x90] sm:$0xff]
    %v605 = vld [vmem:[#allocation9 + $0x98] sm:$0xff]
    %v606 = vld [vmem:[#allocation9 + $0xa0] sm:$0xff]
    %v607 = vld [vmem:[#allocation9 + $0xa8] sm:$0xff]
    %v608 = vld [vmem:[#allocation9 + $0xb0] sm:$0xff]
    %v609 = vld [vmem:[#allocation9 + $0xb8] sm:$0xff]
    %v610 = vld [vmem:[#allocation9 + $0xc0] sm:$0xff]
    %v611 = vld [vmem:[#allocation9 + $0xc8] sm:$0xff]
    %v612 = vld [vmem:[#allocation9 + $0xd0] sm:$0xff]
    %v613 = vld [vmem:[#allocation9 + $0xd8] sm:$0xff]
    %v614 = vld [vmem:[#allocation9 + $0xe0] sm:$0xff]
    %v615 = vld [vmem:[#allocation9 + $0xe8] sm:$0xff]
    %v616 = vld [vmem:[#allocation9 + $0xf0] sm:$0xff]
    %v617 = vld [vmem:[#allocation9 + $0xf8] sm:$0xff]
    %v618 = vld [vmem:[#allocation9 + $0x100] sm:$0xff]
    %v619 = vld [vmem:[#allocation9 + $0x108] sm:$0xff]
    %v620 = vld [vmem:[#allocation9 + $0x110] sm:$0xff]
    %v621 = vld [vmem:[#allocation9 + $0x118] sm:$0xff]
    %v622 = vld [vmem:[#allocation9 + $0x120] sm:$0xff]
    %v623 = vld [vmem:[#allocation9 + $0x128] sm:$0xff]
    %v624 = vld [vmem:[#allocation9 + $0x130] sm:$0xff]
    %v625 = vld [vmem:[#allocation9 + $0x138] sm:$0xff]
    %v626 = vld [vmem:[#allocation9 + $0x140] sm:$0xff]
    %v627 = vld [vmem:[#allocation9 + $0x148] sm:$0xff]
    %v628 = vld [vmem:[#allocation9 + $0x150] sm:$0xff]
    %v629 = vld [vmem:[#allocation9 + $0x158] sm:$0xff]
    %v630 = vld [vmem:[#allocation9 + $0x160] sm:$0xff]
    %v631 = vld [vmem:[#allocation9 + $0x168] sm:$0xff]
    %v632 = vld [vmem:[#allocation9 + $0x170] sm:$0xff]
    %v633 = vld [vmem:[#allocation9 + $0x178] sm:$0xff]
    %v634 = vld [vmem:[#allocation9 + $0x180] sm:$0xff]
    %v635 = vld [vmem:[#allocation9 + $0x188] sm:$0xff]
    %v636 = vld [vmem:[#allocation9 + $0x190] sm:$0xff]
    %v637 = vld [vmem:[#allocation9 + $0x198] sm:$0xff]
    %v638 = vld [vmem:[#allocation9 + $0x1a0] sm:$0xff]
    %v639 = vld [vmem:[#allocation9 + $0x1a8] sm:$0xff]
    %v640 = vld [vmem:[#allocation9 + $0x1b0] sm:$0xff]
    %v641 = vld [vmem:[#allocation9 + $0x1b8] sm:$0xff]
    %v642 = vld [vmem:[#allocation9 + $0x1c0] sm:$0xff]
    %v643 = vld [vmem:[#allocation9 + $0x1c8] sm:$0xff]
    %v644 = vld [vmem:[#allocation9 + $0x1d0] sm:$0xff]
    %v645 = vld [vmem:[#allocation9 + $0x1d8] sm:$0xff]
    %v646 = vld [vmem:[#allocation9 + $0x1e0] sm:$0xff]
    %v647 = vld [vmem:[#allocation9 + $0x1e8] sm:$0xff]
    %v648 = vld [vmem:[#allocation9 + $0x1f0] sm:$0xff]
    %v649 = vld [vmem:[#allocation9 + $0x1f8] sm:$0xff]
    %v650 = vld [vmem:[#allocation9 + $0x200] sm:$0xff]
    %v651 = vld [vmem:[#allocation9 + $0x208] sm:$0xff]
    %v652 = vld [vmem:[#allocation9 + $0x210] sm:$0xff]
    %v653 = vld [vmem:[#allocation9 + $0x218] sm:$0xff]
    %v654 = vld [vmem:[#allocation9 + $0x220] sm:$0xff]
    %v655 = vld [vmem:[#allocation9 + $0x228] sm:$0xff]
    %v656 = vld [vmem:[#allocation9 + $0x230] sm:$0xff]
    %v657 = vld [vmem:[#allocation9 + $0x238] sm:$0xff]
    %v658 = vld [vmem:[#allocation9 + $0x240] sm:$0xff]
    %v659 = vld [vmem:[#allocation9 + $0x248] sm:$0xff]
    %v660 = vld [vmem:[#allocation9 + $0x250] sm:$0xff]
    %v661 = vld [vmem:[#allocation9 + $0x258] sm:$0xff]
    %v662 = vld [vmem:[#allocation9 + $0x260] sm:$0xff]
    %v663 = vld [vmem:[#allocation9 + $0x268] sm:$0xff]
    %v664 = vld [vmem:[#allocation9 + $0x270] sm:$0xff]
    %v665 = vld [vmem:[#allocation9 + $0x278] sm:$0xff]
    %v666 = vld [vmem:[#allocation9 + $0x280] sm:$0xff]
    %v667 = vld [vmem:[#allocation9 + $0x288] sm:$0xff]
    %v668 = vld [vmem:[#allocation9 + $0x290] sm:$0xff]
    %v669 = vld [vmem:[#allocation9 + $0x298] sm:$0xff]
    %v670 = vld [vmem:[#allocation9 + $0x2a0] sm:$0xff]
    %v671 = vld [vmem:[#allocation9 + $0x2a8] sm:$0xff]
    %v672 = vld [vmem:[#allocation9 + $0x2b0] sm:$0xff]
    %v673 = vld [vmem:[#allocation9 + $0x2b8] sm:$0xff]
    %v674 = vld [vmem:[#allocation9 + $0x2c0] sm:$0xff]
    %v675 = vld [vmem:[#allocation9 + $0x2c8] sm:$0xff]
    %v676 = vld [vmem:[#allocation9 + $0x2d0] sm:$0xff]
    %v677 = vld [vmem:[#allocation9 + $0x2d8] sm:$0xff]
    %v678 = vld [vmem:[#allocation9 + $0x2e0] sm:$0xff]
    %v679 = vld [vmem:[#allocation9 + $0x2e8] sm:$0xff]
    %v680 = vld [vmem:[#allocation9 + $0x2f0] sm:$0xff]
    %v681 = vld [vmem:[#allocation9 + $0x2f8] sm:$0xff]
    %v682 = vld [vmem:[#allocation9 + $0x300] sm:$0xff]
    %v683 = vld [vmem:[#allocation9 + $0x308] sm:$0xff]
    %v684 = vld [vmem:[#allocation9 + $0x310] sm:$0xff]
    %v685 = vld [vmem:[#allocation9 + $0x318] sm:$0xff]
    %v686 = vld [vmem:[#allocation9 + $0x320] sm:$0xff]
    %v687 = vld [vmem:[#allocation9 + $0x328] sm:$0xff]
    %v688 = vld [vmem:[#allocation9 + $0x330] sm:$0xff]
    %v689 = vld [vmem:[#allocation9 + $0x338] sm:$0xff]
    %v690 = vld [vmem:[#allocation9 + $0x340] sm:$0xff]
    %v691 = vld [vmem:[#allocation9 + $0x348] sm:$0xff]
    %v692 = vld [vmem:[#allocation9 + $0x350] sm:$0xff]
    %v693 = vld [vmem:[#allocation9 + $0x358] sm:$0xff]
    %v694 = vld [vmem:[#allocation9 + $0x360] sm:$0xff]
    %v695 = vld [vmem:[#allocation9 + $0x368] sm:$0xff]
    %v696 = vld [vmem:[#allocation9 + $0x370] sm:$0xff]
    %v697 = vld [vmem:[#allocation9 + $0x378] sm:$0xff]
    %v698 = vld [vmem:[#allocation9 + $0x380] sm:$0xff]
    %v699 = vld [vmem:[#allocation9 + $0x388] sm:$0xff]
    %v700 = vld [vmem:[#allocation9 + $0x390] sm:$0xff]
    %v701 = vld [vmem:[#allocation9 + $0x398] sm:$0xff]
    %v702 = vld [vmem:[#allocation9 + $0x3a0] sm:$0xff]
    %v703 = vld [vmem:[#allocation9 + $0x3a8] sm:$0xff]
    %v704 = vld [vmem:[#allocation9 + $0x3b0] sm:$0xff]
    %v705 = vld [vmem:[#allocation9 + $0x3b8] sm:$0xff]
    %v706 = vld [vmem:[#allocation9 + $0x3c0] sm:$0xff]
    %v707 = vld [vmem:[#allocation9 + $0x3c8] sm:$0xff]
    %v708 = vld [vmem:[#allocation9 + $0x3d0] sm:$0xff]
    %v709 = vld [vmem:[#allocation9 + $0x3d8] sm:$0xff]
    %v710 = vld [vmem:[#allocation9 + $0x3e0] sm:$0xff]
    %v711 = vld [vmem:[#allocation9 + $0x3e8] sm:$0xff]
    %v712 = vld [vmem:[#allocation9 + $0x3f0] sm:$0xff]
    %v713 = vld [vmem:[#allocation9 + $0x3f8] sm:$0xff]
    %v714 = vld [vmem:[#allocation11] sm:$0xf]
    %v716 = vlaneseq
    %v717 = vshrl.u32 %v716, 7
    %v718 = vsub.s32 0, %v717
    %v719 = vrot.slane %v714, %v718
    %v720 = vlaneseq
    %v721 = vshrl.u32 %v720, 7
    %v722 = vsub.s32 1, %v721
    %v723 = vrot.slane %v714, %v722
    %v724 = vlaneseq
    %v725 = vshrl.u32 %v724, 7
    %v726 = vsub.s32 2, %v725
    %v727 = vrot.slane %v714, %v726
    %v728 = vlaneseq
    %v729 = vshrl.u32 %v728, 7
    %v730 = vsub.s32 3, %v729
    %v731 = vrot.slane %v714, %v730
    %v864 = vunpack.c.l.b16 %v586
    %v865 = vunpack.c.h.b16 %v586
    %v866 = vunpack.c.l.b16 %v587
    %v867 = vunpack.c.h.b16 %v587
    %v868 = vunpack.c.l.b16 %v588
    %v869 = vunpack.c.h.b16 %v588
    %v870 = vunpack.c.l.b16 %v589
    %v871 = vunpack.c.h.b16 %v589
    %v872 = vunpack.c.l.b16 %v590
    %v873 = vunpack.c.h.b16 %v590
    %v874 = vunpack.c.l.b16 %v591
    %v875 = vunpack.c.h.b16 %v591
    %v876 = vunpack.c.l.b16 %v592
    %v877 = vunpack.c.h.b16 %v592
    %v878 = vunpack.c.l.b16 %v593
    %v879 = vunpack.c.h.b16 %v593
    %v880 = vunpack.c.l.b16 %v594
    %v881 = vunpack.c.h.b16 %v594
    %v882 = vunpack.c.l.b16 %v595
    %v883 = vunpack.c.h.b16 %v595
    %v884 = vunpack.c.l.b16 %v596
    %v885 = vunpack.c.h.b16 %v596
    %v886 = vunpack.c.l.b16 %v597
    %v887 = vunpack.c.h.b16 %v597
    %v888 = vunpack.c.l.b16 %v598
    %v889 = vunpack.c.h.b16 %v598
    %v890 = vunpack.c.l.b16 %v599
    %v891 = vunpack.c.h.b16 %v599
    %v892 = vunpack.c.l.b16 %v600
    %v893 = vunpack.c.h.b16 %v600
    %v894 = vunpack.c.l.b16 %v601
    %v895 = vunpack.c.h.b16 %v601
    %v896 = vunpack.c.l.b16 %v602
    %v897 = vunpack.c.h.b16 %v602
    %v898 = vunpack.c.l.b16 %v603
    %v899 = vunpack.c.h.b16 %v603
    %v900 = vunpack.c.l.b16 %v604
    %v901 = vunpack.c.h.b16 %v604
    %v902 = vunpack.c.l.b16 %v605
    %v903 = vunpack.c.h.b16 %v605
    %v904 = vunpack.c.l.b16 %v606
    %v905 = vunpack.c.h.b16 %v606
    %v906 = vunpack.c.l.b16 %v607
    %v907 = vunpack.c.h.b16 %v607
    %v908 = vunpack.c.l.b16 %v608
    %v909 = vunpack.c.h.b16 %v608
    %v910 = vunpack.c.l.b16 %v609
    %v911 = vunpack.c.h.b16 %v609
    %v912 = vunpack.c.l.b16 %v610
    %v913 = vunpack.c.h.b16 %v610
    %v914 = vunpack.c.l.b16 %v611
    %v915 = vunpack.c.h.b16 %v611
    %v916 = vunpack.c.l.b16 %v612
    %v917 = vunpack.c.h.b16 %v612
    %v918 = vunpack.c.l.b16 %v613
    %v919 = vunpack.c.h.b16 %v613
    %v920 = vunpack.c.l.b16 %v614
    %v921 = vunpack.c.h.b16 %v614
    %v922 = vunpack.c.l.b16 %v615
    %v923 = vunpack.c.h.b16 %v615
    %v924 = vunpack.c.l.b16 %v616
    %v925 = vunpack.c.h.b16 %v616
    %v926 = vunpack.c.l.b16 %v617
    %v927 = vunpack.c.h.b16 %v617
    %v928 = vunpack.c.l.b16 %v618
    %v929 = vunpack.c.h.b16 %v618
    %v930 = vunpack.c.l.b16 %v619
    %v931 = vunpack.c.h.b16 %v619
    %v932 = vunpack.c.l.b16 %v620
    %v933 = vunpack.c.h.b16 %v620
    %v934 = vunpack.c.l.b16 %v621
    %v935 = vunpack.c.h.b16 %v621
    %v936 = vunpack.c.l.b16 %v622
    %v937 = vunpack.c.h.b16 %v622
    %v938 = vunpack.c.l.b16 %v623
    %v939 = vunpack.c.h.b16 %v623
    %v940 = vunpack.c.l.b16 %v624
    %v941 = vunpack.c.h.b16 %v624
    %v942 = vunpack.c.l.b16 %v625
    %v943 = vunpack.c.h.b16 %v625
    %v944 = vunpack.c.l.b16 %v626
    %v945 = vunpack.c.h.b16 %v626
    %v946 = vunpack.c.l.b16 %v627
    %v947 = vunpack.c.h.b16 %v627
    %v948 = vunpack.c.l.b16 %v628
    %v949 = vunpack.c.h.b16 %v628
    %v950 = vunpack.c.l.b16 %v629
    %v951 = vunpack.c.h.b16 %v629
    %v952 = vunpack.c.l.b16 %v630
    %v953 = vunpack.c.h.b16 %v630
    %v954 = vunpack.c.l.b16 %v631
    %v955 = vunpack.c.h.b16 %v631
    %v956 = vunpack.c.l.b16 %v632
    %v957 = vunpack.c.h.b16 %v632
    %v958 = vunpack.c.l.b16 %v633
    %v959 = vunpack.c.h.b16 %v633
    %v960 = vunpack.c.l.b16 %v634
    %v961 = vunpack.c.h.b16 %v634
    %v962 = vunpack.c.l.b16 %v635
    %v963 = vunpack.c.h.b16 %v635
    %v964 = vunpack.c.l.b16 %v636
    %v965 = vunpack.c.h.b16 %v636
    %v966 = vunpack.c.l.b16 %v637
    %v967 = vunpack.c.h.b16 %v637
    %v968 = vunpack.c.l.b16 %v638
    %v969 = vunpack.c.h.b16 %v638
    %v970 = vunpack.c.l.b16 %v639
    %v971 = vunpack.c.h.b16 %v639
    %v972 = vunpack.c.l.b16 %v640
    %v973 = vunpack.c.h.b16 %v640
    %v974 = vunpack.c.l.b16 %v641
    %v975 = vunpack.c.h.b16 %v641
    %v976 = vunpack.c.l.b16 %v642
    %v977 = vunpack.c.h.b16 %v642
    %v978 = vunpack.c.l.b16 %v643
    %v979 = vunpack.c.h.b16 %v643
    %v980 = vunpack.c.l.b16 %v644
    %v981 = vunpack.c.h.b16 %v644
    %v982 = vunpack.c.l.b16 %v645
    %v983 = vunpack.c.h.b16 %v645
    %v984 = vunpack.c.l.b16 %v646
    %v985 = vunpack.c.h.b16 %v646
    %v986 = vunpack.c.l.b16 %v647
    %v987 = vunpack.c.h.b16 %v647
    %v988 = vunpack.c.l.b16 %v648
    %v989 = vunpack.c.h.b16 %v648
    %v990 = vunpack.c.l.b16 %v649
    %v991 = vunpack.c.h.b16 %v649
    %v992 = vunpack.c.l.b16 %v650
    %v993 = vunpack.c.h.b16 %v650
    %v994 = vunpack.c.l.b16 %v651
    %v995 = vunpack.c.h.b16 %v651
    %v996 = vunpack.c.l.b16 %v652
    %v997 = vunpack.c.h.b16 %v652
    %v998 = vunpack.c.l.b16 %v653
    %v999 = vunpack.c.h.b16 %v653
    %v1000 = vunpack.c.l.b16 %v654
    %v1001 = vunpack.c.h.b16 %v654
    %v1002 = vunpack.c.l.b16 %v655
    %v1003 = vunpack.c.h.b16 %v655
    %v1004 = vunpack.c.l.b16 %v656
    %v1005 = vunpack.c.h.b16 %v656
    %v1006 = vunpack.c.l.b16 %v657
    %v1007 = vunpack.c.h.b16 %v657
    %v1008 = vunpack.c.l.b16 %v658
    %v1009 = vunpack.c.h.b16 %v658
    %v1010 = vunpack.c.l.b16 %v659
    %v1011 = vunpack.c.h.b16 %v659
    %v1012 = vunpack.c.l.b16 %v660
    %v1013 = vunpack.c.h.b16 %v660
    %v1014 = vunpack.c.l.b16 %v661
    %v1015 = vunpack.c.h.b16 %v661
    %v1016 = vunpack.c.l.b16 %v662
    %v1017 = vunpack.c.h.b16 %v662
    %v1018 = vunpack.c.l.b16 %v663
    %v1019 = vunpack.c.h.b16 %v663
    %v1020 = vunpack.c.l.b16 %v664
    %v1021 = vunpack.c.h.b16 %v664
    %v1022 = vunpack.c.l.b16 %v665
    %v1023 = vunpack.c.h.b16 %v665
    %v1024 = vunpack.c.l.b16 %v666
    %v1025 = vunpack.c.h.b16 %v666
    %v1026 = vunpack.c.l.b16 %v667
    %v1027 = vunpack.c.h.b16 %v667
    %v1028 = vunpack.c.l.b16 %v668
    %v1029 = vunpack.c.h.b16 %v668
    %v1030 = vunpack.c.l.b16 %v669
    %v1031 = vunpack.c.h.b16 %v669
    %v1032 = vunpack.c.l.b16 %v670
    %v1033 = vunpack.c.h.b16 %v670
    %v1034 = vunpack.c.l.b16 %v671
    %v1035 = vunpack.c.h.b16 %v671
    %v1036 = vunpack.c.l.b16 %v672
    %v1037 = vunpack.c.h.b16 %v672
    %v1038 = vunpack.c.l.b16 %v673
    %v1039 = vunpack.c.h.b16 %v673
    %v1040 = vunpack.c.l.b16 %v674
    %v1041 = vunpack.c.h.b16 %v674
    %v1042 = vunpack.c.l.b16 %v675
    %v1043 = vunpack.c.h.b16 %v675
    %v1044 = vunpack.c.l.b16 %v676
    %v1045 = vunpack.c.h.b16 %v676
    %v1046 = vunpack.c.l.b16 %v677
    %v1047 = vunpack.c.h.b16 %v677
    %v1048 = vunpack.c.l.b16 %v678
    %v1049 = vunpack.c.h.b16 %v678
    %v1050 = vunpack.c.l.b16 %v679
    %v1051 = vunpack.c.h.b16 %v679
    %v1052 = vunpack.c.l.b16 %v680
    %v1053 = vunpack.c.h.b16 %v680
    %v1054 = vunpack.c.l.b16 %v681
    %v1055 = vunpack.c.h.b16 %v681
    %v1056 = vunpack.c.l.b16 %v682
    %v1057 = vunpack.c.h.b16 %v682
    %v1058 = vunpack.c.l.b16 %v683
    %v1059 = vunpack.c.h.b16 %v683
    %v1060 = vunpack.c.l.b16 %v684
    %v1061 = vunpack.c.h.b16 %v684
    %v1062 = vunpack.c.l.b16 %v685
    %v1063 = vunpack.c.h.b16 %v685
    %v1064 = vunpack.c.l.b16 %v686
    %v1065 = vunpack.c.h.b16 %v686
    %v1066 = vunpack.c.l.b16 %v687
    %v1067 = vunpack.c.h.b16 %v687
    %v1068 = vunpack.c.l.b16 %v688
    %v1069 = vunpack.c.h.b16 %v688
    %v1070 = vunpack.c.l.b16 %v689
    %v1071 = vunpack.c.h.b16 %v689
    %v1072 = vunpack.c.l.b16 %v690
    %v1073 = vunpack.c.h.b16 %v690
    %v1074 = vunpack.c.l.b16 %v691
    %v1075 = vunpack.c.h.b16 %v691
    %v1076 = vunpack.c.l.b16 %v692
    %v1077 = vunpack.c.h.b16 %v692
    %v1078 = vunpack.c.l.b16 %v693
    %v1079 = vunpack.c.h.b16 %v693
    %v1080 = vunpack.c.l.b16 %v694
    %v1081 = vunpack.c.h.b16 %v694
    %v1082 = vunpack.c.l.b16 %v695
    %v1083 = vunpack.c.h.b16 %v695
    %v1084 = vunpack.c.l.b16 %v696
    %v1085 = vunpack.c.h.b16 %v696
    %v1086 = vunpack.c.l.b16 %v697
    %v1087 = vunpack.c.h.b16 %v697
    %v1088 = vunpack.c.l.b16 %v698
    %v1089 = vunpack.c.h.b16 %v698
    %v1090 = vunpack.c.l.b16 %v699
    %v1091 = vunpack.c.h.b16 %v699
    %v1092 = vunpack.c.l.b16 %v700
    %v1093 = vunpack.c.h.b16 %v700
    %v1094 = vunpack.c.l.b16 %v701
    %v1095 = vunpack.c.h.b16 %v701
    %v1096 = vunpack.c.l.b16 %v702
    %v1097 = vunpack.c.h.b16 %v702
    %v1098 = vunpack.c.l.b16 %v703
    %v1099 = vunpack.c.h.b16 %v703
    %v1100 = vunpack.c.l.b16 %v704
    %v1101 = vunpack.c.h.b16 %v704
    %v1102 = vunpack.c.l.b16 %v705
    %v1103 = vunpack.c.h.b16 %v705
    %v1104 = vunpack.c.l.b16 %v706
    %v1105 = vunpack.c.h.b16 %v706
    %v1106 = vunpack.c.l.b16 %v707
    %v1107 = vunpack.c.h.b16 %v707
    %v1108 = vunpack.c.l.b16 %v708
    %v1109 = vunpack.c.h.b16 %v708
    %v1110 = vunpack.c.l.b16 %v709
    %v1111 = vunpack.c.h.b16 %v709
    %v1112 = vunpack.c.l.b16 %v710
    %v1113 = vunpack.c.h.b16 %v710
    %v1114 = vunpack.c.l.b16 %v711
    %v1115 = vunpack.c.h.b16 %v711
    %v1116 = vunpack.c.l.b16 %v712
    %v1117 = vunpack.c.h.b16 %v712
    %v1118 = vunpack.c.l.b16 %v713
    %v1119 = vunpack.c.h.b16 %v713
    %v1120 = vpack.c.b16 %v868, %v864
    %v1121 = vpack.c.b16 %v869, %v865
    %v1122 = vpack.c.b16 %v870, %v866
    %v1123 = vpack.c.b16 %v871, %v867
    %v1124 = vpack.c.b16 %v876, %v872
    %v1125 = vpack.c.b16 %v877, %v873
    %v1126 = vpack.c.b16 %v878, %v874
    %v1127 = vpack.c.b16 %v879, %v875
    %v1128 = vpack.c.b16 %v884, %v880
    %v1129 = vpack.c.b16 %v885, %v881
    %v1130 = vpack.c.b16 %v886, %v882
    %v1131 = vpack.c.b16 %v887, %v883
    %v1132 = vpack.c.b16 %v892, %v888
    %v1133 = vpack.c.b16 %v893, %v889
    %v1134 = vpack.c.b16 %v894, %v890
    %v1135 = vpack.c.b16 %v895, %v891
    %v1136 = vpack.c.b16 %v900, %v896
    %v1137 = vpack.c.b16 %v901, %v897
    %v1138 = vpack.c.b16 %v902, %v898
    %v1139 = vpack.c.b16 %v903, %v899
    %v1140 = vpack.c.b16 %v908, %v904
    %v1141 = vpack.c.b16 %v909, %v905
    %v1142 = vpack.c.b16 %v910, %v906
    %v1143 = vpack.c.b16 %v911, %v907
    %v1144 = vpack.c.b16 %v916, %v912
    %v1145 = vpack.c.b16 %v917, %v913
    %v1146 = vpack.c.b16 %v918, %v914
    %v1147 = vpack.c.b16 %v919, %v915
    %v1148 = vpack.c.b16 %v924, %v920
    %v1149 = vpack.c.b16 %v925, %v921
    %v1150 = vpack.c.b16 %v926, %v922
    %v1151 = vpack.c.b16 %v927, %v923
    %v1152 = vpack.c.b16 %v932, %v928
    %v1153 = vpack.c.b16 %v933, %v929
    %v1154 = vpack.c.b16 %v934, %v930
    %v1155 = vpack.c.b16 %v935, %v931
    %v1156 = vpack.c.b16 %v940, %v936
    %v1157 = vpack.c.b16 %v941, %v937
    %v1158 = vpack.c.b16 %v942, %v938
    %v1159 = vpack.c.b16 %v943, %v939
    %v1160 = vpack.c.b16 %v948, %v944
    %v1161 = vpack.c.b16 %v949, %v945
    %v1162 = vpack.c.b16 %v950, %v946
    %v1163 = vpack.c.b16 %v951, %v947
    %v1164 = vpack.c.b16 %v956, %v952
    %v1165 = vpack.c.b16 %v957, %v953
    %v1166 = vpack.c.b16 %v958, %v954
    %v1167 = vpack.c.b16 %v959, %v955
    %v1168 = vpack.c.b16 %v964, %v960
    %v1169 = vpack.c.b16 %v965, %v961
    %v1170 = vpack.c.b16 %v966, %v962
    %v1171 = vpack.c.b16 %v967, %v963
    %v1172 = vpack.c.b16 %v972, %v968
    %v1173 = vpack.c.b16 %v973, %v969
    %v1174 = vpack.c.b16 %v974, %v970
    %v1175 = vpack.c.b16 %v975, %v971
    %v1176 = vpack.c.b16 %v980, %v976
    %v1177 = vpack.c.b16 %v981, %v977
    %v1178 = vpack.c.b16 %v982, %v978
    %v1179 = vpack.c.b16 %v983, %v979
    %v1180 = vpack.c.b16 %v988, %v984
    %v1181 = vpack.c.b16 %v989, %v985
    %v1182 = vpack.c.b16 %v990, %v986
    %v1183 = vpack.c.b16 %v991, %v987
    %v1184 = vpack.c.b16 %v996, %v992
    %v1185 = vpack.c.b16 %v997, %v993
    %v1186 = vpack.c.b16 %v998, %v994
    %v1187 = vpack.c.b16 %v999, %v995
    %v1188 = vpack.c.b16 %v1004, %v1000
    %v1189 = vpack.c.b16 %v1005, %v1001
    %v1190 = vpack.c.b16 %v1006, %v1002
    %v1191 = vpack.c.b16 %v1007, %v1003
    %v1192 = vpack.c.b16 %v1012, %v1008
    %v1193 = vpack.c.b16 %v1013, %v1009
    %v1194 = vpack.c.b16 %v1014, %v1010
    %v1195 = vpack.c.b16 %v1015, %v1011
    %v1196 = vpack.c.b16 %v1020, %v1016
    %v1197 = vpack.c.b16 %v1021, %v1017
    %v1198 = vpack.c.b16 %v1022, %v1018
    %v1199 = vpack.c.b16 %v1023, %v1019
    %v1200 = vpack.c.b16 %v1028, %v1024
    %v1201 = vpack.c.b16 %v1029, %v1025
    %v1202 = vpack.c.b16 %v1030, %v1026
    %v1203 = vpack.c.b16 %v1031, %v1027
    %v1204 = vpack.c.b16 %v1036, %v1032
    %v1205 = vpack.c.b16 %v1037, %v1033
    %v1206 = vpack.c.b16 %v1038, %v1034
    %v1207 = vpack.c.b16 %v1039, %v1035
    %v1208 = vpack.c.b16 %v1044, %v1040
    %v1209 = vpack.c.b16 %v1045, %v1041
    %v1210 = vpack.c.b16 %v1046, %v1042
    %v1211 = vpack.c.b16 %v1047, %v1043
    %v1212 = vpack.c.b16 %v1052, %v1048
    %v1213 = vpack.c.b16 %v1053, %v1049
    %v1214 = vpack.c.b16 %v1054, %v1050
    %v1215 = vpack.c.b16 %v1055, %v1051
    %v1216 = vpack.c.b16 %v1060, %v1056
    %v1217 = vpack.c.b16 %v1061, %v1057
    %v1218 = vpack.c.b16 %v1062, %v1058
    %v1219 = vpack.c.b16 %v1063, %v1059
    %v1220 = vpack.c.b16 %v1068, %v1064
    %v1221 = vpack.c.b16 %v1069, %v1065
    %v1222 = vpack.c.b16 %v1070, %v1066
    %v1223 = vpack.c.b16 %v1071, %v1067
    %v1224 = vpack.c.b16 %v1076, %v1072
    %v1225 = vpack.c.b16 %v1077, %v1073
    %v1226 = vpack.c.b16 %v1078, %v1074
    %v1227 = vpack.c.b16 %v1079, %v1075
    %v1228 = vpack.c.b16 %v1084, %v1080
    %v1229 = vpack.c.b16 %v1085, %v1081
    %v1230 = vpack.c.b16 %v1086, %v1082
    %v1231 = vpack.c.b16 %v1087, %v1083
    %v1232 = vpack.c.b16 %v1092, %v1088
    %v1233 = vpack.c.b16 %v1093, %v1089
    %v1234 = vpack.c.b16 %v1094, %v1090
    %v1235 = vpack.c.b16 %v1095, %v1091
    %v1236 = vpack.c.b16 %v1100, %v1096
    %v1237 = vpack.c.b16 %v1101, %v1097
    %v1238 = vpack.c.b16 %v1102, %v1098
    %v1239 = vpack.c.b16 %v1103, %v1099
    %v1240 = vpack.c.b16 %v1108, %v1104
    %v1241 = vpack.c.b16 %v1109, %v1105
    %v1242 = vpack.c.b16 %v1110, %v1106
    %v1243 = vpack.c.b16 %v1111, %v1107
    %v1244 = vpack.c.b16 %v1116, %v1112
    %v1245 = vpack.c.b16 %v1117, %v1113
    %v1246 = vpack.c.b16 %v1118, %v1114
    %v1247 = vpack.c.b16 %v1119, %v1115
    %1376 = vmatprep.subr.bf16.mxu0 %v1121
    %1377 = vmatpush1.bf16.msra.mxu0 %v1120
    %1378 = vmatprep.subr.bf16.mxu0 %v1125
    %1379 = vmatpush1.bf16.msra.mxu0 %v1124
    %1380 = vmatprep.subr.bf16.mxu0 %v1129
    %1381 = vmatpush1.bf16.msra.mxu0 %v1128
    %1382 = vmatprep.subr.bf16.mxu0 %v1133
    %1383 = vmatpush1.bf16.msra.mxu0 %v1132
    %1384 = vmatprep.subr.bf16.mxu0 %v1137
    %1385 = vmatpush1.bf16.msra.mxu0 %v1136
    %1386 = vmatprep.subr.bf16.mxu0 %v1141
    %1387 = vmatpush1.bf16.msra.mxu0 %v1140
    %1388 = vmatprep.subr.bf16.mxu0 %v1145
    %1389 = vmatpush1.bf16.msra.mxu0 %v1144
    %1390 = vmatprep.subr.bf16.mxu0 %v1149
    %1391 = vmatpush1.bf16.msra.mxu0 %v1148
    %1392 = vmatprep.subr.bf16.mxu0 %v1153
    %1393 = vmatpush1.bf16.msra.mxu0 %v1152
    %1394 = vmatprep.subr.bf16.mxu0 %v1157
    %1395 = vmatpush1.bf16.msra.mxu0 %v1156
    %1396 = vmatprep.subr.bf16.mxu0 %v1161
    %1397 = vmatpush1.bf16.msra.mxu0 %v1160
    %1398 = vmatprep.subr.bf16.mxu0 %v1165
    %1399 = vmatpush1.bf16.msra.mxu0 %v1164
    %1400 = vmatprep.subr.bf16.mxu0 %v1169
    %1401 = vmatpush1.bf16.msra.mxu0 %v1168
    %1402 = vmatprep.subr.bf16.mxu0 %v1173
    %1403 = vmatpush1.bf16.msra.mxu0 %v1172
    %1404 = vmatprep.subr.bf16.mxu0 %v1177
    %1405 = vmatpush1.bf16.msra.mxu0 %v1176
    %1406 = vmatprep.subr.bf16.mxu0 %v1181
    %1407 = vmatpush1.bf16.msra.mxu0 %v1180
    %1408 = vmatprep.mubr.bf16.mxu0 %v583
    %1409 = vmatmul.mubr.bf16.gmra.mrb[0].mxu0 %v582
    %v1410 = vpop.f32.mrb[0].mxu0
    %v1411 = vadd.f32 %v719, %v1410
    %v1412 = vpop.f32.mrb[0].mxu0
    %v1413 = vadd.f32 %v723, %v1412
    %v1414 = vpop.f32.mrb[0].mxu0
    %v1415 = vadd.f32 %v719, %v1414
    %v1416 = vpop.f32.mrb[0].mxu0
    %v1417 = vadd.f32 %v723, %v1416
    %1418 = vdwg.mxu0
    %1419 = vmatprep.subr.bf16.mxu0 %v1185
    %1420 = vmatpush1.bf16.msra.mxu0 %v1184
    %1421 = vmatprep.subr.bf16.mxu0 %v1189
    %1422 = vmatpush1.bf16.msra.mxu0 %v1188
    %1423 = vmatprep.subr.bf16.mxu0 %v1193
    %1424 = vmatpush1.bf16.msra.mxu0 %v1192
    %1425 = vmatprep.subr.bf16.mxu0 %v1197
    %1426 = vmatpush1.bf16.msra.mxu0 %v1196
    %1427 = vmatprep.subr.bf16.mxu0 %v1201
    %1428 = vmatpush1.bf16.msra.mxu0 %v1200
    %1429 = vmatprep.subr.bf16.mxu0 %v1205
    %1430 = vmatpush1.bf16.msra.mxu0 %v1204
    %1431 = vmatprep.subr.bf16.mxu0 %v1209
    %1432 = vmatpush1.bf16.msra.mxu0 %v1208
    %1433 = vmatprep.subr.bf16.mxu0 %v1213
    %1434 = vmatpush1.bf16.msra.mxu0 %v1212
    %1435 = vmatprep.subr.bf16.mxu0 %v1217
    %1436 = vmatpush1.bf16.msra.mxu0 %v1216
    %1437 = vmatprep.subr.bf16.mxu0 %v1221
    %1438 = vmatpush1.bf16.msra.mxu0 %v1220
    %1439 = vmatprep.subr.bf16.mxu0 %v1225
    %1440 = vmatpush1.bf16.msra.mxu0 %v1224
    %1441 = vmatprep.subr.bf16.mxu0 %v1229
    %1442 = vmatpush1.bf16.msra.mxu0 %v1228
    %1443 = vmatprep.subr.bf16.mxu0 %v1233
    %1444 = vmatpush1.bf16.msra.mxu0 %v1232
    %1445 = vmatprep.subr.bf16.mxu0 %v1237
    %1446 = vmatpush1.bf16.msra.mxu0 %v1236
    %1447 = vmatprep.subr.bf16.mxu0 %v1241
    %1448 = vmatpush1.bf16.msra.mxu0 %v1240
    %1449 = vmatprep.subr.bf16.mxu0 %v1245
    %1450 = vmatpush1.bf16.msra.mxu0 %v1244
    %1451 = vmatprep.mubr.bf16.mxu0 %v585
    %1452 = vmatmul.mubr.bf16.gmra.mrb[0].mxu0 %v584
    %v1453 = vpop.f32.mrb[0].mxu0
    %v1454 = vadd.f32 %v1411, %v1453
    %v1455 = vpop.f32.mrb[0].mxu0
    %v1456 = vadd.f32 %v1413, %v1455
    %v1457 = vpop.f32.mrb[0].mxu0
    %v1458 = vadd.f32 %v1415, %v1457
    %v1459 = vpop.f32.mrb[0].mxu0
    %v1460 = vadd.f32 %v1417, %v1459
    %1461 = vdwg.mxu0
    %1462 = vmatprep.subr.bf16.mxu0 %v1123
    %1463 = vmatpush1.bf16.msra.mxu0 %v1122
    %1464 = vmatprep.subr.bf16.mxu0 %v1127
    %1465 = vmatpush1.bf16.msra.mxu0 %v1126
    %1466 = vmatprep.subr.bf16.mxu0 %v1131
    %1467 = vmatpush1.bf16.msra.mxu0 %v1130
    %1468 = vmatprep.subr.bf16.mxu0 %v1135
    %1469 = vmatpush1.bf16.msra.mxu0 %v1134
    %1470 = vmatprep.subr.bf16.mxu0 %v1139
    %1471 = vmatpush1.bf16.msra.mxu0 %v1138
    %1472 = vmatprep.subr.bf16.mxu0 %v1143
    %1473 = vmatpush1.bf16.msra.mxu0 %v1142
    %1474 = vmatprep.subr.bf16.mxu0 %v1147
    %1475 = vmatpush1.bf16.msra.mxu0 %v1146
    %1476 = vmatprep.subr.bf16.mxu0 %v1151
    %1477 = vmatpush1.bf16.msra.mxu0 %v1150
    %1478 = vmatprep.subr.bf16.mxu0 %v1155
    %1479 = vmatpush1.bf16.msra.mxu0 %v1154
    %1480 = vmatprep.subr.bf16.mxu0 %v1159
    %1481 = vmatpush1.bf16.msra.mxu0 %v1158
    %1482 = vmatprep.subr.bf16.mxu0 %v1163
    %1483 = vmatpush1.bf16.msra.mxu0 %v1162
    %1484 = vmatprep.subr.bf16.mxu0 %v1167
    %1485 = vmatpush1.bf16.msra.mxu0 %v1166
    %1486 = vmatprep.subr.bf16.mxu0 %v1171
    %1487 = vmatpush1.bf16.msra.mxu0 %v1170
    %1488 = vmatprep.subr.bf16.mxu0 %v1175
    %1489 = vmatpush1.bf16.msra.mxu0 %v1174
    %1490 = vmatprep.subr.bf16.mxu0 %v1179
    %1491 = vmatpush1.bf16.msra.mxu0 %v1178
    %1492 = vmatprep.subr.bf16.mxu0 %v1183
    %1493 = vmatpush1.bf16.msra.mxu0 %v1182
    %1494 = vmatprep.mubr.bf16.mxu0 %v583
    %1495 = vmatmul.mubr.bf16.gmra.mrb[0].mxu0 %v582
    %v1496 = vpop.f32.mrb[0].mxu0
    %v1497 = vadd.f32 %v727, %v1496
    %v1498 = vpop.f32.mrb[0].mxu0
    %v1499 = vadd.f32 %v731, %v1498
    %v1500 = vpop.f32.mrb[0].mxu0
    %v1501 = vadd.f32 %v727, %v1500
    %v1502 = vpop.f32.mrb[0].mxu0
    %v1503 = vadd.f32 %v731, %v1502
    %1504 = vdwg.mxu0
    %1505 = vmatprep.subr.bf16.mxu0 %v1187
    %1506 = vmatpush1.bf16.msra.mxu0 %v1186
    %1507 = vmatprep.subr.bf16.mxu0 %v1191
    %1508 = vmatpush1.bf16.msra.mxu0 %v1190
    %1509 = vmatprep.subr.bf16.mxu0 %v1195
    %1510 = vmatpush1.bf16.msra.mxu0 %v1194
    %1511 = vmatprep.subr.bf16.mxu0 %v1199
    %1512 = vmatpush1.bf16.msra.mxu0 %v1198
    %1513 = vmatprep.subr.bf16.mxu0 %v1203
    %1514 = vmatpush1.bf16.msra.mxu0 %v1202
    %1515 = vmatprep.subr.bf16.mxu0 %v1207
    %1516 = vmatpush1.bf16.msra.mxu0 %v1206
    %1517 = vmatprep.subr.bf16.mxu0 %v1211
    %1518 = vmatpush1.bf16.msra.mxu0 %v1210
    %1519 = vmatprep.subr.bf16.mxu0 %v1215
    %1520 = vmatpush1.bf16.msra.mxu0 %v1214
    %1521 = vmatprep.subr.bf16.mxu0 %v1219
    %1522 = vmatpush1.bf16.msra.mxu0 %v1218
    %1523 = vmatprep.subr.bf16.mxu0 %v1223
    %1524 = vmatpush1.bf16.msra.mxu0 %v1222
    %1525 = vmatprep.subr.bf16.mxu0 %v1227
    %1526 = vmatpush1.bf16.msra.mxu0 %v1226
    %1527 = vmatprep.subr.bf16.mxu0 %v1231
    %1528 = vmatpush1.bf16.msra.mxu0 %v1230
    %1529 = vmatprep.subr.bf16.mxu0 %v1235
    %1530 = vmatpush1.bf16.msra.mxu0 %v1234
    %1531 = vmatprep.subr.bf16.mxu0 %v1239
    %1532 = vmatpush1.bf16.msra.mxu0 %v1238
    %1533 = vmatprep.subr.bf16.mxu0 %v1243
    %1534 = vmatpush1.bf16.msra.mxu0 %v1242
    %1535 = vmatprep.subr.bf16.mxu0 %v1247
    %1536 = vmatpush1.bf16.msra.mxu0 %v1246
    %1537 = vmatprep.mubr.bf16.mxu0 %v585
    %1538 = vmatmul.mubr.bf16.gmra.mrb[0].mxu0 %v584
    %v1539 = vpop.f32.mrb[0].mxu0
    %v1540 = vadd.f32 %v1497, %v1539
    %v1541 = vpop.f32.mrb[0].mxu0
    %v1542 = vadd.f32 %v1499, %v1541
    %v1543 = vpop.f32.mrb[0].mxu0
    %v1544 = vadd.f32 %v1501, %v1543
    %v1545 = vpop.f32.mrb[0].mxu0
    %v1546 = vadd.f32 %v1503, %v1545
    %1547 = vdwg.mxu0
    %1548 = vst [vmem:[#allocation2] sm:$0xff] 0.0
    %1549 = vst [vmem:[#allocation2 + $0x8] sm:$0xff] 0.0
    %1550 = vst [vmem:[#allocation2 + $0x10] sm:$0xff] 0.0
    %1551 = vst [vmem:[#allocation2 + $0x18] sm:$0xff] 0.0
    %1552 = vst [vmem:[#allocation2 + $0x20] sm:$0x3] 0.0
    %1553 = vst [vmem:[#allocation2 + $0x28] sm:$0x3] 0.0
    %1554 = vst [vmem:[#allocation2 + $0x30] sm:$0x3] 0.0
    %1555 = vst [vmem:[#allocation2 + $0x38] sm:$0x3] 0.0
    %1556 = vst [vmem:[#allocation2 + $0x40] sm:$0xff] 0.0
    %1557 = vst [vmem:[#allocation2 + $0x48] sm:$0xff] 0.0
    %1558 = vst [vmem:[#allocation2 + $0x50] sm:$0xff] 0.0
    %1559 = vst [vmem:[#allocation2 + $0x58] sm:$0xff] 0.0
    %1560 = vst [vmem:[#allocation2 + $0x60] sm:$0x3] 0.0
    %1561 = vst [vmem:[#allocation2 + $0x68] sm:$0x3] 0.0
    %1562 = vst [vmem:[#allocation2 + $0x70] sm:$0x3] 0.0
    %1563 = vst [vmem:[#allocation2 + $0x78] sm:$0x3] 0.0
    %v1572 = vrot.slane %v1454, 7
    %v1573 = vrot.slane %v1456, 7
    %v1574 = vrot.slane %v1540, 7
    %v1575 = vrot.slane %v1542, 7
    %v1576 = vrot.slane %v1458, 7
    %v1577 = vrot.slane %v1460, 7
    %v1578 = vrot.slane %v1544, 7
    %v1579 = vrot.slane %v1546, 7
    %1588 = vst [vmem:[#allocation2] sm:$0xfe] %v1572
    %1589 = vst [vmem:[#allocation2 + $0x8] sm:$0xfe] %v1573
    %1590 = vst [vmem:[#allocation2 + $0x10] sm:$0xfe] %v1574
    %1591 = vst [vmem:[#allocation2 + $0x18] sm:$0xfe] %v1575
    %1592 = vst [vmem:[#allocation2 + $0x20] sm:$0x1] %v1572
    %1593 = vst [vmem:[#allocation2 + $0x28] sm:$0x1] %v1573
    %1594 = vst [vmem:[#allocation2 + $0x30] sm:$0x1] %v1574
    %1595 = vst [vmem:[#allocation2 + $0x38] sm:$0x1] %v1575
    %1596 = vst [vmem:[#allocation2 + $0x40] sm:$0xfe] %v1576
    %1597 = vst [vmem:[#allocation2 + $0x48] sm:$0xfe] %v1577
    %1598 = vst [vmem:[#allocation2 + $0x50] sm:$0xfe] %v1578
    %1599 = vst [vmem:[#allocation2 + $0x58] sm:$0xfe] %v1579
    %1600 = vst [vmem:[#allocation2 + $0x60] sm:$0x1] %v1576
    %1601 = vst [vmem:[#allocation2 + $0x68] sm:$0x1] %v1577
    %1602 = vst [vmem:[#allocation2 + $0x70] sm:$0x1] %v1578
    %1603 = vst [vmem:[#allocation2 + $0x78] sm:$0x1] %v1579
    %v1604 = vld [vmem:[#allocation2] sm:$0xff]
    %v1605 = vld [vmem:[#allocation2 + $0x8] sm:$0xff]
    %v1606 = vld [vmem:[#allocation2 + $0x10] sm:$0xff]
    %v1607 = vld [vmem:[#allocation2 + $0x18] sm:$0xff]
    %v1608 = vld [vmem:[#allocation2 + $0x20] sm:$0x3]
    %v1609 = vld [vmem:[#allocation2 + $0x28] sm:$0x3]
    %v1610 = vld [vmem:[#allocation2 + $0x30] sm:$0x3]
    %v1611 = vld [vmem:[#allocation2 + $0x38] sm:$0x3]
    %v1612 = vld [vmem:[#allocation2 + $0x40] sm:$0xff]
    %v1613 = vld [vmem:[#allocation2 + $0x48] sm:$0xff]
    %v1614 = vld [vmem:[#allocation2 + $0x50] sm:$0xff]
    %v1615 = vld [vmem:[#allocation2 + $0x58] sm:$0xff]
    %v1616 = vld [vmem:[#allocation2 + $0x60] sm:$0x3]
    %v1617 = vld [vmem:[#allocation2 + $0x68] sm:$0x3]
    %v1618 = vld [vmem:[#allocation2 + $0x70] sm:$0x3]
    %v1619 = vld [vmem:[#allocation2 + $0x78] sm:$0x3]
    %v1620 = vpack.c.bf16 %v1608, %v1604
    %v1621 = vpack.c.bf16 %v1609, %v1605
    %v1622 = vpack.c.bf16 %v1610, %v1606
    %v1623 = vpack.c.bf16 %v1611, %v1607
    %v1624 = vpack.c.bf16 %v1616, %v1612
    %v1625 = vpack.c.bf16 %v1617, %v1613
    %v1626 = vpack.c.bf16 %v1618, %v1614
    %v1627 = vpack.c.bf16 %v1619, %v1615
    %v1636 = vunpack.c.l.b16 %v1620
    %v1637 = vunpack.c.l.b16 %v1621
    %v1638 = vunpack.c.l.b16 %v1622
    %v1639 = vunpack.c.l.b16 %v1623
    %v1640 = vunpack.c.l.b16 %v1624
    %v1641 = vunpack.c.l.b16 %v1625
    %v1642 = vunpack.c.l.b16 %v1626
    %v1643 = vunpack.c.l.b16 %v1627
    %v1644 = vld [vmem:[#allocation12] sm:$0xff]
    %v1645 = vld [vmem:[#allocation12 + $0x8] sm:$0xff]
    %v1646 = vld [vmem:[#allocation12 + $0x10] sm:$0xff]
    %v1647 = vld [vmem:[#allocation12 + $0x18] sm:$0xff]
    %v1648 = vld [vmem:[#allocation12 + $0x20] sm:$0xff]
    %v1649 = vld [vmem:[#allocation12 + $0x28] sm:$0xff]
    %v1650 = vld [vmem:[#allocation12 + $0x30] sm:$0xff]
    %v1651 = vld [vmem:[#allocation12 + $0x38] sm:$0xff]
    %v1652 = vld [vmem:[#allocation12 + $0x40] sm:$0xff]
    %v1653 = vld [vmem:[#allocation12 + $0x48] sm:$0xff]
    %v1654 = vld [vmem:[#allocation12 + $0x50] sm:$0xff]
    %v1655 = vld [vmem:[#allocation12 + $0x58] sm:$0xff]
    %v1656 = vld [vmem:[#allocation12 + $0x60] sm:$0xff]
    %v1657 = vld [vmem:[#allocation12 + $0x68] sm:$0xff]
    %v1658 = vld [vmem:[#allocation12 + $0x70] sm:$0xff]
    %v1659 = vld [vmem:[#allocation12 + $0x78] sm:$0xff]
    %v1660 = vld [vmem:[#allocation12 + $0x80] sm:$0xff]
    %v1661 = vld [vmem:[#allocation12 + $0x88] sm:$0xff]
    %v1662 = vld [vmem:[#allocation12 + $0x90] sm:$0xff]
    %v1663 = vld [vmem:[#allocation12 + $0x98] sm:$0xff]
    %v1664 = vld [vmem:[#allocation12 + $0xa0] sm:$0xff]
    %v1665 = vld [vmem:[#allocation12 + $0xa8] sm:$0xff]
    %v1666 = vld [vmem:[#allocation12 + $0xb0] sm:$0xff]
    %v1667 = vld [vmem:[#allocation12 + $0xb8] sm:$0xff]
    %v1668 = vld [vmem:[#allocation12 + $0xc0] sm:$0xff]
    %v1669 = vld [vmem:[#allocation12 + $0xc8] sm:$0xff]
    %v1670 = vld [vmem:[#allocation12 + $0xd0] sm:$0xff]
    %v1671 = vld [vmem:[#allocation12 + $0xd8] sm:$0xff]
    %v1672 = vld [vmem:[#allocation12 + $0xe0] sm:$0xff]
    %v1673 = vld [vmem:[#allocation12 + $0xe8] sm:$0xff]
    %v1674 = vld [vmem:[#allocation12 + $0xf0] sm:$0xff]
    %v1675 = vld [vmem:[#allocation12 + $0xf8] sm:$0xff]
    %v1676 = vld [vmem:[#allocation12 + $0x100] sm:$0xff]
    %v1677 = vld [vmem:[#allocation12 + $0x108] sm:$0xff]
    %v1678 = vld [vmem:[#allocation12 + $0x110] sm:$0xff]
    %v1679 = vld [vmem:[#allocation12 + $0x118] sm:$0xff]
    %v1680 = vld [vmem:[#allocation12 + $0x120] sm:$0xff]
    %v1681 = vld [vmem:[#allocation12 + $0x128] sm:$0xff]
    %v1682 = vld [vmem:[#allocation12 + $0x130] sm:$0xff]
    %v1683 = vld [vmem:[#allocation12 + $0x138] sm:$0xff]
    %v1684 = vld [vmem:[#allocation12 + $0x140] sm:$0xff]
    %v1685 = vld [vmem:[#allocation12 + $0x148] sm:$0xff]
    %v1686 = vld [vmem:[#allocation12 + $0x150] sm:$0xff]
    %v1687 = vld [vmem:[#allocation12 + $0x158] sm:$0xff]
    %v1688 = vld [vmem:[#allocation12 + $0x160] sm:$0xff]
    %v1689 = vld [vmem:[#allocation12 + $0x168] sm:$0xff]
    %v1690 = vld [vmem:[#allocation12 + $0x170] sm:$0xff]
    %v1691 = vld [vmem:[#allocation12 + $0x178] sm:$0xff]
    %v1692 = vld [vmem:[#allocation12 + $0x180] sm:$0xff]
    %v1693 = vld [vmem:[#allocation12 + $0x188] sm:$0xff]
    %v1694 = vld [vmem:[#allocation12 + $0x190] sm:$0xff]
    %v1695 = vld [vmem:[#allocation12 + $0x198] sm:$0xff]
    %v1696 = vld [vmem:[#allocation12 + $0x1a0] sm:$0xff]
    %v1697 = vld [vmem:[#allocation12 + $0x1a8] sm:$0xff]
    %v1698 = vld [vmem:[#allocation12 + $0x1b0] sm:$0xff]
    %v1699 = vld [vmem:[#allocation12 + $0x1b8] sm:$0xff]
    %v1700 = vld [vmem:[#allocation12 + $0x1c0] sm:$0xff]
    %v1701 = vld [vmem:[#allocation12 + $0x1c8] sm:$0xff]
    %v1702 = vld [vmem:[#allocation12 + $0x1d0] sm:$0xff]
    %v1703 = vld [vmem:[#allocation12 + $0x1d8] sm:$0xff]
    %v1704 = vld [vmem:[#allocation12 + $0x1e0] sm:$0xff]
    %v1705 = vld [vmem:[#allocation12 + $0x1e8] sm:$0xff]
    %v1706 = vld [vmem:[#allocation12 + $0x1f0] sm:$0xff]
    %v1707 = vld [vmem:[#allocation12 + $0x1f8] sm:$0xff]
    %v1708 = vld [vmem:[#allocation12 + $0x200] sm:$0xff]
    %v1709 = vld [vmem:[#allocation12 + $0x208] sm:$0xff]
    %v1710 = vld [vmem:[#allocation12 + $0x210] sm:$0xff]
    %v1711 = vld [vmem:[#allocation12 + $0x218] sm:$0xff]
    %v1712 = vld [vmem:[#allocation12 + $0x220] sm:$0xff]
    %v1713 = vld [vmem:[#allocation12 + $0x228] sm:$0xff]
    %v1714 = vld [vmem:[#allocation12 + $0x230] sm:$0xff]
    %v1715 = vld [vmem:[#allocation12 + $0x238] sm:$0xff]
    %v1716 = vld [vmem:[#allocation12 + $0x240] sm:$0xff]
    %v1717 = vld [vmem:[#allocation12 + $0x248] sm:$0xff]
    %v1718 = vld [vmem:[#allocation12 + $0x250] sm:$0xff]
    %v1719 = vld [vmem:[#allocation12 + $0x258] sm:$0xff]
    %v1720 = vld [vmem:[#allocation12 + $0x260] sm:$0xff]
    %v1721 = vld [vmem:[#allocation12 + $0x268] sm:$0xff]
    %v1722 = vld [vmem:[#allocation12 + $0x270] sm:$0xff]
    %v1723 = vld [vmem:[#allocation12 + $0x278] sm:$0xff]
    %v1724 = vld [vmem:[#allocation12 + $0x280] sm:$0xff]
    %v1725 = vld [vmem:[#allocation12 + $0x288] sm:$0xff]
    %v1726 = vld [vmem:[#allocation12 + $0x290] sm:$0xff]
    %v1727 = vld [vmem:[#allocation12 + $0x298] sm:$0xff]
    %v1728 = vld [vmem:[#allocation12 + $0x2a0] sm:$0xff]
    %v1729 = vld [vmem:[#allocation12 + $0x2a8] sm:$0xff]
    %v1730 = vld [vmem:[#allocation12 + $0x2b0] sm:$0xff]
    %v1731 = vld [vmem:[#allocation12 + $0x2b8] sm:$0xff]
    %v1732 = vld [vmem:[#allocation12 + $0x2c0] sm:$0xff]
    %v1733 = vld [vmem:[#allocation12 + $0x2c8] sm:$0xff]
    %v1734 = vld [vmem:[#allocation12 + $0x2d0] sm:$0xff]
    %v1735 = vld [vmem:[#allocation12 + $0x2d8] sm:$0xff]
    %v1736 = vld [vmem:[#allocation12 + $0x2e0] sm:$0xff]
    %v1737 = vld [vmem:[#allocation12 + $0x2e8] sm:$0xff]
    %v1738 = vld [vmem:[#allocation12 + $0x2f0] sm:$0xff]
    %v1739 = vld [vmem:[#allocation12 + $0x2f8] sm:$0xff]
    %v1740 = vld [vmem:[#allocation12 + $0x300] sm:$0xff]
    %v1741 = vld [vmem:[#allocation12 + $0x308] sm:$0xff]
    %v1742 = vld [vmem:[#allocation12 + $0x310] sm:$0xff]
    %v1743 = vld [vmem:[#allocation12 + $0x318] sm:$0xff]
    %v1744 = vld [vmem:[#allocation12 + $0x320] sm:$0xff]
    %v1745 = vld [vmem:[#allocation12 + $0x328] sm:$0xff]
    %v1746 = vld [vmem:[#allocation12 + $0x330] sm:$0xff]
    %v1747 = vld [vmem:[#allocation12 + $0x338] sm:$0xff]
    %v1748 = vld [vmem:[#allocation12 + $0x340] sm:$0xff]
    %v1749 = vld [vmem:[#allocation12 + $0x348] sm:$0xff]
    %v1750 = vld [vmem:[#allocation12 + $0x350] sm:$0xff]
    %v1751 = vld [vmem:[#allocation12 + $0x358] sm:$0xff]
    %v1752 = vld [vmem:[#allocation12 + $0x360] sm:$0xff]
    %v1753 = vld [vmem:[#allocation12 + $0x368] sm:$0xff]
    %v1754 = vld [vmem:[#allocation12 + $0x370] sm:$0xff]
    %v1755 = vld [vmem:[#allocation12 + $0x378] sm:$0xff]
    %v1756 = vld [vmem:[#allocation12 + $0x380] sm:$0xff]
    %v1757 = vld [vmem:[#allocation12 + $0x388] sm:$0xff]
    %v1758 = vld [vmem:[#allocation12 + $0x390] sm:$0xff]
    %v1759 = vld [vmem:[#allocation12 + $0x398] sm:$0xff]
    %v1760 = vld [vmem:[#allocation12 + $0x3a0] sm:$0xff]
    %v1761 = vld [vmem:[#allocation12 + $0x3a8] sm:$0xff]
    %v1762 = vld [vmem:[#allocation12 + $0x3b0] sm:$0xff]
    %v1763 = vld [vmem:[#allocation12 + $0x3b8] sm:$0xff]
    %v1764 = vld [vmem:[#allocation12 + $0x3c0] sm:$0xff]
    %v1765 = vld [vmem:[#allocation12 + $0x3c8] sm:$0xff]
    %v1766 = vld [vmem:[#allocation12 + $0x3d0] sm:$0xff]
    %v1767 = vld [vmem:[#allocation12 + $0x3d8] sm:$0xff]
    %v1768 = vld [vmem:[#allocation12 + $0x3e0] sm:$0xff]
    %v1769 = vld [vmem:[#allocation12 + $0x3e8] sm:$0xff]
    %v1770 = vld [vmem:[#allocation12 + $0x3f0] sm:$0xff]
    %v1771 = vld [vmem:[#allocation12 + $0x3f8] sm:$0xff]
    %v1772 = vunpack.c.h.b16 %v1620
    %v1773 = vunpack.c.h.b16 %v1621
    %v1774 = vunpack.c.h.b16 %v1622
    %v1775 = vunpack.c.h.b16 %v1623
    %v1776 = vunpack.c.h.b16 %v1624
    %v1777 = vunpack.c.h.b16 %v1625
    %v1778 = vunpack.c.h.b16 %v1626
    %v1779 = vunpack.c.h.b16 %v1627
    %v1780 = vpack.c.b16 %v1637, %v1636
    %v1781 = vpack.c.b16 %v1639, %v1638
    %v1782 = vpack.c.b16 %v1773, %v1772
    %v1783 = vpack.c.b16 %v1775, %v1774
    %v1784 = vpack.c.b16 %v1641, %v1640
    %v1785 = vpack.c.b16 %v1643, %v1642
    %v1786 = vpack.c.b16 %v1777, %v1776
    %v1787 = vpack.c.b16 %v1779, %v1778
    %vm1788 = vsmask.f32 3328
    %vm1789 = vsmask.f32 7440
    %vm1790 = vmor %vm1788, %vm1789
    %v1792 = vshrl.u32 %v1780, 16
    %v1794 = vrot.slane %v1792, 4
    %v1795 = vshll.u32 %v1780, 16
    %v1797 = vrot.slane %v1795, 5
    %v1798 = vor.u32 %v1794, %v1797
    %v1799 = vrot.slane %v1798, 4
    %v1801 = vshll.u32 %v1782, 16
    %v1803 = vrot.slane %v1801, 5
    %v1804 = vsel %vm1790, %v1799, %v1803
    %v1806 = vshrl.u32 %v1781, 16
    %v1808 = vrot.slane %v1806, 4
    %v1809 = vshll.u32 %v1781, 16
    %v1811 = vrot.slane %v1809, 5
    %v1812 = vor.u32 %v1808, %v1811
    %v1813 = vrot.slane %v1812, 4
    %v1815 = vshll.u32 %v1783, 16
    %v1817 = vrot.slane %v1815, 5
    %v1818 = vsel %vm1790, %v1813, %v1817
    %v1820 = vshrl.u32 %v1784, 16
    %v1822 = vrot.slane %v1820, 4
    %v1823 = vshll.u32 %v1784, 16
    %v1825 = vrot.slane %v1823, 5
    %v1826 = vor.u32 %v1822, %v1825
    %v1827 = vrot.slane %v1826, 4
    %v1829 = vshll.u32 %v1786, 16
    %v1831 = vrot.slane %v1829, 5
    %v1832 = vsel %vm1790, %v1827, %v1831
    %v1834 = vshrl.u32 %v1785, 16
    %v1836 = vrot.slane %v1834, 4
    %v1837 = vshll.u32 %v1785, 16
    %v1839 = vrot.slane %v1837, 5
    %v1840 = vor.u32 %v1836, %v1839
    %v1841 = vrot.slane %v1840, 4
    %v1843 = vshll.u32 %v1787, 16
    %v1845 = vrot.slane %v1843, 5
    %v1846 = vsel %vm1790, %v1841, %v1845
    %s1847 = scalar_lea.vmem [#allocation12], 1024
    %v1848 = vld [vmem:[%s1847] sm:$0xff]
    %v1849 = vld [vmem:[%s1847 + $0x8] sm:$0xff]
    %v1850 = vld [vmem:[%s1847 + $0x10] sm:$0xff]
    %v1851 = vld [vmem:[%s1847 + $0x18] sm:$0xff]
    %v1852 = vld [vmem:[%s1847 + $0x20] sm:$0xff]
    %v1853 = vld [vmem:[%s1847 + $0x28] sm:$0xff]
    %v1854 = vld [vmem:[%s1847 + $0x30] sm:$0xff]
    %v1855 = vld [vmem:[%s1847 + $0x38] sm:$0xff]
    %v1856 = vld [vmem:[%s1847 + $0x40] sm:$0xff]
    %v1857 = vld [vmem:[%s1847 + $0x48] sm:$0xff]
    %v1858 = vld [vmem:[%s1847 + $0x50] sm:$0xff]
    %v1859 = vld [vmem:[%s1847 + $0x58] sm:$0xff]
    %v1860 = vld [vmem:[%s1847 + $0x60] sm:$0xff]
    %v1861 = vld [vmem:[%s1847 + $0x68] sm:$0xff]
    %v1862 = vld [vmem:[%s1847 + $0x70] sm:$0xff]
    %v1863 = vld [vmem:[%s1847 + $0x78] sm:$0xff]
    %v1864 = vld [vmem:[%s1847 + $0x80] sm:$0xff]
    %v1865 = vld [vmem:[%s1847 + $0x88] sm:$0xff]
    %v1866 = vld [vmem:[%s1847 + $0x90] sm:$0xff]
    %v1867 = vld [vmem:[%s1847 + $0x98] sm:$0xff]
    %v1868 = vld [vmem:[%s1847 + $0xa0] sm:$0xff]
    %v1869 = vld [vmem:[%s1847 + $0xa8] sm:$0xff]
    %v1870 = vld [vmem:[%s1847 + $0xb0] sm:$0xff]
    %v1871 = vld [vmem:[%s1847 + $0xb8] sm:$0xff]
    %v1872 = vld [vmem:[%s1847 + $0xc0] sm:$0xff]
    %v1873 = vld [vmem:[%s1847 + $0xc8] sm:$0xff]
    %v1874 = vld [vmem:[%s1847 + $0xd0] sm:$0xff]
    %v1875 = vld [vmem:[%s1847 + $0xd8] sm:$0xff]
    %v1876 = vld [vmem:[%s1847 + $0xe0] sm:$0xff]
    %v1877 = vld [vmem:[%s1847 + $0xe8] sm:$0xff]
    %v1878 = vld [vmem:[%s1847 + $0xf0] sm:$0xff]
    %v1879 = vld [vmem:[%s1847 + $0xf8] sm:$0xff]
    %v1880 = vld [vmem:[%s1847 + $0x100] sm:$0xff]
    %v1881 = vld [vmem:[%s1847 + $0x108] sm:$0xff]
    %v1882 = vld [vmem:[%s1847 + $0x110] sm:$0xff]
    %v1883 = vld [vmem:[%s1847 + $0x118] sm:$0xff]
    %v1884 = vld [vmem:[%s1847 + $0x120] sm:$0xff]
    %v1885 = vld [vmem:[%s1847 + $0x128] sm:$0xff]
    %v1886 = vld [vmem:[%s1847 + $0x130] sm:$0xff]
    %v1887 = vld [vmem:[%s1847 + $0x138] sm:$0xff]
    %v1888 = vld [vmem:[%s1847 + $0x140] sm:$0xff]
    %v1889 = vld [vmem:[%s1847 + $0x148] sm:$0xff]
    %v1890 = vld [vmem:[%s1847 + $0x150] sm:$0xff]
    %v1891 = vld [vmem:[%s1847 + $0x158] sm:$0xff]
    %v1892 = vld [vmem:[%s1847 + $0x160] sm:$0xff]
    %v1893 = vld [vmem:[%s1847 + $0x168] sm:$0xff]
    %v1894 = vld [vmem:[%s1847 + $0x170] sm:$0xff]
    %v1895 = vld [vmem:[%s1847 + $0x178] sm:$0xff]
    %v1896 = vld [vmem:[%s1847 + $0x180] sm:$0xff]
    %v1897 = vld [vmem:[%s1847 + $0x188] sm:$0xff]
    %v1898 = vld [vmem:[%s1847 + $0x190] sm:$0xff]
    %v1899 = vld [vmem:[%s1847 + $0x198] sm:$0xff]
    %v1900 = vld [vmem:[%s1847 + $0x1a0] sm:$0xff]
    %v1901 = vld [vmem:[%s1847 + $0x1a8] sm:$0xff]
    %v1902 = vld [vmem:[%s1847 + $0x1b0] sm:$0xff]
    %v1903 = vld [vmem:[%s1847 + $0x1b8] sm:$0xff]
    %v1904 = vld [vmem:[%s1847 + $0x1c0] sm:$0xff]
    %v1905 = vld [vmem:[%s1847 + $0x1c8] sm:$0xff]
    %v1906 = vld [vmem:[%s1847 + $0x1d0] sm:$0xff]
    %v1907 = vld [vmem:[%s1847 + $0x1d8] sm:$0xff]
    %v1908 = vld [vmem:[%s1847 + $0x1e0] sm:$0xff]
    %v1909 = vld [vmem:[%s1847 + $0x1e8] sm:$0xff]
    %v1910 = vld [vmem:[%s1847 + $0x1f0] sm:$0xff]
    %v1911 = vld [vmem:[%s1847 + $0x1f8] sm:$0xff]
    %v1912 = vld [vmem:[%s1847 + $0x200] sm:$0xff]
    %v1913 = vld [vmem:[%s1847 + $0x208] sm:$0xff]
    %v1914 = vld [vmem:[%s1847 + $0x210] sm:$0xff]
    %v1915 = vld [vmem:[%s1847 + $0x218] sm:$0xff]
    %v1916 = vld [vmem:[%s1847 + $0x220] sm:$0xff]
    %v1917 = vld [vmem:[%s1847 + $0x228] sm:$0xff]
    %v1918 = vld [vmem:[%s1847 + $0x230] sm:$0xff]
    %v1919 = vld [vmem:[%s1847 + $0x238] sm:$0xff]
    %v1920 = vld [vmem:[%s1847 + $0x240] sm:$0xff]
    %v1921 = vld [vmem:[%s1847 + $0x248] sm:$0xff]
    %v1922 = vld [vmem:[%s1847 + $0x250] sm:$0xff]
    %v1923 = vld [vmem:[%s1847 + $0x258] sm:$0xff]
    %v1924 = vld [vmem:[%s1847 + $0x260] sm:$0xff]
    %v1925 = vld [vmem:[%s1847 + $0x268] sm:$0xff]
    %v1926 = vld [vmem:[%s1847 + $0x270] sm:$0xff]
    %v1927 = vld [vmem:[%s1847 + $0x278] sm:$0xff]
    %v1928 = vld [vmem:[%s1847 + $0x280] sm:$0xff]
    %v1929 = vld [vmem:[%s1847 + $0x288] sm:$0xff]
    %v1930 = vld [vmem:[%s1847 + $0x290] sm:$0xff]
    %v1931 = vld [vmem:[%s1847 + $0x298] sm:$0xff]
    %v1932 = vld [vmem:[%s1847 + $0x2a0] sm:$0xff]
    %v1933 = vld [vmem:[%s1847 + $0x2a8] sm:$0xff]
    %v1934 = vld [vmem:[%s1847 + $0x2b0] sm:$0xff]
    %v1935 = vld [vmem:[%s1847 + $0x2b8] sm:$0xff]
    %v1936 = vld [vmem:[%s1847 + $0x2c0] sm:$0xff]
    %v1937 = vld [vmem:[%s1847 + $0x2c8] sm:$0xff]
    %v1938 = vld [vmem:[%s1847 + $0x2d0] sm:$0xff]
    %v1939 = vld [vmem:[%s1847 + $0x2d8] sm:$0xff]
    %v1940 = vld [vmem:[%s1847 + $0x2e0] sm:$0xff]
    %v1941 = vld [vmem:[%s1847 + $0x2e8] sm:$0xff]
    %v1942 = vld [vmem:[%s1847 + $0x2f0] sm:$0xff]
    %v1943 = vld [vmem:[%s1847 + $0x2f8] sm:$0xff]
    %v1944 = vld [vmem:[%s1847 + $0x300] sm:$0xff]
    %v1945 = vld [vmem:[%s1847 + $0x308] sm:$0xff]
    %v1946 = vld [vmem:[%s1847 + $0x310] sm:$0xff]
    %v1947 = vld [vmem:[%s1847 + $0x318] sm:$0xff]
    %v1948 = vld [vmem:[%s1847 + $0x320] sm:$0xff]
    %v1949 = vld [vmem:[%s1847 + $0x328] sm:$0xff]
    %v1950 = vld [vmem:[%s1847 + $0x330] sm:$0xff]
    %v1951 = vld [vmem:[%s1847 + $0x338] sm:$0xff]
    %v1952 = vld [vmem:[%s1847 + $0x340] sm:$0xff]
    %v1953 = vld [vmem:[%s1847 + $0x348] sm:$0xff]
    %v1954 = vld [vmem:[%s1847 + $0x350] sm:$0xff]
    %v1955 = vld [vmem:[%s1847 + $0x358] sm:$0xff]
    %v1956 = vld [vmem:[%s1847 + $0x360] sm:$0xff]
    %v1957 = vld [vmem:[%s1847 + $0x368] sm:$0xff]
    %v1958 = vld [vmem:[%s1847 + $0x370] sm:$0xff]
    %v1959 = vld [vmem:[%s1847 + $0x378] sm:$0xff]
    %v1960 = vld [vmem:[%s1847 + $0x380] sm:$0xff]
    %v1961 = vld [vmem:[%s1847 + $0x388] sm:$0xff]
    %v1962 = vld [vmem:[%s1847 + $0x390] sm:$0xff]
    %v1963 = vld [vmem:[%s1847 + $0x398] sm:$0xff]
    %v1964 = vld [vmem:[%s1847 + $0x3a0] sm:$0xff]
    %v1965 = vld [vmem:[%s1847 + $0x3a8] sm:$0xff]
    %v1966 = vld [vmem:[%s1847 + $0x3b0] sm:$0xff]
    %v1967 = vld [vmem:[%s1847 + $0x3b8] sm:$0xff]
    %v1968 = vld [vmem:[%s1847 + $0x3c0] sm:$0xff]
    %v1969 = vld [vmem:[%s1847 + $0x3c8] sm:$0xff]
    %v1970 = vld [vmem:[%s1847 + $0x3d0] sm:$0xff]
    %v1971 = vld [vmem:[%s1847 + $0x3d8] sm:$0xff]
    %v1972 = vld [vmem:[%s1847 + $0x3e0] sm:$0xff]
    %v1973 = vld [vmem:[%s1847 + $0x3e8] sm:$0xff]
    %v1974 = vld [vmem:[%s1847 + $0x3f0] sm:$0xff]
    %v1975 = vld [vmem:[%s1847 + $0x3f8] sm:$0xff]
    %v1976 = vunpack.c.l.b16 %v1804
    %v1977 = vunpack.c.h.b16 %v1804
    %v1978 = vunpack.c.l.b16 %v1818
    %v1979 = vunpack.c.h.b16 %v1818
    %v1980 = vunpack.c.l.b16 %v1832
    %v1981 = vunpack.c.h.b16 %v1832
    %v1982 = vunpack.c.l.b16 %v1846
    %v1983 = vunpack.c.h.b16 %v1846
    %v1984 = vpack.c.b16 %v1980, %v1976
    %v1985 = vpack.c.b16 %v1981, %v1977
    %v1986 = vpack.c.b16 %v1982, %v1978
    %v1987 = vpack.c.b16 %v1983, %v1979
    %v2120 = vunpack.c.l.b16 %v1848
    %v2121 = vunpack.c.h.b16 %v1848
    %v2122 = vunpack.c.l.b16 %v1849
    %v2123 = vunpack.c.h.b16 %v1849
    %v2124 = vunpack.c.l.b16 %v1850
    %v2125 = vunpack.c.h.b16 %v1850
    %v2126 = vunpack.c.l.b16 %v1851
    %v2127 = vunpack.c.h.b16 %v1851
    %v2128 = vunpack.c.l.b16 %v1852
    %v2129 = vunpack.c.h.b16 %v1852
    %v2130 = vunpack.c.l.b16 %v1853
    %v2131 = vunpack.c.h.b16 %v1853
    %v2132 = vunpack.c.l.b16 %v1854
    %v2133 = vunpack.c.h.b16 %v1854
    %v2134 = vunpack.c.l.b16 %v1855
    %v2135 = vunpack.c.h.b16 %v1855
    %v2136 = vunpack.c.l.b16 %v1856
    %v2137 = vunpack.c.h.b16 %v1856
    %v2138 = vunpack.c.l.b16 %v1857
    %v2139 = vunpack.c.h.b16 %v1857
    %v2140 = vunpack.c.l.b16 %v1858
    %v2141 = vunpack.c.h.b16 %v1858
    %v2142 = vunpack.c.l.b16 %v1859
    %v2143 = vunpack.c.h.b16 %v1859
    %v2144 = vunpack.c.l.b16 %v1860
    %v2145 = vunpack.c.h.b16 %v1860
    %v2146 = vunpack.c.l.b16 %v1861
    %v2147 = vunpack.c.h.b16 %v1861
    %v2148 = vunpack.c.l.b16 %v1862
    %v2149 = vunpack.c.h.b16 %v1862
    %v2150 = vunpack.c.l.b16 %v1863
    %v2151 = vunpack.c.h.b16 %v1863
    %v2152 = vunpack.c.l.b16 %v1864
    %v2153 = vunpack.c.h.b16 %v1864
    %v2154 = vunpack.c.l.b16 %v1865
    %v2155 = vunpack.c.h.b16 %v1865
    %v2156 = vunpack.c.l.b16 %v1866
    %v2157 = vunpack.c.h.b16 %v1866
    %v2158 = vunpack.c.l.b16 %v1867
    %v2159 = vunpack.c.h.b16 %v1867
    %v2160 = vunpack.c.l.b16 %v1868
    %v2161 = vunpack.c.h.b16 %v1868
    %v2162 = vunpack.c.l.b16 %v1869
    %v2163 = vunpack.c.h.b16 %v1869
    %v2164 = vunpack.c.l.b16 %v1870
    %v2165 = vunpack.c.h.b16 %v1870
    %v2166 = vunpack.c.l.b16 %v1871
    %v2167 = vunpack.c.h.b16 %v1871
    %v2168 = vunpack.c.l.b16 %v1872
    %v2169 = vunpack.c.h.b16 %v1872
    %v2170 = vunpack.c.l.b16 %v1873
    %v2171 = vunpack.c.h.b16 %v1873
    %v2172 = vunpack.c.l.b16 %v1874
    %v2173 = vunpack.c.h.b16 %v1874
    %v2174 = vunpack.c.l.b16 %v1875
    %v2175 = vunpack.c.h.b16 %v1875
    %v2176 = vunpack.c.l.b16 %v1876
    %v2177 = vunpack.c.h.b16 %v1876
    %v2178 = vunpack.c.l.b16 %v1877
    %v2179 = vunpack.c.h.b16 %v1877
    %v2180 = vunpack.c.l.b16 %v1878
    %v2181 = vunpack.c.h.b16 %v1878
    %v2182 = vunpack.c.l.b16 %v1879
    %v2183 = vunpack.c.h.b16 %v1879
    %v2184 = vunpack.c.l.b16 %v1880
    %v2185 = vunpack.c.h.b16 %v1880
    %v2186 = vunpack.c.l.b16 %v1881
    %v2187 = vunpack.c.h.b16 %v1881
    %v2188 = vunpack.c.l.b16 %v1882
    %v2189 = vunpack.c.h.b16 %v1882
    %v2190 = vunpack.c.l.b16 %v1883
    %v2191 = vunpack.c.h.b16 %v1883
    %v2192 = vunpack.c.l.b16 %v1884
    %v2193 = vunpack.c.h.b16 %v1884
    %v2194 = vunpack.c.l.b16 %v1885
    %v2195 = vunpack.c.h.b16 %v1885
    %v2196 = vunpack.c.l.b16 %v1886
    %v2197 = vunpack.c.h.b16 %v1886
    %v2198 = vunpack.c.l.b16 %v1887
    %v2199 = vunpack.c.h.b16 %v1887
    %v2200 = vunpack.c.l.b16 %v1888
    %v2201 = vunpack.c.h.b16 %v1888
    %v2202 = vunpack.c.l.b16 %v1889
    %v2203 = vunpack.c.h.b16 %v1889
    %v2204 = vunpack.c.l.b16 %v1890
    %v2205 = vunpack.c.h.b16 %v1890
    %v2206 = vunpack.c.l.b16 %v1891
    %v2207 = vunpack.c.h.b16 %v1891
    %v2208 = vunpack.c.l.b16 %v1892
    %v2209 = vunpack.c.h.b16 %v1892
    %v2210 = vunpack.c.l.b16 %v1893
    %v2211 = vunpack.c.h.b16 %v1893
    %v2212 = vunpack.c.l.b16 %v1894
    %v2213 = vunpack.c.h.b16 %v1894
    %v2214 = vunpack.c.l.b16 %v1895
    %v2215 = vunpack.c.h.b16 %v1895
    %v2216 = vunpack.c.l.b16 %v1896
    %v2217 = vunpack.c.h.b16 %v1896
    %v2218 = vunpack.c.l.b16 %v1897
    %v2219 = vunpack.c.h.b16 %v1897
    %v2220 = vunpack.c.l.b16 %v1898
    %v2221 = vunpack.c.h.b16 %v1898
    %v2222 = vunpack.c.l.b16 %v1899
    %v2223 = vunpack.c.h.b16 %v1899
    %v2224 = vunpack.c.l.b16 %v1900
    %v2225 = vunpack.c.h.b16 %v1900
    %v2226 = vunpack.c.l.b16 %v1901
    %v2227 = vunpack.c.h.b16 %v1901
    %v2228 = vunpack.c.l.b16 %v1902
    %v2229 = vunpack.c.h.b16 %v1902
    %v2230 = vunpack.c.l.b16 %v1903
    %v2231 = vunpack.c.h.b16 %v1903
    %v2232 = vunpack.c.l.b16 %v1904
    %v2233 = vunpack.c.h.b16 %v1904
    %v2234 = vunpack.c.l.b16 %v1905
    %v2235 = vunpack.c.h.b16 %v1905
    %v2236 = vunpack.c.l.b16 %v1906
    %v2237 = vunpack.c.h.b16 %v1906
    %v2238 = vunpack.c.l.b16 %v1907
    %v2239 = vunpack.c.h.b16 %v1907
    %v2240 = vunpack.c.l.b16 %v1908
    %v2241 = vunpack.c.h.b16 %v1908
    %v2242 = vunpack.c.l.b16 %v1909
    %v2243 = vunpack.c.h.b16 %v1909
    %v2244 = vunpack.c.l.b16 %v1910
    %v2245 = vunpack.c.h.b16 %v1910
    %v2246 = vunpack.c.l.b16 %v1911
    %v2247 = vunpack.c.h.b16 %v1911
    %v2248 = vunpack.c.l.b16 %v1912
    %v2249 = vunpack.c.h.b16 %v1912
    %v2250 = vunpack.c.l.b16 %v1913
    %v2251 = vunpack.c.h.b16 %v1913
    %v2252 = vunpack.c.l.b16 %v1914
    %v2253 = vunpack.c.h.b16 %v1914
    %v2254 = vunpack.c.l.b16 %v1915
    %v2255 = vunpack.c.h.b16 %v1915
    %v2256 = vunpack.c.l.b16 %v1916
    %v2257 = vunpack.c.h.b16 %v1916
    %v2258 = vunpack.c.l.b16 %v1917
    %v2259 = vunpack.c.h.b16 %v1917
    %v2260 = vunpack.c.l.b16 %v1918
    %v2261 = vunpack.c.h.b16 %v1918
    %v2262 = vunpack.c.l.b16 %v1919
    %v2263 = vunpack.c.h.b16 %v1919
    %v2264 = vunpack.c.l.b16 %v1920
    %v2265 = vunpack.c.h.b16 %v1920
    %v2266 = vunpack.c.l.b16 %v1921
    %v2267 = vunpack.c.h.b16 %v1921
    %v2268 = vunpack.c.l.b16 %v1922
    %v2269 = vunpack.c.h.b16 %v1922
    %v2270 = vunpack.c.l.b16 %v1923
    %v2271 = vunpack.c.h.b16 %v1923
    %v2272 = vunpack.c.l.b16 %v1924
    %v2273 = vunpack.c.h.b16 %v1924
    %v2274 = vunpack.c.l.b16 %v1925
    %v2275 = vunpack.c.h.b16 %v1925
    %v2276 = vunpack.c.l.b16 %v1926
    %v2277 = vunpack.c.h.b16 %v1926
    %v2278 = vunpack.c.l.b16 %v1927
    %v2279 = vunpack.c.h.b16 %v1927
    %v2280 = vunpack.c.l.b16 %v1928
    %v2281 = vunpack.c.h.b16 %v1928
    %v2282 = vunpack.c.l.b16 %v1929
    %v2283 = vunpack.c.h.b16 %v1929
    %v2284 = vunpack.c.l.b16 %v1930
    %v2285 = vunpack.c.h.b16 %v1930
    %v2286 = vunpack.c.l.b16 %v1931
    %v2287 = vunpack.c.h.b16 %v1931
    %v2288 = vunpack.c.l.b16 %v1932
    %v2289 = vunpack.c.h.b16 %v1932
    %v2290 = vunpack.c.l.b16 %v1933
    %v2291 = vunpack.c.h.b16 %v1933
    %v2292 = vunpack.c.l.b16 %v1934
    %v2293 = vunpack.c.h.b16 %v1934
    %v2294 = vunpack.c.l.b16 %v1935
    %v2295 = vunpack.c.h.b16 %v1935
    %v2296 = vunpack.c.l.b16 %v1936
    %v2297 = vunpack.c.h.b16 %v1936
    %v2298 = vunpack.c.l.b16 %v1937
    %v2299 = vunpack.c.h.b16 %v1937
    %v2300 = vunpack.c.l.b16 %v1938
    %v2301 = vunpack.c.h.b16 %v1938
    %v2302 = vunpack.c.l.b16 %v1939
    %v2303 = vunpack.c.h.b16 %v1939
    %v2304 = vunpack.c.l.b16 %v1940
    %v2305 = vunpack.c.h.b16 %v1940
    %v2306 = vunpack.c.l.b16 %v1941
    %v2307 = vunpack.c.h.b16 %v1941
    %v2308 = vunpack.c.l.b16 %v1942
    %v2309 = vunpack.c.h.b16 %v1942
    %v2310 = vunpack.c.l.b16 %v1943
    %v2311 = vunpack.c.h.b16 %v1943
    %v2312 = vunpack.c.l.b16 %v1944
    %v2313 = vunpack.c.h.b16 %v1944
    %v2314 = vunpack.c.l.b16 %v1945
    %v2315 = vunpack.c.h.b16 %v1945
    %v2316 = vunpack.c.l.b16 %v1946
    %v2317 = vunpack.c.h.b16 %v1946
    %v2318 = vunpack.c.l.b16 %v1947
    %v2319 = vunpack.c.h.b16 %v1947
    %v2320 = vunpack.c.l.b16 %v1948
    %v2321 = vunpack.c.h.b16 %v1948
    %v2322 = vunpack.c.l.b16 %v1949
    %v2323 = vunpack.c.h.b16 %v1949
    %v2324 = vunpack.c.l.b16 %v1950
    %v2325 = vunpack.c.h.b16 %v1950
    %v2326 = vunpack.c.l.b16 %v1951
    %v2327 = vunpack.c.h.b16 %v1951
    %v2328 = vunpack.c.l.b16 %v1952
    %v2329 = vunpack.c.h.b16 %v1952
    %v2330 = vunpack.c.l.b16 %v1953
    %v2331 = vunpack.c.h.b16 %v1953
    %v2332 = vunpack.c.l.b16 %v1954
    %v2333 = vunpack.c.h.b16 %v1954
    %v2334 = vunpack.c.l.b16 %v1955
    %v2335 = vunpack.c.h.b16 %v1955
    %v2336 = vunpack.c.l.b16 %v1956
    %v2337 = vunpack.c.h.b16 %v1956
    %v2338 = vunpack.c.l.b16 %v1957
    %v2339 = vunpack.c.h.b16 %v1957
    %v2340 = vunpack.c.l.b16 %v1958
    %v2341 = vunpack.c.h.b16 %v1958
    %v2342 = vunpack.c.l.b16 %v1959
    %v2343 = vunpack.c.h.b16 %v1959
    %v2344 = vunpack.c.l.b16 %v1960
    %v2345 = vunpack.c.h.b16 %v1960
    %v2346 = vunpack.c.l.b16 %v1961
    %v2347 = vunpack.c.h.b16 %v1961
    %v2348 = vunpack.c.l.b16 %v1962
    %v2349 = vunpack.c.h.b16 %v1962
    %v2350 = vunpack.c.l.b16 %v1963
    %v2351 = vunpack.c.h.b16 %v1963
    %v2352 = vunpack.c.l.b16 %v1964
    %v2353 = vunpack.c.h.b16 %v1964
    %v2354 = vunpack.c.l.b16 %v1965
    %v2355 = vunpack.c.h.b16 %v1965
    %v2356 = vunpack.c.l.b16 %v1966
    %v2357 = vunpack.c.h.b16 %v1966
    %v2358 = vunpack.c.l.b16 %v1967
    %v2359 = vunpack.c.h.b16 %v1967
    %v2360 = vunpack.c.l.b16 %v1968
    %v2361 = vunpack.c.h.b16 %v1968
    %v2362 = vunpack.c.l.b16 %v1969
    %v2363 = vunpack.c.h.b16 %v1969
    %v2364 = vunpack.c.l.b16 %v1970
    %v2365 = vunpack.c.h.b16 %v1970
    %v2366 = vunpack.c.l.b16 %v1971
    %v2367 = vunpack.c.h.b16 %v1971
    %v2368 = vunpack.c.l.b16 %v1972
    %v2369 = vunpack.c.h.b16 %v1972
    %v2370 = vunpack.c.l.b16 %v1973
    %v2371 = vunpack.c.h.b16 %v1973
    %v2372 = vunpack.c.l.b16 %v1974
    %v2373 = vunpack.c.h.b16 %v1974
    %v2374 = vunpack.c.l.b16 %v1975
    %v2375 = vunpack.c.h.b16 %v1975
    %v2376 = vpack.c.b16 %v2124, %v2120
    %v2377 = vpack.c.b16 %v2125, %v2121
    %v2378 = vpack.c.b16 %v2126, %v2122
    %v2379 = vpack.c.b16 %v2127, %v2123
    %v2380 = vpack.c.b16 %v2132, %v2128
    %v2381 = vpack.c.b16 %v2133, %v2129
    %v2382 = vpack.c.b16 %v2134, %v2130
    %v2383 = vpack.c.b16 %v2135, %v2131
    %v2384 = vpack.c.b16 %v2140, %v2136
    %v2385 = vpack.c.b16 %v2141, %v2137
    %v2386 = vpack.c.b16 %v2142, %v2138
    %v2387 = vpack.c.b16 %v2143, %v2139
    %v2388 = vpack.c.b16 %v2148, %v2144
    %v2389 = vpack.c.b16 %v2149, %v2145
    %v2390 = vpack.c.b16 %v2150, %v2146
    %v2391 = vpack.c.b16 %v2151, %v2147
    %v2392 = vpack.c.b16 %v2156, %v2152
    %v2393 = vpack.c.b16 %v2157, %v2153
    %v2394 = vpack.c.b16 %v2158, %v2154
    %v2395 = vpack.c.b16 %v2159, %v2155
    %v2396 = vpack.c.b16 %v2164, %v2160
    %v2397 = vpack.c.b16 %v2165, %v2161
    %v2398 = vpack.c.b16 %v2166, %v2162
    %v2399 = vpack.c.b16 %v2167, %v2163
    %v2400 = vpack.c.b16 %v2172, %v2168
    %v2401 = vpack.c.b16 %v2173, %v2169
    %v2402 = vpack.c.b16 %v2174, %v2170
    %v2403 = vpack.c.b16 %v2175, %v2171
    %v2404 = vpack.c.b16 %v2180, %v2176
    %v2405 = vpack.c.b16 %v2181, %v2177
    %v2406 = vpack.c.b16 %v2182, %v2178
    %v2407 = vpack.c.b16 %v2183, %v2179
    %v2408 = vpack.c.b16 %v2188, %v2184
    %v2409 = vpack.c.b16 %v2189, %v2185
    %v2410 = vpack.c.b16 %v2190, %v2186
    %v2411 = vpack.c.b16 %v2191, %v2187
    %v2412 = vpack.c.b16 %v2196, %v2192
    %v2413 = vpack.c.b16 %v2197, %v2193
    %v2414 = vpack.c.b16 %v2198, %v2194
    %v2415 = vpack.c.b16 %v2199, %v2195
    %v2416 = vpack.c.b16 %v2204, %v2200
    %v2417 = vpack.c.b16 %v2205, %v2201
    %v2418 = vpack.c.b16 %v2206, %v2202
    %v2419 = vpack.c.b16 %v2207, %v2203
    %v2420 = vpack.c.b16 %v2212, %v2208
    %v2421 = vpack.c.b16 %v2213, %v2209
    %v2422 = vpack.c.b16 %v2214, %v2210
    %v2423 = vpack.c.b16 %v2215, %v2211
    %v2424 = vpack.c.b16 %v2220, %v2216
    %v2425 = vpack.c.b16 %v2221, %v2217
    %v2426 = vpack.c.b16 %v2222, %v2218
    %v2427 = vpack.c.b16 %v2223, %v2219
    %v2428 = vpack.c.b16 %v2228, %v2224
    %v2429 = vpack.c.b16 %v2229, %v2225
    %v2430 = vpack.c.b16 %v2230, %v2226
    %v2431 = vpack.c.b16 %v2231, %v2227
    %v2432 = vpack.c.b16 %v2236, %v2232
    %v2433 = vpack.c.b16 %v2237, %v2233
    %v2434 = vpack.c.b16 %v2238, %v2234
    %v2435 = vpack.c.b16 %v2239, %v2235
    %v2436 = vpack.c.b16 %v2244, %v2240
    %v2437 = vpack.c.b16 %v2245, %v2241
    %v2438 = vpack.c.b16 %v2246, %v2242
    %v2439 = vpack.c.b16 %v2247, %v2243
    %v2440 = vpack.c.b16 %v2252, %v2248
    %v2441 = vpack.c.b16 %v2253, %v2249
    %v2442 = vpack.c.b16 %v2254, %v2250
    %v2443 = vpack.c.b16 %v2255, %v2251
    %v2444 = vpack.c.b16 %v2260, %v2256
    %v2445 = vpack.c.b16 %v2261, %v2257
    %v2446 = vpack.c.b16 %v2262, %v2258
    %v2447 = vpack.c.b16 %v2263, %v2259
    %v2448 = vpack.c.b16 %v2268, %v2264
    %v2449 = vpack.c.b16 %v2269, %v2265
    %v2450 = vpack.c.b16 %v2270, %v2266
    %v2451 = vpack.c.b16 %v2271, %v2267
    %v2452 = vpack.c.b16 %v2276, %v2272
    %v2453 = vpack.c.b16 %v2277, %v2273
    %v2454 = vpack.c.b16 %v2278, %v2274
    %v2455 = vpack.c.b16 %v2279, %v2275
    %v2456 = vpack.c.b16 %v2284, %v2280
    %v2457 = vpack.c.b16 %v2285, %v2281
    %v2458 = vpack.c.b16 %v2286, %v2282
    %v2459 = vpack.c.b16 %v2287, %v2283
    %v2460 = vpack.c.b16 %v2292, %v2288
    %v2461 = vpack.c.b16 %v2293, %v2289
    %v2462 = vpack.c.b16 %v2294, %v2290
    %v2463 = vpack.c.b16 %v2295, %v2291
    %v2464 = vpack.c.b16 %v2300, %v2296
    %v2465 = vpack.c.b16 %v2301, %v2297
    %v2466 = vpack.c.b16 %v2302, %v2298
    %v2467 = vpack.c.b16 %v2303, %v2299
    %v2468 = vpack.c.b16 %v2308, %v2304
    %v2469 = vpack.c.b16 %v2309, %v2305
    %v2470 = vpack.c.b16 %v2310, %v2306
    %v2471 = vpack.c.b16 %v2311, %v2307
    %v2472 = vpack.c.b16 %v2316, %v2312
    %v2473 = vpack.c.b16 %v2317, %v2313
    %v2474 = vpack.c.b16 %v2318, %v2314
    %v2475 = vpack.c.b16 %v2319, %v2315
    %v2476 = vpack.c.b16 %v2324, %v2320
    %v2477 = vpack.c.b16 %v2325, %v2321
    %v2478 = vpack.c.b16 %v2326, %v2322
    %v2479 = vpack.c.b16 %v2327, %v2323
    %v2480 = vpack.c.b16 %v2332, %v2328
    %v2481 = vpack.c.b16 %v2333, %v2329
    %v2482 = vpack.c.b16 %v2334, %v2330
    %v2483 = vpack.c.b16 %v2335, %v2331
    %v2484 = vpack.c.b16 %v2340, %v2336
    %v2485 = vpack.c.b16 %v2341, %v2337
    %v2486 = vpack.c.b16 %v2342, %v2338
    %v2487 = vpack.c.b16 %v2343, %v2339
    %v2488 = vpack.c.b16 %v2348, %v2344
    %v2489 = vpack.c.b16 %v2349, %v2345
    %v2490 = vpack.c.b16 %v2350, %v2346
    %v2491 = vpack.c.b16 %v2351, %v2347
    %v2492 = vpack.c.b16 %v2356, %v2352
    %v2493 = vpack.c.b16 %v2357, %v2353
    %v2494 = vpack.c.b16 %v2358, %v2354
    %v2495 = vpack.c.b16 %v2359, %v2355
    %v2496 = vpack.c.b16 %v2364, %v2360
    %v2497 = vpack.c.b16 %v2365, %v2361
    %v2498 = vpack.c.b16 %v2366, %v2362
    %v2499 = vpack.c.b16 %v2367, %v2363
    %v2500 = vpack.c.b16 %v2372, %v2368
    %v2501 = vpack.c.b16 %v2373, %v2369
    %v2502 = vpack.c.b16 %v2374, %v2370
    %v2503 = vpack.c.b16 %v2375, %v2371
    %2632 = vmatprep.subr.bf16.mxu0 %v2377
    %2633 = vmatpush1.bf16.msra.mxu0 %v2376
    %2634 = vmatprep.subr.bf16.mxu0 %v2381
    %2635 = vmatpush1.bf16.msra.mxu0 %v2380
    %2636 = vmatprep.subr.bf16.mxu0 %v2385
    %2637 = vmatpush1.bf16.msra.mxu0 %v2384
    %2638 = vmatprep.subr.bf16.mxu0 %v2389
    %2639 = vmatpush1.bf16.msra.mxu0 %v2388
    %2640 = vmatprep.subr.bf16.mxu0 %v2393
    %2641 = vmatpush1.bf16.msra.mxu0 %v2392
    %2642 = vmatprep.subr.bf16.mxu0 %v2397
    %2643 = vmatpush1.bf16.msra.mxu0 %v2396
    %2644 = vmatprep.subr.bf16.mxu0 %v2401
    %2645 = vmatpush1.bf16.msra.mxu0 %v2400
    %2646 = vmatprep.subr.bf16.mxu0 %v2405
    %2647 = vmatpush1.bf16.msra.mxu0 %v2404
    %2648 = vmatprep.subr.bf16.mxu0 %v2409
    %2649 = vmatpush1.bf16.msra.mxu0 %v2408
    %2650 = vmatprep.subr.bf16.mxu0 %v2413
    %2651 = vmatpush1.bf16.msra.mxu0 %v2412
    %2652 = vmatprep.subr.bf16.mxu0 %v2417
    %2653 = vmatpush1.bf16.msra.mxu0 %v2416
    %2654 = vmatprep.subr.bf16.mxu0 %v2421
    %2655 = vmatpush1.bf16.msra.mxu0 %v2420
    %2656 = vmatprep.subr.bf16.mxu0 %v2425
    %2657 = vmatpush1.bf16.msra.mxu0 %v2424
    %2658 = vmatprep.subr.bf16.mxu0 %v2429
    %2659 = vmatpush1.bf16.msra.mxu0 %v2428
    %2660 = vmatprep.subr.bf16.mxu0 %v2433
    %2661 = vmatpush1.bf16.msra.mxu0 %v2432
    %2662 = vmatprep.subr.bf16.mxu0 %v2437
    %2663 = vmatpush1.bf16.msra.mxu0 %v2436
    %2664 = vmatprep.mubr.bf16.mxu0 %v1985
    %2665 = vmatmul.mubr.bf16.gmra.mrb[0].mxu0 %v1984
    %v2666 = vpop.f32.mrb[0].mxu0
    %v2667 = vadd.f32 0.0, %v2666
    %v2668 = vpop.f32.mrb[0].mxu0
    %v2669 = vadd.f32 0.0, %v2668
    %v2670 = vpop.f32.mrb[0].mxu0
    %v2671 = vadd.f32 0.0, %v2670
    %v2672 = vpop.f32.mrb[0].mxu0
    %v2673 = vadd.f32 0.0, %v2672
    %2674 = vdwg.mxu0
    %2675 = vmatprep.subr.bf16.mxu0 %v2441
    %2676 = vmatpush1.bf16.msra.mxu0 %v2440
    %2677 = vmatprep.subr.bf16.mxu0 %v2445
    %2678 = vmatpush1.bf16.msra.mxu0 %v2444
    %2679 = vmatprep.subr.bf16.mxu0 %v2449
    %2680 = vmatpush1.bf16.msra.mxu0 %v2448
    %2681 = vmatprep.subr.bf16.mxu0 %v2453
    %2682 = vmatpush1.bf16.msra.mxu0 %v2452
    %2683 = vmatprep.subr.bf16.mxu0 %v2457
    %2684 = vmatpush1.bf16.msra.mxu0 %v2456
    %2685 = vmatprep.subr.bf16.mxu0 %v2461
    %2686 = vmatpush1.bf16.msra.mxu0 %v2460
    %2687 = vmatprep.subr.bf16.mxu0 %v2465
    %2688 = vmatpush1.bf16.msra.mxu0 %v2464
    %2689 = vmatprep.subr.bf16.mxu0 %v2469
    %2690 = vmatpush1.bf16.msra.mxu0 %v2468
    %2691 = vmatprep.subr.bf16.mxu0 %v2473
    %2692 = vmatpush1.bf16.msra.mxu0 %v2472
    %2693 = vmatprep.subr.bf16.mxu0 %v2477
    %2694 = vmatpush1.bf16.msra.mxu0 %v2476
    %2695 = vmatprep.subr.bf16.mxu0 %v2481
    %2696 = vmatpush1.bf16.msra.mxu0 %v2480
    %2697 = vmatprep.subr.bf16.mxu0 %v2485
    %2698 = vmatpush1.bf16.msra.mxu0 %v2484
    %2699 = vmatprep.subr.bf16.mxu0 %v2489
    %2700 = vmatpush1.bf16.msra.mxu0 %v2488
    %2701 = vmatprep.subr.bf16.mxu0 %v2493
    %2702 = vmatpush1.bf16.msra.mxu0 %v2492
    %2703 = vmatprep.subr.bf16.mxu0 %v2497
    %2704 = vmatpush1.bf16.msra.mxu0 %v2496
    %2705 = vmatprep.subr.bf16.mxu0 %v2501
    %2706 = vmatpush1.bf16.msra.mxu0 %v2500
    %2707 = vmatprep.mubr.bf16.mxu0 %v1987
    %2708 = vmatmul.mubr.bf16.gmra.mrb[0].mxu0 %v1986
    %v2709 = vpop.f32.mrb[0].mxu0
    %v2710 = vadd.f32 %v2667, %v2709
    %v2711 = vpop.f32.mrb[0].mxu0
    %v2712 = vadd.f32 %v2669, %v2711
    %v2713 = vpop.f32.mrb[0].mxu0
    %v2714 = vadd.f32 %v2671, %v2713
    %v2715 = vpop.f32.mrb[0].mxu0
    %v2716 = vadd.f32 %v2673, %v2715
    %2717 = vdwg.mxu0
    %2718 = vmatprep.subr.bf16.mxu0 %v2379
    %2719 = vmatpush1.bf16.msra.mxu0 %v2378
    %2720 = vmatprep.subr.bf16.mxu0 %v2383
    %2721 = vmatpush1.bf16.msra.mxu0 %v2382
    %2722 = vmatprep.subr.bf16.mxu0 %v2387
    %2723 = vmatpush1.bf16.msra.mxu0 %v2386
    %2724 = vmatprep.subr.bf16.mxu0 %v2391
    %2725 = vmatpush1.bf16.msra.mxu0 %v2390
    %2726 = vmatprep.subr.bf16.mxu0 %v2395
    %2727 = vmatpush1.bf16.msra.mxu0 %v2394
    %2728 = vmatprep.subr.bf16.mxu0 %v2399
    %2729 = vmatpush1.bf16.msra.mxu0 %v2398
    %2730 = vmatprep.subr.bf16.mxu0 %v2403
    %2731 = vmatpush1.bf16.msra.mxu0 %v2402
    %2732 = vmatprep.subr.bf16.mxu0 %v2407
    %2733 = vmatpush1.bf16.msra.mxu0 %v2406
    %2734 = vmatprep.subr.bf16.mxu0 %v2411
    %2735 = vmatpush1.bf16.msra.mxu0 %v2410
    %2736 = vmatprep.subr.bf16.mxu0 %v2415
    %2737 = vmatpush1.bf16.msra.mxu0 %v2414
    %2738 = vmatprep.subr.bf16.mxu0 %v2419
    %2739 = vmatpush1.bf16.msra.mxu0 %v2418
    %2740 = vmatprep.subr.bf16.mxu0 %v2423
    %2741 = vmatpush1.bf16.msra.mxu0 %v2422
    %2742 = vmatprep.subr.bf16.mxu0 %v2427
    %2743 = vmatpush1.bf16.msra.mxu0 %v2426
    %2744 = vmatprep.subr.bf16.mxu0 %v2431
    %2745 = vmatpush1.bf16.msra.mxu0 %v2430
    %2746 = vmatprep.subr.bf16.mxu0 %v2435
    %2747 = vmatpush1.bf16.msra.mxu0 %v2434
    %2748 = vmatprep.subr.bf16.mxu0 %v2439
    %2749 = vmatpush1.bf16.msra.mxu0 %v2438
    %2750 = vmatprep.mubr.bf16.mxu0 %v1985
    %2751 = vmatmul.mubr.bf16.gmra.mrb[0].mxu0 %v1984
    %v2752 = vpop.f32.mrb[0].mxu0
    %v2753 = vadd.f32 0.0, %v2752
    %v2754 = vpop.f32.mrb[0].mxu0
    %v2755 = vadd.f32 0.0, %v2754
    %v2756 = vpop.f32.mrb[0].mxu0
    %v2757 = vadd.f32 0.0, %v2756
    %v2758 = vpop.f32.mrb[0].mxu0
    %v2759 = vadd.f32 0.0, %v2758
    %2760 = vdwg.mxu0
    %2761 = vmatprep.subr.bf16.mxu0 %v2443
    %2762 = vmatpush1.bf16.msra.mxu0 %v2442
    %2763 = vmatprep.subr.bf16.mxu0 %v2447
    %2764 = vmatpush1.bf16.msra.mxu0 %v2446
    %2765 = vmatprep.subr.bf16.mxu0 %v2451
    %2766 = vmatpush1.bf16.msra.mxu0 %v2450
    %2767 = vmatprep.subr.bf16.mxu0 %v2455
    %2768 = vmatpush1.bf16.msra.mxu0 %v2454
    %2769 = vmatprep.subr.bf16.mxu0 %v2459
    %2770 = vmatpush1.bf16.msra.mxu0 %v2458
    %2771 = vmatprep.subr.bf16.mxu0 %v2463
    %2772 = vmatpush1.bf16.msra.mxu0 %v2462
    %2773 = vmatprep.subr.bf16.mxu0 %v2467
    %2774 = vmatpush1.bf16.msra.mxu0 %v2466
    %2775 = vmatprep.subr.bf16.mxu0 %v2471
    %2776 = vmatpush1.bf16.msra.mxu0 %v2470
    %2777 = vmatprep.subr.bf16.mxu0 %v2475
    %2778 = vmatpush1.bf16.msra.mxu0 %v2474
    %2779 = vmatprep.subr.bf16.mxu0 %v2479
    %2780 = vmatpush1.bf16.msra.mxu0 %v2478
    %2781 = vmatprep.subr.bf16.mxu0 %v2483
    %2782 = vmatpush1.bf16.msra.mxu0 %v2482
    %2783 = vmatprep.subr.bf16.mxu0 %v2487
    %2784 = vmatpush1.bf16.msra.mxu0 %v2486
    %2785 = vmatprep.subr.bf16.mxu0 %v2491
    %2786 = vmatpush1.bf16.msra.mxu0 %v2490
    %2787 = vmatprep.subr.bf16.mxu0 %v2495
    %2788 = vmatpush1.bf16.msra.mxu0 %v2494
    %2789 = vmatprep.subr.bf16.mxu0 %v2499
    %2790 = vmatpush1.bf16.msra.mxu0 %v2498
    %2791 = vmatprep.subr.bf16.mxu0 %v2503
    %2792 = vmatpush1.bf16.msra.mxu0 %v2502
    %2793 = vmatprep.mubr.bf16.mxu0 %v1987
    %2794 = vmatmul.mubr.bf16.gmra.mrb[0].mxu0 %v1986
    %v2795 = vpop.f32.mrb[0].mxu0
    %v2796 = vadd.f32 %v2753, %v2795
    %v2797 = vpop.f32.mrb[0].mxu0
    %v2798 = vadd.f32 %v2755, %v2797
    %v2799 = vpop.f32.mrb[0].mxu0
    %v2800 = vadd.f32 %v2757, %v2799
    %v2801 = vpop.f32.mrb[0].mxu0
    %v2802 = vadd.f32 %v2759, %v2801
    %2803 = vdwg.mxu0
    %v2804 = vpack.c.b16 %v1640, %v1636
    %v2805 = vpack.c.b16 %v1641, %v1637
    %v2806 = vpack.c.b16 %v1642, %v1638
    %v2807 = vpack.c.b16 %v1643, %v1639
    %v2940 = vunpack.c.l.b16 %v1644
    %v2941 = vunpack.c.h.b16 %v1644
    %v2942 = vunpack.c.l.b16 %v1645
    %v2943 = vunpack.c.h.b16 %v1645
    %v2944 = vunpack.c.l.b16 %v1646
    %v2945 = vunpack.c.h.b16 %v1646
    %v2946 = vunpack.c.l.b16 %v1647
    %v2947 = vunpack.c.h.b16 %v1647
    %v2948 = vunpack.c.l.b16 %v1648
    %v2949 = vunpack.c.h.b16 %v1648
    %v2950 = vunpack.c.l.b16 %v1649
    %v2951 = vunpack.c.h.b16 %v1649
    %v2952 = vunpack.c.l.b16 %v1650
    %v2953 = vunpack.c.h.b16 %v1650
    %v2954 = vunpack.c.l.b16 %v1651
    %v2955 = vunpack.c.h.b16 %v1651
    %v2956 = vunpack.c.l.b16 %v1652
    %v2957 = vunpack.c.h.b16 %v1652
    %v2958 = vunpack.c.l.b16 %v1653
    %v2959 = vunpack.c.h.b16 %v1653
    %v2960 = vunpack.c.l.b16 %v1654
    %v2961 = vunpack.c.h.b16 %v1654
    %v2962 = vunpack.c.l.b16 %v1655
    %v2963 = vunpack.c.h.b16 %v1655
    %v2964 = vunpack.c.l.b16 %v1656
    %v2965 = vunpack.c.h.b16 %v1656
    %v2966 = vunpack.c.l.b16 %v1657
    %v2967 = vunpack.c.h.b16 %v1657
    %v2968 = vunpack.c.l.b16 %v1658
    %v2969 = vunpack.c.h.b16 %v1658
    %v2970 = vunpack.c.l.b16 %v1659
    %v2971 = vunpack.c.h.b16 %v1659
    %v2972 = vunpack.c.l.b16 %v1660
    %v2973 = vunpack.c.h.b16 %v1660
    %v2974 = vunpack.c.l.b16 %v1661
    %v2975 = vunpack.c.h.b16 %v1661
    %v2976 = vunpack.c.l.b16 %v1662
    %v2977 = vunpack.c.h.b16 %v1662
    %v2978 = vunpack.c.l.b16 %v1663
    %v2979 = vunpack.c.h.b16 %v1663
    %v2980 = vunpack.c.l.b16 %v1664
    %v2981 = vunpack.c.h.b16 %v1664
    %v2982 = vunpack.c.l.b16 %v1665
    %v2983 = vunpack.c.h.b16 %v1665
    %v2984 = vunpack.c.l.b16 %v1666
    %v2985 = vunpack.c.h.b16 %v1666
    %v2986 = vunpack.c.l.b16 %v1667
    %v2987 = vunpack.c.h.b16 %v1667
    %v2988 = vunpack.c.l.b16 %v1668
    %v2989 = vunpack.c.h.b16 %v1668
    %v2990 = vunpack.c.l.b16 %v1669
    %v2991 = vunpack.c.h.b16 %v1669
    %v2992 = vunpack.c.l.b16 %v1670
    %v2993 = vunpack.c.h.b16 %v1670
    %v2994 = vunpack.c.l.b16 %v1671
    %v2995 = vunpack.c.h.b16 %v1671
    %v2996 = vunpack.c.l.b16 %v1672
    %v2997 = vunpack.c.h.b16 %v1672
    %v2998 = vunpack.c.l.b16 %v1673
    %v2999 = vunpack.c.h.b16 %v1673
    %v3000 = vunpack.c.l.b16 %v1674
    %v3001 = vunpack.c.h.b16 %v1674
    %v3002 = vunpack.c.l.b16 %v1675
    %v3003 = vunpack.c.h.b16 %v1675
    %v3004 = vunpack.c.l.b16 %v1676
    %v3005 = vunpack.c.h.b16 %v1676
    %v3006 = vunpack.c.l.b16 %v1677
    %v3007 = vunpack.c.h.b16 %v1677
    %v3008 = vunpack.c.l.b16 %v1678
    %v3009 = vunpack.c.h.b16 %v1678
    %v3010 = vunpack.c.l.b16 %v1679
    %v3011 = vunpack.c.h.b16 %v1679
    %v3012 = vunpack.c.l.b16 %v1680
    %v3013 = vunpack.c.h.b16 %v1680
    %v3014 = vunpack.c.l.b16 %v1681
    %v3015 = vunpack.c.h.b16 %v1681
    %v3016 = vunpack.c.l.b16 %v1682
    %v3017 = vunpack.c.h.b16 %v1682
    %v3018 = vunpack.c.l.b16 %v1683
    %v3019 = vunpack.c.h.b16 %v1683
    %v3020 = vunpack.c.l.b16 %v1684
    %v3021 = vunpack.c.h.b16 %v1684
    %v3022 = vunpack.c.l.b16 %v1685
    %v3023 = vunpack.c.h.b16 %v1685
    %v3024 = vunpack.c.l.b16 %v1686
    %v3025 = vunpack.c.h.b16 %v1686
    %v3026 = vunpack.c.l.b16 %v1687
    %v3027 = vunpack.c.h.b16 %v1687
    %v3028 = vunpack.c.l.b16 %v1688
    %v3029 = vunpack.c.h.b16 %v1688
    %v3030 = vunpack.c.l.b16 %v1689
    %v3031 = vunpack.c.h.b16 %v1689
    %v3032 = vunpack.c.l.b16 %v1690
    %v3033 = vunpack.c.h.b16 %v1690
    %v3034 = vunpack.c.l.b16 %v1691
    %v3035 = vunpack.c.h.b16 %v1691
    %v3036 = vunpack.c.l.b16 %v1692
    %v3037 = vunpack.c.h.b16 %v1692
    %v3038 = vunpack.c.l.b16 %v1693
    %v3039 = vunpack.c.h.b16 %v1693
    %v3040 = vunpack.c.l.b16 %v1694
    %v3041 = vunpack.c.h.b16 %v1694
    %v3042 = vunpack.c.l.b16 %v1695
    %v3043 = vunpack.c.h.b16 %v1695
    %v3044 = vunpack.c.l.b16 %v1696
    %v3045 = vunpack.c.h.b16 %v1696
    %v3046 = vunpack.c.l.b16 %v1697
    %v3047 = vunpack.c.h.b16 %v1697
    %v3048 = vunpack.c.l.b16 %v1698
    %v3049 = vunpack.c.h.b16 %v1698
    %v3050 = vunpack.c.l.b16 %v1699
    %v3051 = vunpack.c.h.b16 %v1699
    %v3052 = vunpack.c.l.b16 %v1700
    %v3053 = vunpack.c.h.b16 %v1700
    %v3054 = vunpack.c.l.b16 %v1701
    %v3055 = vunpack.c.h.b16 %v1701
    %v3056 = vunpack.c.l.b16 %v1702
    %v3057 = vunpack.c.h.b16 %v1702
    %v3058 = vunpack.c.l.b16 %v1703
    %v3059 = vunpack.c.h.b16 %v1703
    %v3060 = vunpack.c.l.b16 %v1704
    %v3061 = vunpack.c.h.b16 %v1704
    %v3062 = vunpack.c.l.b16 %v1705
    %v3063 = vunpack.c.h.b16 %v1705
    %v3064 = vunpack.c.l.b16 %v1706
    %v3065 = vunpack.c.h.b16 %v1706
    %v3066 = vunpack.c.l.b16 %v1707
    %v3067 = vunpack.c.h.b16 %v1707
    %v3068 = vunpack.c.l.b16 %v1708
    %v3069 = vunpack.c.h.b16 %v1708
    %v3070 = vunpack.c.l.b16 %v1709
    %v3071 = vunpack.c.h.b16 %v1709
    %v3072 = vunpack.c.l.b16 %v1710
    %v3073 = vunpack.c.h.b16 %v1710
    %v3074 = vunpack.c.l.b16 %v1711
    %v3075 = vunpack.c.h.b16 %v1711
    %v3076 = vunpack.c.l.b16 %v1712
    %v3077 = vunpack.c.h.b16 %v1712
    %v3078 = vunpack.c.l.b16 %v1713
    %v3079 = vunpack.c.h.b16 %v1713
    %v3080 = vunpack.c.l.b16 %v1714
    %v3081 = vunpack.c.h.b16 %v1714
    %v3082 = vunpack.c.l.b16 %v1715
    %v3083 = vunpack.c.h.b16 %v1715
    %v3084 = vunpack.c.l.b16 %v1716
    %v3085 = vunpack.c.h.b16 %v1716
    %v3086 = vunpack.c.l.b16 %v1717
    %v3087 = vunpack.c.h.b16 %v1717
    %v3088 = vunpack.c.l.b16 %v1718
    %v3089 = vunpack.c.h.b16 %v1718
    %v3090 = vunpack.c.l.b16 %v1719
    %v3091 = vunpack.c.h.b16 %v1719
    %v3092 = vunpack.c.l.b16 %v1720
    %v3093 = vunpack.c.h.b16 %v1720
    %v3094 = vunpack.c.l.b16 %v1721
    %v3095 = vunpack.c.h.b16 %v1721
    %v3096 = vunpack.c.l.b16 %v1722
    %v3097 = vunpack.c.h.b16 %v1722
    %v3098 = vunpack.c.l.b16 %v1723
    %v3099 = vunpack.c.h.b16 %v1723
    %v3100 = vunpack.c.l.b16 %v1724
    %v3101 = vunpack.c.h.b16 %v1724
    %v3102 = vunpack.c.l.b16 %v1725
    %v3103 = vunpack.c.h.b16 %v1725
    %v3104 = vunpack.c.l.b16 %v1726
    %v3105 = vunpack.c.h.b16 %v1726
    %v3106 = vunpack.c.l.b16 %v1727
    %v3107 = vunpack.c.h.b16 %v1727
    %v3108 = vunpack.c.l.b16 %v1728
    %v3109 = vunpack.c.h.b16 %v1728
    %v3110 = vunpack.c.l.b16 %v1729
    %v3111 = vunpack.c.h.b16 %v1729
    %v3112 = vunpack.c.l.b16 %v1730
    %v3113 = vunpack.c.h.b16 %v1730
    %v3114 = vunpack.c.l.b16 %v1731
    %v3115 = vunpack.c.h.b16 %v1731
    %v3116 = vunpack.c.l.b16 %v1732
    %v3117 = vunpack.c.h.b16 %v1732
    %v3118 = vunpack.c.l.b16 %v1733
    %v3119 = vunpack.c.h.b16 %v1733
    %v3120 = vunpack.c.l.b16 %v1734
    %v3121 = vunpack.c.h.b16 %v1734
    %v3122 = vunpack.c.l.b16 %v1735
    %v3123 = vunpack.c.h.b16 %v1735
    %v3124 = vunpack.c.l.b16 %v1736
    %v3125 = vunpack.c.h.b16 %v1736
    %v3126 = vunpack.c.l.b16 %v1737
    %v3127 = vunpack.c.h.b16 %v1737
    %v3128 = vunpack.c.l.b16 %v1738
    %v3129 = vunpack.c.h.b16 %v1738
    %v3130 = vunpack.c.l.b16 %v1739
    %v3131 = vunpack.c.h.b16 %v1739
    %v3132 = vunpack.c.l.b16 %v1740
    %v3133 = vunpack.c.h.b16 %v1740
    %v3134 = vunpack.c.l.b16 %v1741
    %v3135 = vunpack.c.h.b16 %v1741
    %v3136 = vunpack.c.l.b16 %v1742
    %v3137 = vunpack.c.h.b16 %v1742
    %v3138 = vunpack.c.l.b16 %v1743
    %v3139 = vunpack.c.h.b16 %v1743
    %v3140 = vunpack.c.l.b16 %v1744
    %v3141 = vunpack.c.h.b16 %v1744
    %v3142 = vunpack.c.l.b16 %v1745
    %v3143 = vunpack.c.h.b16 %v1745
    %v3144 = vunpack.c.l.b16 %v1746
    %v3145 = vunpack.c.h.b16 %v1746
    %v3146 = vunpack.c.l.b16 %v1747
    %v3147 = vunpack.c.h.b16 %v1747
    %v3148 = vunpack.c.l.b16 %v1748
    %v3149 = vunpack.c.h.b16 %v1748
    %v3150 = vunpack.c.l.b16 %v1749
    %v3151 = vunpack.c.h.b16 %v1749
    %v3152 = vunpack.c.l.b16 %v1750
    %v3153 = vunpack.c.h.b16 %v1750
    %v3154 = vunpack.c.l.b16 %v1751
    %v3155 = vunpack.c.h.b16 %v1751
    %v3156 = vunpack.c.l.b16 %v1752
    %v3157 = vunpack.c.h.b16 %v1752
    %v3158 = vunpack.c.l.b16 %v1753
    %v3159 = vunpack.c.h.b16 %v1753
    %v3160 = vunpack.c.l.b16 %v1754
    %v3161 = vunpack.c.h.b16 %v1754
    %v3162 = vunpack.c.l.b16 %v1755
    %v3163 = vunpack.c.h.b16 %v1755
    %v3164 = vunpack.c.l.b16 %v1756
    %v3165 = vunpack.c.h.b16 %v1756
    %v3166 = vunpack.c.l.b16 %v1757
    %v3167 = vunpack.c.h.b16 %v1757
    %v3168 = vunpack.c.l.b16 %v1758
    %v3169 = vunpack.c.h.b16 %v1758
    %v3170 = vunpack.c.l.b16 %v1759
    %v3171 = vunpack.c.h.b16 %v1759
    %v3172 = vunpack.c.l.b16 %v1760
    %v3173 = vunpack.c.h.b16 %v1760
    %v3174 = vunpack.c.l.b16 %v1761
    %v3175 = vunpack.c.h.b16 %v1761
    %v3176 = vunpack.c.l.b16 %v1762
    %v3177 = vunpack.c.h.b16 %v1762
    %v3178 = vunpack.c.l.b16 %v1763
    %v3179 = vunpack.c.h.b16 %v1763
    %v3180 = vunpack.c.l.b16 %v1764
    %v3181 = vunpack.c.h.b16 %v1764
    %v3182 = vunpack.c.l.b16 %v1765
    %v3183 = vunpack.c.h.b16 %v1765
    %v3184 = vunpack.c.l.b16 %v1766
    %v3185 = vunpack.c.h.b16 %v1766
    %v3186 = vunpack.c.l.b16 %v1767
    %v3187 = vunpack.c.h.b16 %v1767
    %v3188 = vunpack.c.l.b16 %v1768
    %v3189 = vunpack.c.h.b16 %v1768
    %v3190 = vunpack.c.l.b16 %v1769
    %v3191 = vunpack.c.h.b16 %v1769
    %v3192 = vunpack.c.l.b16 %v1770
    %v3193 = vunpack.c.h.b16 %v1770
    %v3194 = vunpack.c.l.b16 %v1771
    %v3195 = vunpack.c.h.b16 %v1771
    %v3196 = vpack.c.b16 %v2944, %v2940
    %v3197 = vpack.c.b16 %v2945, %v2941
    %v3198 = vpack.c.b16 %v2946, %v2942
    %v3199 = vpack.c.b16 %v2947, %v2943
    %v3200 = vpack.c.b16 %v2952, %v2948
    %v3201 = vpack.c.b16 %v2953, %v2949
    %v3202 = vpack.c.b16 %v2954, %v2950
    %v3203 = vpack.c.b16 %v2955, %v2951
    %v3204 = vpack.c.b16 %v2960, %v2956
    %v3205 = vpack.c.b16 %v2961, %v2957
    %v3206 = vpack.c.b16 %v2962, %v2958
    %v3207 = vpack.c.b16 %v2963, %v2959
    %v3208 = vpack.c.b16 %v2968, %v2964
    %v3209 = vpack.c.b16 %v2969, %v2965
    %v3210 = vpack.c.b16 %v2970, %v2966
    %v3211 = vpack.c.b16 %v2971, %v2967
    %v3212 = vpack.c.b16 %v2976, %v2972
    %v3213 = vpack.c.b16 %v2977, %v2973
    %v3214 = vpack.c.b16 %v2978, %v2974
    %v3215 = vpack.c.b16 %v2979, %v2975
    %v3216 = vpack.c.b16 %v2984, %v2980
    %v3217 = vpack.c.b16 %v2985, %v2981
    %v3218 = vpack.c.b16 %v2986, %v2982
    %v3219 = vpack.c.b16 %v2987, %v2983
    %v3220 = vpack.c.b16 %v2992, %v2988
    %v3221 = vpack.c.b16 %v2993, %v2989
    %v3222 = vpack.c.b16 %v2994, %v2990
    %v3223 = vpack.c.b16 %v2995, %v2991
    %v3224 = vpack.c.b16 %v3000, %v2996
    %v3225 = vpack.c.b16 %v3001, %v2997
    %v3226 = vpack.c.b16 %v3002, %v2998
    %v3227 = vpack.c.b16 %v3003, %v2999
    %v3228 = vpack.c.b16 %v3008, %v3004
    %v3229 = vpack.c.b16 %v3009, %v3005
    %v3230 = vpack.c.b16 %v3010, %v3006
    %v3231 = vpack.c.b16 %v3011, %v3007
    %v3232 = vpack.c.b16 %v3016, %v3012
    %v3233 = vpack.c.b16 %v3017, %v3013
    %v3234 = vpack.c.b16 %v3018, %v3014
    %v3235 = vpack.c.b16 %v3019, %v3015
    %v3236 = vpack.c.b16 %v3024, %v3020
    %v3237 = vpack.c.b16 %v3025, %v3021
    %v3238 = vpack.c.b16 %v3026, %v3022
    %v3239 = vpack.c.b16 %v3027, %v3023
    %v3240 = vpack.c.b16 %v3032, %v3028
    %v3241 = vpack.c.b16 %v3033, %v3029
    %v3242 = vpack.c.b16 %v3034, %v3030
    %v3243 = vpack.c.b16 %v3035, %v3031
    %v3244 = vpack.c.b16 %v3040, %v3036
    %v3245 = vpack.c.b16 %v3041, %v3037
    %v3246 = vpack.c.b16 %v3042, %v3038
    %v3247 = vpack.c.b16 %v3043, %v3039
    %v3248 = vpack.c.b16 %v3048, %v3044
    %v3249 = vpack.c.b16 %v3049, %v3045
    %v3250 = vpack.c.b16 %v3050, %v3046
    %v3251 = vpack.c.b16 %v3051, %v3047
    %v3252 = vpack.c.b16 %v3056, %v3052
    %v3253 = vpack.c.b16 %v3057, %v3053
    %v3254 = vpack.c.b16 %v3058, %v3054
    %v3255 = vpack.c.b16 %v3059, %v3055
    %v3256 = vpack.c.b16 %v3064, %v3060
    %v3257 = vpack.c.b16 %v3065, %v3061
    %v3258 = vpack.c.b16 %v3066, %v3062
    %v3259 = vpack.c.b16 %v3067, %v3063
    %v3260 = vpack.c.b16 %v3072, %v3068
    %v3261 = vpack.c.b16 %v3073, %v3069
    %v3262 = vpack.c.b16 %v3074, %v3070
    %v3263 = vpack.c.b16 %v3075, %v3071
    %v3264 = vpack.c.b16 %v3080, %v3076
    %v3265 = vpack.c.b16 %v3081, %v3077
    %v3266 = vpack.c.b16 %v3082, %v3078
    %v3267 = vpack.c.b16 %v3083, %v3079
    %v3268 = vpack.c.b16 %v3088, %v3084
    %v3269 = vpack.c.b16 %v3089, %v3085
    %v3270 = vpack.c.b16 %v3090, %v3086
    %v3271 = vpack.c.b16 %v3091, %v3087
    %v3272 = vpack.c.b16 %v3096, %v3092
    %v3273 = vpack.c.b16 %v3097, %v3093
    %v3274 = vpack.c.b16 %v3098, %v3094
    %v3275 = vpack.c.b16 %v3099, %v3095
    %v3276 = vpack.c.b16 %v3104, %v3100
    %v3277 = vpack.c.b16 %v3105, %v3101
    %v3278 = vpack.c.b16 %v3106, %v3102
    %v3279 = vpack.c.b16 %v3107, %v3103
    %v3280 = vpack.c.b16 %v3112, %v3108
    %v3281 = vpack.c.b16 %v3113, %v3109
    %v3282 = vpack.c.b16 %v3114, %v3110
    %v3283 = vpack.c.b16 %v3115, %v3111
    %v3284 = vpack.c.b16 %v3120, %v3116
    %v3285 = vpack.c.b16 %v3121, %v3117
    %v3286 = vpack.c.b16 %v3122, %v3118
    %v3287 = vpack.c.b16 %v3123, %v3119
    %v3288 = vpack.c.b16 %v3128, %v3124
    %v3289 = vpack.c.b16 %v3129, %v3125
    %v3290 = vpack.c.b16 %v3130, %v3126
    %v3291 = vpack.c.b16 %v3131, %v3127
    %v3292 = vpack.c.b16 %v3136, %v3132
    %v3293 = vpack.c.b16 %v3137, %v3133
    %v3294 = vpack.c.b16 %v3138, %v3134
    %v3295 = vpack.c.b16 %v3139, %v3135
    %v3296 = vpack.c.b16 %v3144, %v3140
    %v3297 = vpack.c.b16 %v3145, %v3141
    %v3298 = vpack.c.b16 %v3146, %v3142
    %v3299 = vpack.c.b16 %v3147, %v3143
    %v3300 = vpack.c.b16 %v3152, %v3148
    %v3301 = vpack.c.b16 %v3153, %v3149
    %v3302 = vpack.c.b16 %v3154, %v3150
    %v3303 = vpack.c.b16 %v3155, %v3151
    %v3304 = vpack.c.b16 %v3160, %v3156
    %v3305 = vpack.c.b16 %v3161, %v3157
    %v3306 = vpack.c.b16 %v3162, %v3158
    %v3307 = vpack.c.b16 %v3163, %v3159
    %v3308 = vpack.c.b16 %v3168, %v3164
    %v3309 = vpack.c.b16 %v3169, %v3165
    %v3310 = vpack.c.b16 %v3170, %v3166
    %v3311 = vpack.c.b16 %v3171, %v3167
    %v3312 = vpack.c.b16 %v3176, %v3172
    %v3313 = vpack.c.b16 %v3177, %v3173
    %v3314 = vpack.c.b16 %v3178, %v3174
    %v3315 = vpack.c.b16 %v3179, %v3175
    %v3316 = vpack.c.b16 %v3184, %v3180
    %v3317 = vpack.c.b16 %v3185, %v3181
    %v3318 = vpack.c.b16 %v3186, %v3182
    %v3319 = vpack.c.b16 %v3187, %v3183
    %v3320 = vpack.c.b16 %v3192, %v3188
    %v3321 = vpack.c.b16 %v3193, %v3189
    %v3322 = vpack.c.b16 %v3194, %v3190
    %v3323 = vpack.c.b16 %v3195, %v3191
    %3452 = vmatprep.subr.bf16.mxu0 %v3197
    %3453 = vmatpush1.bf16.msra.mxu0 %v3196
    %3454 = vmatprep.subr.bf16.mxu0 %v3201
    %3455 = vmatpush1.bf16.msra.mxu0 %v3200
    %3456 = vmatprep.subr.bf16.mxu0 %v3205
    %3457 = vmatpush1.bf16.msra.mxu0 %v3204
    %3458 = vmatprep.subr.bf16.mxu0 %v3209
    %3459 = vmatpush1.bf16.msra.mxu0 %v3208
    %3460 = vmatprep.subr.bf16.mxu0 %v3213
    %3461 = vmatpush1.bf16.msra.mxu0 %v3212
    %3462 = vmatprep.subr.bf16.mxu0 %v3217
    %3463 = vmatpush1.bf16.msra.mxu0 %v3216
    %3464 = vmatprep.subr.bf16.mxu0 %v3221
    %3465 = vmatpush1.bf16.msra.mxu0 %v3220
    %3466 = vmatprep.subr.bf16.mxu0 %v3225
    %3467 = vmatpush1.bf16.msra.mxu0 %v3224
    %3468 = vmatprep.subr.bf16.mxu0 %v3229
    %3469 = vmatpush1.bf16.msra.mxu0 %v3228
    %3470 = vmatprep.subr.bf16.mxu0 %v3233
    %3471 = vmatpush1.bf16.msra.mxu0 %v3232
    %3472 = vmatprep.subr.bf16.mxu0 %v3237
    %3473 = vmatpush1.bf16.msra.mxu0 %v3236
    %3474 = vmatprep.subr.bf16.mxu0 %v3241
    %3475 = vmatpush1.bf16.msra.mxu0 %v3240
    %3476 = vmatprep.subr.bf16.mxu0 %v3245
    %3477 = vmatpush1.bf16.msra.mxu0 %v3244
    %3478 = vmatprep.subr.bf16.mxu0 %v3249
    %3479 = vmatpush1.bf16.msra.mxu0 %v3248
    %3480 = vmatprep.subr.bf16.mxu0 %v3253
    %3481 = vmatpush1.bf16.msra.mxu0 %v3252
    %3482 = vmatprep.subr.bf16.mxu0 %v3257
    %3483 = vmatpush1.bf16.msra.mxu0 %v3256
    %3484 = vmatprep.mubr.bf16.mxu0 %v2805
    %3485 = vmatmul.mubr.bf16.gmra.mrb[0].mxu0 %v2804
    %v3486 = vpop.f32.mrb[0].mxu0
    %v3487 = vadd.f32 %v2710, %v3486
    %v3488 = vpop.f32.mrb[0].mxu0
    %v3489 = vadd.f32 %v2712, %v3488
    %v3490 = vpop.f32.mrb[0].mxu0
    %v3491 = vadd.f32 %v2714, %v3490
    %v3492 = vpop.f32.mrb[0].mxu0
    %v3493 = vadd.f32 %v2716, %v3492
    %3494 = vdwg.mxu0
    %3495 = vmatprep.subr.bf16.mxu0 %v3261
    %3496 = vmatpush1.bf16.msra.mxu0 %v3260
    %3497 = vmatprep.subr.bf16.mxu0 %v3265
    %3498 = vmatpush1.bf16.msra.mxu0 %v3264
    %3499 = vmatprep.subr.bf16.mxu0 %v3269
    %3500 = vmatpush1.bf16.msra.mxu0 %v3268
    %3501 = vmatprep.subr.bf16.mxu0 %v3273
    %3502 = vmatpush1.bf16.msra.mxu0 %v3272
    %3503 = vmatprep.subr.bf16.mxu0 %v3277
    %3504 = vmatpush1.bf16.msra.mxu0 %v3276
    %3505 = vmatprep.subr.bf16.mxu0 %v3281
    %3506 = vmatpush1.bf16.msra.mxu0 %v3280
    %3507 = vmatprep.subr.bf16.mxu0 %v3285
    %3508 = vmatpush1.bf16.msra.mxu0 %v3284
    %3509 = vmatprep.subr.bf16.mxu0 %v3289
    %3510 = vmatpush1.bf16.msra.mxu0 %v3288
    %3511 = vmatprep.subr.bf16.mxu0 %v3293
    %3512 = vmatpush1.bf16.msra.mxu0 %v3292
    %3513 = vmatprep.subr.bf16.mxu0 %v3297
    %3514 = vmatpush1.bf16.msra.mxu0 %v3296
    %3515 = vmatprep.subr.bf16.mxu0 %v3301
    %3516 = vmatpush1.bf16.msra.mxu0 %v3300
    %3517 = vmatprep.subr.bf16.mxu0 %v3305
    %3518 = vmatpush1.bf16.msra.mxu0 %v3304
    %3519 = vmatprep.subr.bf16.mxu0 %v3309
    %3520 = vmatpush1.bf16.msra.mxu0 %v3308
    %3521 = vmatprep.subr.bf16.mxu0 %v3313
    %3522 = vmatpush1.bf16.msra.mxu0 %v3312
    %3523 = vmatprep.subr.bf16.mxu0 %v3317
    %3524 = vmatpush1.bf16.msra.mxu0 %v3316
    %3525 = vmatprep.subr.bf16.mxu0 %v3321
    %3526 = vmatpush1.bf16.msra.mxu0 %v3320
    %3527 = vmatprep.mubr.bf16.mxu0 %v2807
    %3528 = vmatmul.mubr.bf16.gmra.mrb[0].mxu0 %v2806
    %v3529 = vpop.f32.mrb[0].mxu0
    %v3530 = vadd.f32 %v3487, %v3529
    %v3531 = vpop.f32.mrb[0].mxu0
    %v3532 = vadd.f32 %v3489, %v3531
    %v3533 = vpop.f32.mrb[0].mxu0
    %v3534 = vadd.f32 %v3491, %v3533
    %v3535 = vpop.f32.mrb[0].mxu0
    %v3536 = vadd.f32 %v3493, %v3535
    %3537 = vdwg.mxu0
    %3538 = vmatprep.subr.bf16.mxu0 %v3199
    %3539 = vmatpush1.bf16.msra.mxu0 %v3198
    %3540 = vmatprep.subr.bf16.mxu0 %v3203
    %3541 = vmatpush1.bf16.msra.mxu0 %v3202
    %3542 = vmatprep.subr.bf16.mxu0 %v3207
    %3543 = vmatpush1.bf16.msra.mxu0 %v3206
    %3544 = vmatprep.subr.bf16.mxu0 %v3211
    %3545 = vmatpush1.bf16.msra.mxu0 %v3210
    %3546 = vmatprep.subr.bf16.mxu0 %v3215
    %3547 = vmatpush1.bf16.msra.mxu0 %v3214
    %3548 = vmatprep.subr.bf16.mxu0 %v3219
    %3549 = vmatpush1.bf16.msra.mxu0 %v3218
    %3550 = vmatprep.subr.bf16.mxu0 %v3223
    %3551 = vmatpush1.bf16.msra.mxu0 %v3222
    %3552 = vmatprep.subr.bf16.mxu0 %v3227
    %3553 = vmatpush1.bf16.msra.mxu0 %v3226
    %3554 = vmatprep.subr.bf16.mxu0 %v3231
    %3555 = vmatpush1.bf16.msra.mxu0 %v3230
    %3556 = vmatprep.subr.bf16.mxu0 %v3235
    %3557 = vmatpush1.bf16.msra.mxu0 %v3234
    %3558 = vmatprep.subr.bf16.mxu0 %v3239
    %3559 = vmatpush1.bf16.msra.mxu0 %v3238
    %3560 = vmatprep.subr.bf16.mxu0 %v3243
    %3561 = vmatpush1.bf16.msra.mxu0 %v3242
    %3562 = vmatprep.subr.bf16.mxu0 %v3247
    %3563 = vmatpush1.bf16.msra.mxu0 %v3246
    %3564 = vmatprep.subr.bf16.mxu0 %v3251
    %3565 = vmatpush1.bf16.msra.mxu0 %v3250
    %3566 = vmatprep.subr.bf16.mxu0 %v3255
    %3567 = vmatpush1.bf16.msra.mxu0 %v3254
    %3568 = vmatprep.subr.bf16.mxu0 %v3259
    %3569 = vmatpush1.bf16.msra.mxu0 %v3258
    %3570 = vmatprep.mubr.bf16.mxu0 %v2805
    %3571 = vmatmul.mubr.bf16.gmra.mrb[0].mxu0 %v2804
    %v3572 = vpop.f32.mrb[0].mxu0
    %v3573 = vadd.f32 %v2796, %v3572
    %v3574 = vpop.f32.mrb[0].mxu0
    %v3575 = vadd.f32 %v2798, %v3574
    %v3576 = vpop.f32.mrb[0].mxu0
    %v3577 = vadd.f32 %v2800, %v3576
    %v3578 = vpop.f32.mrb[0].mxu0
    %v3579 = vadd.f32 %v2802, %v3578
    %3580 = vdwg.mxu0
    %3581 = vmatprep.subr.bf16.mxu0 %v3263
    %3582 = vmatpush1.bf16.msra.mxu0 %v3262
    %3583 = vmatprep.subr.bf16.mxu0 %v3267
    %3584 = vmatpush1.bf16.msra.mxu0 %v3266
    %3585 = vmatprep.subr.bf16.mxu0 %v3271
    %3586 = vmatpush1.bf16.msra.mxu0 %v3270
    %3587 = vmatprep.subr.bf16.mxu0 %v3275
    %3588 = vmatpush1.bf16.msra.mxu0 %v3274
    %3589 = vmatprep.subr.bf16.mxu0 %v3279
    %3590 = vmatpush1.bf16.msra.mxu0 %v3278
    %3591 = vmatprep.subr.bf16.mxu0 %v3283
    %3592 = vmatpush1.bf16.msra.mxu0 %v3282
    %3593 = vmatprep.subr.bf16.mxu0 %v3287
    %3594 = vmatpush1.bf16.msra.mxu0 %v3286
    %3595 = vmatprep.subr.bf16.mxu0 %v3291
    %3596 = vmatpush1.bf16.msra.mxu0 %v3290
    %3597 = vmatprep.subr.bf16.mxu0 %v3295
    %3598 = vmatpush1.bf16.msra.mxu0 %v3294
    %3599 = vmatprep.subr.bf16.mxu0 %v3299
    %3600 = vmatpush1.bf16.msra.mxu0 %v3298
    %3601 = vmatprep.subr.bf16.mxu0 %v3303
    %3602 = vmatpush1.bf16.msra.mxu0 %v3302
    %3603 = vmatprep.subr.bf16.mxu0 %v3307
    %3604 = vmatpush1.bf16.msra.mxu0 %v3306
    %3605 = vmatprep.subr.bf16.mxu0 %v3311
    %3606 = vmatpush1.bf16.msra.mxu0 %v3310
    %3607 = vmatprep.subr.bf16.mxu0 %v3315
    %3608 = vmatpush1.bf16.msra.mxu0 %v3314
    %3609 = vmatprep.subr.bf16.mxu0 %v3319
    %3610 = vmatpush1.bf16.msra.mxu0 %v3318
    %3611 = vmatprep.subr.bf16.mxu0 %v3323
    %3612 = vmatpush1.bf16.msra.mxu0 %v3322
    %3613 = vmatprep.mubr.bf16.mxu0 %v2807
    %3614 = vmatmul.mubr.bf16.gmra.mrb[0].mxu0 %v2806
    %v3615 = vpop.f32.mrb[0].mxu0
    %v3616 = vadd.f32 %v3573, %v3615
    %v3617 = vpop.f32.mrb[0].mxu0
    %v3618 = vadd.f32 %v3575, %v3617
    %v3619 = vpop.f32.mrb[0].mxu0
    %v3620 = vadd.f32 %v3577, %v3619
    %v3621 = vpop.f32.mrb[0].mxu0
    %v3622 = vadd.f32 %v3579, %v3621
    %3623 = vdwg.mxu0
    %vm3624 = vcmask 1042432
    %vm3625 = vcmask 1046532
    %vm3626 = vmor %vm3624, %vm3625
    %v3627 = vrot.slane %v1780, 5
    %v3628 = vrot.slane %v3627, 4
    %v3629 = vrot.slane %v1782, 5
    %v3630 = vsel %vm3626, %v3628, %v3629
    %v3631 = vrot.slane %v1781, 5
    %v3632 = vrot.slane %v3631, 4
    %v3633 = vrot.slane %v1783, 5
    %v3634 = vsel %vm3626, %v3632, %v3633
    %v3635 = vrot.slane %v1784, 5
    %v3636 = vrot.slane %v3635, 4
    %v3637 = vrot.slane %v1786, 5
    %v3638 = vsel %vm3626, %v3636, %v3637
    %v3639 = vrot.slane %v1785, 5
    %v3640 = vrot.slane %v3639, 4
    %v3641 = vrot.slane %v1787, 5
    %v3642 = vsel %vm3626, %v3640, %v3641
    %s3643 = scalar_lea.vmem [#allocation12], 2048
    %v3644 = vld [vmem:[%s3643] sm:$0xff]
    %v3645 = vld [vmem:[%s3643 + $0x8] sm:$0xff]
    %v3646 = vld [vmem:[%s3643 + $0x10] sm:$0xff]
    %v3647 = vld [vmem:[%s3643 + $0x18] sm:$0xff]
    %v3648 = vld [vmem:[%s3643 + $0x20] sm:$0xff]
    %v3649 = vld [vmem:[%s3643 + $0x28] sm:$0xff]
    %v3650 = vld [vmem:[%s3643 + $0x30] sm:$0xff]
    %v3651 = vld [vmem:[%s3643 + $0x38] sm:$0xff]
    %v3652 = vld [vmem:[%s3643 + $0x40] sm:$0xff]
    %v3653 = vld [vmem:[%s3643 + $0x48] sm:$0xff]
    %v3654 = vld [vmem:[%s3643 + $0x50] sm:$0xff]
    %v3655 = vld [vmem:[%s3643 + $0x58] sm:$0xff]
    %v3656 = vld [vmem:[%s3643 + $0x60] sm:$0xff]
    %v3657 = vld [vmem:[%s3643 + $0x68] sm:$0xff]
    %v3658 = vld [vmem:[%s3643 + $0x70] sm:$0xff]
    %v3659 = vld [vmem:[%s3643 + $0x78] sm:$0xff]
    %v3660 = vld [vmem:[%s3643 + $0x80] sm:$0xff]
    %v3661 = vld [vmem:[%s3643 + $0x88] sm:$0xff]
    %v3662 = vld [vmem:[%s3643 + $0x90] sm:$0xff]
    %v3663 = vld [vmem:[%s3643 + $0x98] sm:$0xff]
    %v3664 = vld [vmem:[%s3643 + $0xa0] sm:$0xff]
    %v3665 = vld [vmem:[%s3643 + $0xa8] sm:$0xff]
    %v3666 = vld [vmem:[%s3643 + $0xb0] sm:$0xff]
    %v3667 = vld [vmem:[%s3643 + $0xb8] sm:$0xff]
    %v3668 = vld [vmem:[%s3643 + $0xc0] sm:$0xff]
    %v3669 = vld [vmem:[%s3643 + $0xc8] sm:$0xff]
    %v3670 = vld [vmem:[%s3643 + $0xd0] sm:$0xff]
    %v3671 = vld [vmem:[%s3643 + $0xd8] sm:$0xff]
    %v3672 = vld [vmem:[%s3643 + $0xe0] sm:$0xff]
    %v3673 = vld [vmem:[%s3643 + $0xe8] sm:$0xff]
    %v3674 = vld [vmem:[%s3643 + $0xf0] sm:$0xff]
    %v3675 = vld [vmem:[%s3643 + $0xf8] sm:$0xff]
    %v3676 = vld [vmem:[%s3643 + $0x100] sm:$0xff]
    %v3677 = vld [vmem:[%s3643 + $0x108] sm:$0xff]
    %v3678 = vld [vmem:[%s3643 + $0x110] sm:$0xff]
    %v3679 = vld [vmem:[%s3643 + $0x118] sm:$0xff]
    %v3680 = vld [vmem:[%s3643 + $0x120] sm:$0xff]
    %v3681 = vld [vmem:[%s3643 + $0x128] sm:$0xff]
    %v3682 = vld [vmem:[%s3643 + $0x130] sm:$0xff]
    %v3683 = vld [vmem:[%s3643 + $0x138] sm:$0xff]
    %v3684 = vld [vmem:[%s3643 + $0x140] sm:$0xff]
    %v3685 = vld [vmem:[%s3643 + $0x148] sm:$0xff]
    %v3686 = vld [vmem:[%s3643 + $0x150] sm:$0xff]
    %v3687 = vld [vmem:[%s3643 + $0x158] sm:$0xff]
    %v3688 = vld [vmem:[%s3643 + $0x160] sm:$0xff]
    %v3689 = vld [vmem:[%s3643 + $0x168] sm:$0xff]
    %v3690 = vld [vmem:[%s3643 + $0x170] sm:$0xff]
    %v3691 = vld [vmem:[%s3643 + $0x178] sm:$0xff]
    %v3692 = vld [vmem:[%s3643 + $0x180] sm:$0xff]
    %v3693 = vld [vmem:[%s3643 + $0x188] sm:$0xff]
    %v3694 = vld [vmem:[%s3643 + $0x190] sm:$0xff]
    %v3695 = vld [vmem:[%s3643 + $0x198] sm:$0xff]
    %v3696 = vld [vmem:[%s3643 + $0x1a0] sm:$0xff]
    %v3697 = vld [vmem:[%s3643 + $0x1a8] sm:$0xff]
    %v3698 = vld [vmem:[%s3643 + $0x1b0] sm:$0xff]
    %v3699 = vld [vmem:[%s3643 + $0x1b8] sm:$0xff]
    %v3700 = vld [vmem:[%s3643 + $0x1c0] sm:$0xff]
    %v3701 = vld [vmem:[%s3643 + $0x1c8] sm:$0xff]
    %v3702 = vld [vmem:[%s3643 + $0x1d0] sm:$0xff]
    %v3703 = vld [vmem:[%s3643 + $0x1d8] sm:$0xff]
    %v3704 = vld [vmem:[%s3643 + $0x1e0] sm:$0xff]
    %v3705 = vld [vmem:[%s3643 + $0x1e8] sm:$0xff]
    %v3706 = vld [vmem:[%s3643 + $0x1f0] sm:$0xff]
    %v3707 = vld [vmem:[%s3643 + $0x1f8] sm:$0xff]
    %v3708 = vld [vmem:[%s3643 + $0x200] sm:$0xff]
    %v3709 = vld [vmem:[%s3643 + $0x208] sm:$0xff]
    %v3710 = vld [vmem:[%s3643 + $0x210] sm:$0xff]
    %v3711 = vld [vmem:[%s3643 + $0x218] sm:$0xff]
    %v3712 = vld [vmem:[%s3643 + $0x220] sm:$0xff]
    %v3713 = vld [vmem:[%s3643 + $0x228] sm:$0xff]
    %v3714 = vld [vmem:[%s3643 + $0x230] sm:$0xff]
    %v3715 = vld [vmem:[%s3643 + $0x238] sm:$0xff]
    %v3716 = vld [vmem:[%s3643 + $0x240] sm:$0xff]
    %v3717 = vld [vmem:[%s3643 + $0x248] sm:$0xff]
    %v3718 = vld [vmem:[%s3643 + $0x250] sm:$0xff]
    %v3719 = vld [vmem:[%s3643 + $0x258] sm:$0xff]
    %v3720 = vld [vmem:[%s3643 + $0x260] sm:$0xff]
    %v3721 = vld [vmem:[%s3643 + $0x268] sm:$0xff]
    %v3722 = vld [vmem:[%s3643 + $0x270] sm:$0xff]
    %v3723 = vld [vmem:[%s3643 + $0x278] sm:$0xff]
    %v3724 = vld [vmem:[%s3643 + $0x280] sm:$0xff]
    %v3725 = vld [vmem:[%s3643 + $0x288] sm:$0xff]
    %v3726 = vld [vmem:[%s3643 + $0x290] sm:$0xff]
    %v3727 = vld [vmem:[%s3643 + $0x298] sm:$0xff]
    %v3728 = vld [vmem:[%s3643 + $0x2a0] sm:$0xff]
    %v3729 = vld [vmem:[%s3643 + $0x2a8] sm:$0xff]
    %v3730 = vld [vmem:[%s3643 + $0x2b0] sm:$0xff]
    %v3731 = vld [vmem:[%s3643 + $0x2b8] sm:$0xff]
    %v3732 = vld [vmem:[%s3643 + $0x2c0] sm:$0xff]
    %v3733 = vld [vmem:[%s3643 + $0x2c8] sm:$0xff]
    %v3734 = vld [vmem:[%s3643 + $0x2d0] sm:$0xff]
    %v3735 = vld [vmem:[%s3643 + $0x2d8] sm:$0xff]
    %v3736 = vld [vmem:[%s3643 + $0x2e0] sm:$0xff]
    %v3737 = vld [vmem:[%s3643 + $0x2e8] sm:$0xff]
    %v3738 = vld [vmem:[%s3643 + $0x2f0] sm:$0xff]
    %v3739 = vld [vmem:[%s3643 + $0x2f8] sm:$0xff]
    %v3740 = vld [vmem:[%s3643 + $0x300] sm:$0xff]
    %v3741 = vld [vmem:[%s3643 + $0x308] sm:$0xff]
    %v3742 = vld [vmem:[%s3643 + $0x310] sm:$0xff]
    %v3743 = vld [vmem:[%s3643 + $0x318] sm:$0xff]
    %v3744 = vld [vmem:[%s3643 + $0x320] sm:$0xff]
    %v3745 = vld [vmem:[%s3643 + $0x328] sm:$0xff]
    %v3746 = vld [vmem:[%s3643 + $0x330] sm:$0xff]
    %v3747 = vld [vmem:[%s3643 + $0x338] sm:$0xff]
    %v3748 = vld [vmem:[%s3643 + $0x340] sm:$0xff]
    %v3749 = vld [vmem:[%s3643 + $0x348] sm:$0xff]
    %v3750 = vld [vmem:[%s3643 + $0x350] sm:$0xff]
    %v3751 = vld [vmem:[%s3643 + $0x358] sm:$0xff]
    %v3752 = vld [vmem:[%s3643 + $0x360] sm:$0xff]
    %v3753 = vld [vmem:[%s3643 + $0x368] sm:$0xff]
    %v3754 = vld [vmem:[%s3643 + $0x370] sm:$0xff]
    %v3755 = vld [vmem:[%s3643 + $0x378] sm:$0xff]
    %v3756 = vld [vmem:[%s3643 + $0x380] sm:$0xff]
    %v3757 = vld [vmem:[%s3643 + $0x388] sm:$0xff]
    %v3758 = vld [vmem:[%s3643 + $0x390] sm:$0xff]
    %v3759 = vld [vmem:[%s3643 + $0x398] sm:$0xff]
    %v3760 = vld [vmem:[%s3643 + $0x3a0] sm:$0xff]
    %v3761 = vld [vmem:[%s3643 + $0x3a8] sm:$0xff]
    %v3762 = vld [vmem:[%s3643 + $0x3b0] sm:$0xff]
    %v3763 = vld [vmem:[%s3643 + $0x3b8] sm:$0xff]
    %v3764 = vld [vmem:[%s3643 + $0x3c0] sm:$0xff]
    %v3765 = vld [vmem:[%s3643 + $0x3c8] sm:$0xff]
    %v3766 = vld [vmem:[%s3643 + $0x3d0] sm:$0xff]
    %v3767 = vld [vmem:[%s3643 + $0x3d8] sm:$0xff]
    %v3768 = vld [vmem:[%s3643 + $0x3e0] sm:$0xff]
    %v3769 = vld [vmem:[%s3643 + $0x3e8] sm:$0xff]
    %v3770 = vld [vmem:[%s3643 + $0x3f0] sm:$0xff]
    %v3771 = vld [vmem:[%s3643 + $0x3f8] sm:$0xff]
    %v3772 = vunpack.c.l.b16 %v3630
    %v3773 = vunpack.c.h.b16 %v3630
    %v3774 = vunpack.c.l.b16 %v3634
    %v3775 = vunpack.c.h.b16 %v3634
    %v3776 = vunpack.c.l.b16 %v3638
    %v3777 = vunpack.c.h.b16 %v3638
    %v3778 = vunpack.c.l.b16 %v3642
    %v3779 = vunpack.c.h.b16 %v3642
    %v3780 = vpack.c.b16 %v3776, %v3772
    %v3781 = vpack.c.b16 %v3777, %v3773
    %v3782 = vpack.c.b16 %v3778, %v3774
    %v3783 = vpack.c.b16 %v3779, %v3775
    %v3916 = vunpack.c.l.b16 %v3644
    %v3917 = vunpack.c.h.b16 %v3644
    %v3918 = vunpack.c.l.b16 %v3645
    %v3919 = vunpack.c.h.b16 %v3645
    %v3920 = vunpack.c.l.b16 %v3646
    %v3921 = vunpack.c.h.b16 %v3646
    %v3922 = vunpack.c.l.b16 %v3647
    %v3923 = vunpack.c.h.b16 %v3647
    %v3924 = vunpack.c.l.b16 %v3648
    %v3925 = vunpack.c.h.b16 %v3648
    %v3926 = vunpack.c.l.b16 %v3649
    %v3927 = vunpack.c.h.b16 %v3649
    %v3928 = vunpack.c.l.b16 %v3650
    %v3929 = vunpack.c.h.b16 %v3650
    %v3930 = vunpack.c.l.b16 %v3651
    %v3931 = vunpack.c.h.b16 %v3651
    %v3932 = vunpack.c.l.b16 %v3652
    %v3933 = vunpack.c.h.b16 %v3652
    %v3934 = vunpack.c.l.b16 %v3653
    %v3935 = vunpack.c.h.b16 %v3653
    %v3936 = vunpack.c.l.b16 %v3654
    %v3937 = vunpack.c.h.b16 %v3654
    %v3938 = vunpack.c.l.b16 %v3655
    %v3939 = vunpack.c.h.b16 %v3655
    %v3940 = vunpack.c.l.b16 %v3656
    %v3941 = vunpack.c.h.b16 %v3656
    %v3942 = vunpack.c.l.b16 %v3657
    %v3943 = vunpack.c.h.b16 %v3657
    %v3944 = vunpack.c.l.b16 %v3658
    %v3945 = vunpack.c.h.b16 %v3658
    %v3946 = vunpack.c.l.b16 %v3659
    %v3947 = vunpack.c.h.b16 %v3659
    %v3948 = vunpack.c.l.b16 %v3660
    %v3949 = vunpack.c.h.b16 %v3660
    %v3950 = vunpack.c.l.b16 %v3661
    %v3951 = vunpack.c.h.b16 %v3661
    %v3952 = vunpack.c.l.b16 %v3662
    %v3953 = vunpack.c.h.b16 %v3662
    %v3954 = vunpack.c.l.b16 %v3663
    %v3955 = vunpack.c.h.b16 %v3663
    %v3956 = vunpack.c.l.b16 %v3664
    %v3957 = vunpack.c.h.b16 %v3664
    %v3958 = vunpack.c.l.b16 %v3665
    %v3959 = vunpack.c.h.b16 %v3665
    %v3960 = vunpack.c.l.b16 %v3666
    %v3961 = vunpack.c.h.b16 %v3666
    %v3962 = vunpack.c.l.b16 %v3667
    %v3963 = vunpack.c.h.b16 %v3667
    %v3964 = vunpack.c.l.b16 %v3668
    %v3965 = vunpack.c.h.b16 %v3668
    %v3966 = vunpack.c.l.b16 %v3669
    %v3967 = vunpack.c.h.b16 %v3669
    %v3968 = vunpack.c.l.b16 %v3670
    %v3969 = vunpack.c.h.b16 %v3670
    %v3970 = vunpack.c.l.b16 %v3671
    %v3971 = vunpack.c.h.b16 %v3671
    %v3972 = vunpack.c.l.b16 %v3672
    %v3973 = vunpack.c.h.b16 %v3672
    %v3974 = vunpack.c.l.b16 %v3673
    %v3975 = vunpack.c.h.b16 %v3673
    %v3976 = vunpack.c.l.b16 %v3674
    %v3977 = vunpack.c.h.b16 %v3674
    %v3978 = vunpack.c.l.b16 %v3675
    %v3979 = vunpack.c.h.b16 %v3675
    %v3980 = vunpack.c.l.b16 %v3676
    %v3981 = vunpack.c.h.b16 %v3676
    %v3982 = vunpack.c.l.b16 %v3677
    %v3983 = vunpack.c.h.b16 %v3677
    %v3984 = vunpack.c.l.b16 %v3678
    %v3985 = vunpack.c.h.b16 %v3678
    %v3986 = vunpack.c.l.b16 %v3679
    %v3987 = vunpack.c.h.b16 %v3679
    %v3988 = vunpack.c.l.b16 %v3680
    %v3989 = vunpack.c.h.b16 %v3680
    %v3990 = vunpack.c.l.b16 %v3681
    %v3991 = vunpack.c.h.b16 %v3681
    %v3992 = vunpack.c.l.b16 %v3682
    %v3993 = vunpack.c.h.b16 %v3682
    %v3994 = vunpack.c.l.b16 %v3683
    %v3995 = vunpack.c.h.b16 %v3683
    %v3996 = vunpack.c.l.b16 %v3684
    %v3997 = vunpack.c.h.b16 %v3684
    %v3998 = vunpack.c.l.b16 %v3685
    %v3999 = vunpack.c.h.b16 %v3685
    %v4000 = vunpack.c.l.b16 %v3686
    %v4001 = vunpack.c.h.b16 %v3686
    %v4002 = vunpack.c.l.b16 %v3687
    %v4003 = vunpack.c.h.b16 %v3687
    %v4004 = vunpack.c.l.b16 %v3688
    %v4005 = vunpack.c.h.b16 %v3688
    %v4006 = vunpack.c.l.b16 %v3689
    %v4007 = vunpack.c.h.b16 %v3689
    %v4008 = vunpack.c.l.b16 %v3690
    %v4009 = vunpack.c.h.b16 %v3690
    %v4010 = vunpack.c.l.b16 %v3691
    %v4011 = vunpack.c.h.b16 %v3691
    %v4012 = vunpack.c.l.b16 %v3692
    %v4013 = vunpack.c.h.b16 %v3692
    %v4014 = vunpack.c.l.b16 %v3693
    %v4015 = vunpack.c.h.b16 %v3693
    %v4016 = vunpack.c.l.b16 %v3694
    %v4017 = vunpack.c.h.b16 %v3694
    %v4018 = vunpack.c.l.b16 %v3695
    %v4019 = vunpack.c.h.b16 %v3695
    %v4020 = vunpack.c.l.b16 %v3696
    %v4021 = vunpack.c.h.b16 %v3696
    %v4022 = vunpack.c.l.b16 %v3697
    %v4023 = vunpack.c.h.b16 %v3697
    %v4024 = vunpack.c.l.b16 %v3698
    %v4025 = vunpack.c.h.b16 %v3698
    %v4026 = vunpack.c.l.b16 %v3699
    %v4027 = vunpack.c.h.b16 %v3699
    %v4028 = vunpack.c.l.b16 %v3700
    %v4029 = vunpack.c.h.b16 %v3700
    %v4030 = vunpack.c.l.b16 %v3701
    %v4031 = vunpack.c.h.b16 %v3701
    %v4032 = vunpack.c.l.b16 %v3702
    %v4033 = vunpack.c.h.b16 %v3702
    %v4034 = vunpack.c.l.b16 %v3703
    %v4035 = vunpack.c.h.b16 %v3703
    %v4036 = vunpack.c.l.b16 %v3704
    %v4037 = vunpack.c.h.b16 %v3704
    %v4038 = vunpack.c.l.b16 %v3705
    %v4039 = vunpack.c.h.b16 %v3705
    %v4040 = vunpack.c.l.b16 %v3706
    %v4041 = vunpack.c.h.b16 %v3706
    %v4042 = vunpack.c.l.b16 %v3707
    %v4043 = vunpack.c.h.b16 %v3707
    %v4044 = vunpack.c.l.b16 %v3708
    %v4045 = vunpack.c.h.b16 %v3708
    %v4046 = vunpack.c.l.b16 %v3709
    %v4047 = vunpack.c.h.b16 %v3709
    %v4048 = vunpack.c.l.b16 %v3710
    %v4049 = vunpack.c.h.b16 %v3710
    %v4050 = vunpack.c.l.b16 %v3711
    %v4051 = vunpack.c.h.b16 %v3711
    %v4052 = vunpack.c.l.b16 %v3712
    %v4053 = vunpack.c.h.b16 %v3712
    %v4054 = vunpack.c.l.b16 %v3713
    %v4055 = vunpack.c.h.b16 %v3713
    %v4056 = vunpack.c.l.b16 %v3714
    %v4057 = vunpack.c.h.b16 %v3714
    %v4058 = vunpack.c.l.b16 %v3715
    %v4059 = vunpack.c.h.b16 %v3715
    %v4060 = vunpack.c.l.b16 %v3716
    %v4061 = vunpack.c.h.b16 %v3716
    %v4062 = vunpack.c.l.b16 %v3717
    %v4063 = vunpack.c.h.b16 %v3717
    %v4064 = vunpack.c.l.b16 %v3718
    %v4065 = vunpack.c.h.b16 %v3718
    %v4066 = vunpack.c.l.b16 %v3719
    %v4067 = vunpack.c.h.b16 %v3719
    %v4068 = vunpack.c.l.b16 %v3720
    %v4069 = vunpack.c.h.b16 %v3720
    %v4070 = vunpack.c.l.b16 %v3721
    %v4071 = vunpack.c.h.b16 %v3721
    %v4072 = vunpack.c.l.b16 %v3722
    %v4073 = vunpack.c.h.b16 %v3722
    %v4074 = vunpack.c.l.b16 %v3723
    %v4075 = vunpack.c.h.b16 %v3723
    %v4076 = vunpack.c.l.b16 %v3724
    %v4077 = vunpack.c.h.b16 %v3724
    %v4078 = vunpack.c.l.b16 %v3725
    %v4079 = vunpack.c.h.b16 %v3725
    %v4080 = vunpack.c.l.b16 %v3726
    %v4081 = vunpack.c.h.b16 %v3726
    %v4082 = vunpack.c.l.b16 %v3727
    %v4083 = vunpack.c.h.b16 %v3727
    %v4084 = vunpack.c.l.b16 %v3728
    %v4085 = vunpack.c.h.b16 %v3728
    %v4086 = vunpack.c.l.b16 %v3729
    %v4087 = vunpack.c.h.b16 %v3729
    %v4088 = vunpack.c.l.b16 %v3730
    %v4089 = vunpack.c.h.b16 %v3730
    %v4090 = vunpack.c.l.b16 %v3731
    %v4091 = vunpack.c.h.b16 %v3731
    %v4092 = vunpack.c.l.b16 %v3732
    %v4093 = vunpack.c.h.b16 %v3732
    %v4094 = vunpack.c.l.b16 %v3733
    %v4095 = vunpack.c.h.b16 %v3733
    %v4096 = vunpack.c.l.b16 %v3734
    %v4097 = vunpack.c.h.b16 %v3734
    %v4098 = vunpack.c.l.b16 %v3735
    %v4099 = vunpack.c.h.b16 %v3735
    %v4100 = vunpack.c.l.b16 %v3736
    %v4101 = vunpack.c.h.b16 %v3736
    %v4102 = vunpack.c.l.b16 %v3737
    %v4103 = vunpack.c.h.b16 %v3737
    %v4104 = vunpack.c.l.b16 %v3738
    %v4105 = vunpack.c.h.b16 %v3738
    %v4106 = vunpack.c.l.b16 %v3739
    %v4107 = vunpack.c.h.b16 %v3739
    %v4108 = vunpack.c.l.b16 %v3740
    %v4109 = vunpack.c.h.b16 %v3740
    %v4110 = vunpack.c.l.b16 %v3741
    %v4111 = vunpack.c.h.b16 %v3741
    %v4112 = vunpack.c.l.b16 %v3742
    %v4113 = vunpack.c.h.b16 %v3742
    %v4114 = vunpack.c.l.b16 %v3743
    %v4115 = vunpack.c.h.b16 %v3743
    %v4116 = vunpack.c.l.b16 %v3744
    %v4117 = vunpack.c.h.b16 %v3744
    %v4118 = vunpack.c.l.b16 %v3745
    %v4119 = vunpack.c.h.b16 %v3745
    %v4120 = vunpack.c.l.b16 %v3746
    %v4121 = vunpack.c.h.b16 %v3746
    %v4122 = vunpack.c.l.b16 %v3747
    %v4123 = vunpack.c.h.b16 %v3747
    %v4124 = vunpack.c.l.b16 %v3748
    %v4125 = vunpack.c.h.b16 %v3748
    %v4126 = vunpack.c.l.b16 %v3749
    %v4127 = vunpack.c.h.b16 %v3749
    %v4128 = vunpack.c.l.b16 %v3750
    %v4129 = vunpack.c.h.b16 %v3750
    %v4130 = vunpack.c.l.b16 %v3751
    %v4131 = vunpack.c.h.b16 %v3751
    %v4132 = vunpack.c.l.b16 %v3752
    %v4133 = vunpack.c.h.b16 %v3752
    %v4134 = vunpack.c.l.b16 %v3753
    %v4135 = vunpack.c.h.b16 %v3753
    %v4136 = vunpack.c.l.b16 %v3754
    %v4137 = vunpack.c.h.b16 %v3754
    %v4138 = vunpack.c.l.b16 %v3755
    %v4139 = vunpack.c.h.b16 %v3755
    %v4140 = vunpack.c.l.b16 %v3756
    %v4141 = vunpack.c.h.b16 %v3756
    %v4142 = vunpack.c.l.b16 %v3757
    %v4143 = vunpack.c.h.b16 %v3757
    %v4144 = vunpack.c.l.b16 %v3758
    %v4145 = vunpack.c.h.b16 %v3758
    %v4146 = vunpack.c.l.b16 %v3759
    %v4147 = vunpack.c.h.b16 %v3759
    %v4148 = vunpack.c.l.b16 %v3760
    %v4149 = vunpack.c.h.b16 %v3760
    %v4150 = vunpack.c.l.b16 %v3761
    %v4151 = vunpack.c.h.b16 %v3761
    %v4152 = vunpack.c.l.b16 %v3762
    %v4153 = vunpack.c.h.b16 %v3762
    %v4154 = vunpack.c.l.b16 %v3763
    %v4155 = vunpack.c.h.b16 %v3763
    %v4156 = vunpack.c.l.b16 %v3764
    %v4157 = vunpack.c.h.b16 %v3764
    %v4158 = vunpack.c.l.b16 %v3765
    %v4159 = vunpack.c.h.b16 %v3765
    %v4160 = vunpack.c.l.b16 %v3766
    %v4161 = vunpack.c.h.b16 %v3766
    %v4162 = vunpack.c.l.b16 %v3767
    %v4163 = vunpack.c.h.b16 %v3767
    %v4164 = vunpack.c.l.b16 %v3768
    %v4165 = vunpack.c.h.b16 %v3768
    %v4166 = vunpack.c.l.b16 %v3769
    %v4167 = vunpack.c.h.b16 %v3769
    %v4168 = vunpack.c.l.b16 %v3770
    %v4169 = vunpack.c.h.b16 %v3770
    %v4170 = vunpack.c.l.b16 %v3771
    %v4171 = vunpack.c.h.b16 %v3771
    %v4172 = vpack.c.b16 %v3920, %v3916
    %v4173 = vpack.c.b16 %v3921, %v3917
    %v4174 = vpack.c.b16 %v3922, %v3918
    %v4175 = vpack.c.b16 %v3923, %v3919
    %v4176 = vpack.c.b16 %v3928, %v3924
    %v4177 = vpack.c.b16 %v3929, %v3925
    %v4178 = vpack.c.b16 %v3930, %v3926
    %v4179 = vpack.c.b16 %v3931, %v3927
    %v4180 = vpack.c.b16 %v3936, %v3932
    %v4181 = vpack.c.b16 %v3937, %v3933
    %v4182 = vpack.c.b16 %v3938, %v3934
    %v4183 = vpack.c.b16 %v3939, %v3935
    %v4184 = vpack.c.b16 %v3944, %v3940
    %v4185 = vpack.c.b16 %v3945, %v3941
    %v4186 = vpack.c.b16 %v3946, %v3942
    %v4187 = vpack.c.b16 %v3947, %v3943
    %v4188 = vpack.c.b16 %v3952, %v3948
    %v4189 = vpack.c.b16 %v3953, %v3949
    %v4190 = vpack.c.b16 %v3954, %v3950
    %v4191 = vpack.c.b16 %v3955, %v3951
    %v4192 = vpack.c.b16 %v3960, %v3956
    %v4193 = vpack.c.b16 %v3961, %v3957
    %v4194 = vpack.c.b16 %v3962, %v3958
    %v4195 = vpack.c.b16 %v3963, %v3959
    %v4196 = vpack.c.b16 %v3968, %v3964
    %v4197 = vpack.c.b16 %v3969, %v3965
    %v4198 = vpack.c.b16 %v3970, %v3966
    %v4199 = vpack.c.b16 %v3971, %v3967
    %v4200 = vpack.c.b16 %v3976, %v3972
    %v4201 = vpack.c.b16 %v3977, %v3973
    %v4202 = vpack.c.b16 %v3978, %v3974
    %v4203 = vpack.c.b16 %v3979, %v3975
    %v4204 = vpack.c.b16 %v3984, %v3980
    %v4205 = vpack.c.b16 %v3985, %v3981
    %v4206 = vpack.c.b16 %v3986, %v3982
    %v4207 = vpack.c.b16 %v3987, %v3983
    %v4208 = vpack.c.b16 %v3992, %v3988
    %v4209 = vpack.c.b16 %v3993, %v3989
    %v4210 = vpack.c.b16 %v3994, %v3990
    %v4211 = vpack.c.b16 %v3995, %v3991
    %v4212 = vpack.c.b16 %v4000, %v3996
    %v4213 = vpack.c.b16 %v4001, %v3997
    %v4214 = vpack.c.b16 %v4002, %v3998
    %v4215 = vpack.c.b16 %v4003, %v3999
    %v4216 = vpack.c.b16 %v4008, %v4004
    %v4217 = vpack.c.b16 %v4009, %v4005
    %v4218 = vpack.c.b16 %v4010, %v4006
    %v4219 = vpack.c.b16 %v4011, %v4007
    %v4220 = vpack.c.b16 %v4016, %v4012
    %v4221 = vpack.c.b16 %v4017, %v4013
    %v4222 = vpack.c.b16 %v4018, %v4014
    %v4223 = vpack.c.b16 %v4019, %v4015
    %v4224 = vpack.c.b16 %v4024, %v4020
    %v4225 = vpack.c.b16 %v4025, %v4021
    %v4226 = vpack.c.b16 %v4026, %v4022
    %v4227 = vpack.c.b16 %v4027, %v4023
    %v4228 = vpack.c.b16 %v4032, %v4028
    %v4229 = vpack.c.b16 %v4033, %v4029
    %v4230 = vpack.c.b16 %v4034, %v4030
    %v4231 = vpack.c.b16 %v4035, %v4031
    %v4232 = vpack.c.b16 %v4040, %v4036
    %v4233 = vpack.c.b16 %v4041, %v4037
    %v4234 = vpack.c.b16 %v4042, %v4038
    %v4235 = vpack.c.b16 %v4043, %v4039
    %v4236 = vpack.c.b16 %v4048, %v4044
    %v4237 = vpack.c.b16 %v4049, %v4045
    %v4238 = vpack.c.b16 %v4050, %v4046
    %v4239 = vpack.c.b16 %v4051, %v4047
    %v4240 = vpack.c.b16 %v4056, %v4052
    %v4241 = vpack.c.b16 %v4057, %v4053
    %v4242 = vpack.c.b16 %v4058, %v4054
    %v4243 = vpack.c.b16 %v4059, %v4055
    %v4244 = vpack.c.b16 %v4064, %v4060
    %v4245 = vpack.c.b16 %v4065, %v4061
    %v4246 = vpack.c.b16 %v4066, %v4062
    %v4247 = vpack.c.b16 %v4067, %v4063
    %v4248 = vpack.c.b16 %v4072, %v4068
    %v4249 = vpack.c.b16 %v4073, %v4069
    %v4250 = vpack.c.b16 %v4074, %v4070
    %v4251 = vpack.c.b16 %v4075, %v4071
    %v4252 = vpack.c.b16 %v4080, %v4076
    %v4253 = vpack.c.b16 %v4081, %v4077
    %v4254 = vpack.c.b16 %v4082, %v4078
    %v4255 = vpack.c.b16 %v4083, %v4079
    %v4256 = vpack.c.b16 %v4088, %v4084
    %v4257 = vpack.c.b16 %v4089, %v4085
    %v4258 = vpack.c.b16 %v4090, %v4086
    %v4259 = vpack.c.b16 %v4091, %v4087
    %v4260 = vpack.c.b16 %v4096, %v4092
    %v4261 = vpack.c.b16 %v4097, %v4093
    %v4262 = vpack.c.b16 %v4098, %v4094
    %v4263 = vpack.c.b16 %v4099, %v4095
    %v4264 = vpack.c.b16 %v4104, %v4100
    %v4265 = vpack.c.b16 %v4105, %v4101
    %v4266 = vpack.c.b16 %v4106, %v4102
    %v4267 = vpack.c.b16 %v4107, %v4103
    %v4268 = vpack.c.b16 %v4112, %v4108
    %v4269 = vpack.c.b16 %v4113, %v4109
    %v4270 = vpack.c.b16 %v4114, %v4110
    %v4271 = vpack.c.b16 %v4115, %v4111
    %v4272 = vpack.c.b16 %v4120, %v4116
    %v4273 = vpack.c.b16 %v4121, %v4117
    %v4274 = vpack.c.b16 %v4122, %v4118
    %v4275 = vpack.c.b16 %v4123, %v4119
    %v4276 = vpack.c.b16 %v4128, %v4124
    %v4277 = vpack.c.b16 %v4129, %v4125
    %v4278 = vpack.c.b16 %v4130, %v4126
    %v4279 = vpack.c.b16 %v4131, %v4127
    %v4280 = vpack.c.b16 %v4136, %v4132
    %v4281 = vpack.c.b16 %v4137, %v4133
    %v4282 = vpack.c.b16 %v4138, %v4134
    %v4283 = vpack.c.b16 %v4139, %v4135
    %v4284 = vpack.c.b16 %v4144, %v4140
    %v4285 = vpack.c.b16 %v4145, %v4141
    %v4286 = vpack.c.b16 %v4146, %v4142
    %v4287 = vpack.c.b16 %v4147, %v4143
    %v4288 = vpack.c.b16 %v4152, %v4148
    %v4289 = vpack.c.b16 %v4153, %v4149
    %v4290 = vpack.c.b16 %v4154, %v4150
    %v4291 = vpack.c.b16 %v4155, %v4151
    %v4292 = vpack.c.b16 %v4160, %v4156
    %v4293 = vpack.c.b16 %v4161, %v4157
    %v4294 = vpack.c.b16 %v4162, %v4158
    %v4295 = vpack.c.b16 %v4163, %v4159
    %v4296 = vpack.c.b16 %v4168, %v4164
    %v4297 = vpack.c.b16 %v4169, %v4165
    %v4298 = vpack.c.b16 %v4170, %v4166
    %v4299 = vpack.c.b16 %v4171, %v4167
    %4428 = vmatprep.subr.bf16.mxu0 %v4173
    %4429 = vmatpush1.bf16.msra.mxu0 %v4172
    %4430 = vmatprep.subr.bf16.mxu0 %v4177
    %4431 = vmatpush1.bf16.msra.mxu0 %v4176
    %4432 = vmatprep.subr.bf16.mxu0 %v4181
    %4433 = vmatpush1.bf16.msra.mxu0 %v4180
    %4434 = vmatprep.subr.bf16.mxu0 %v4185
    %4435 = vmatpush1.bf16.msra.mxu0 %v4184
    %4436 = vmatprep.subr.bf16.mxu0 %v4189
    %4437 = vmatpush1.bf16.msra.mxu0 %v4188
    %4438 = vmatprep.subr.bf16.mxu0 %v4193
    %4439 = vmatpush1.bf16.msra.mxu0 %v4192
    %4440 = vmatprep.subr.bf16.mxu0 %v4197
    %4441 = vmatpush1.bf16.msra.mxu0 %v4196
    %4442 = vmatprep.subr.bf16.mxu0 %v4201
    %4443 = vmatpush1.bf16.msra.mxu0 %v4200
    %4444 = vmatprep.subr.bf16.mxu0 %v4205
    %4445 = vmatpush1.bf16.msra.mxu0 %v4204
    %4446 = vmatprep.subr.bf16.mxu0 %v4209
    %4447 = vmatpush1.bf16.msra.mxu0 %v4208
    %4448 = vmatprep.subr.bf16.mxu0 %v4213
    %4449 = vmatpush1.bf16.msra.mxu0 %v4212
    %4450 = vmatprep.subr.bf16.mxu0 %v4217
    %4451 = vmatpush1.bf16.msra.mxu0 %v4216
    %4452 = vmatprep.subr.bf16.mxu0 %v4221
    %4453 = vmatpush1.bf16.msra.mxu0 %v4220
    %4454 = vmatprep.subr.bf16.mxu0 %v4225
    %4455 = vmatpush1.bf16.msra.mxu0 %v4224
    %4456 = vmatprep.subr.bf16.mxu0 %v4229
    %4457 = vmatpush1.bf16.msra.mxu0 %v4228
    %4458 = vmatprep.subr.bf16.mxu0 %v4233
    %4459 = vmatpush1.bf16.msra.mxu0 %v4232
    %4460 = vmatprep.mubr.bf16.mxu0 %v3781
    %4461 = vmatmul.mubr.bf16.gmra.mrb[0].mxu0 %v3780
    %v4462 = vpop.f32.mrb[0].mxu0
    %v4463 = vadd.f32 0.0, %v4462
    %v4464 = vpop.f32.mrb[0].mxu0
    %v4465 = vadd.f32 0.0, %v4464
    %v4466 = vpop.f32.mrb[0].mxu0
    %v4467 = vadd.f32 0.0, %v4466
    %v4468 = vpop.f32.mrb[0].mxu0
    %v4469 = vadd.f32 0.0, %v4468
    %4470 = vdwg.mxu0
    %4471 = vmatprep.subr.bf16.mxu0 %v4237
    %4472 = vmatpush1.bf16.msra.mxu0 %v4236
    %4473 = vmatprep.subr.bf16.mxu0 %v4241
    %4474 = vmatpush1.bf16.msra.mxu0 %v4240
    %4475 = vmatprep.subr.bf16.mxu0 %v4245
    %4476 = vmatpush1.bf16.msra.mxu0 %v4244
    %4477 = vmatprep.subr.bf16.mxu0 %v4249
    %4478 = vmatpush1.bf16.msra.mxu0 %v4248
    %4479 = vmatprep.subr.bf16.mxu0 %v4253
    %4480 = vmatpush1.bf16.msra.mxu0 %v4252
    %4481 = vmatprep.subr.bf16.mxu0 %v4257
    %4482 = vmatpush1.bf16.msra.mxu0 %v4256
    %4483 = vmatprep.subr.bf16.mxu0 %v4261
    %4484 = vmatpush1.bf16.msra.mxu0 %v4260
    %4485 = vmatprep.subr.bf16.mxu0 %v4265
    %4486 = vmatpush1.bf16.msra.mxu0 %v4264
    %4487 = vmatprep.subr.bf16.mxu0 %v4269
    %4488 = vmatpush1.bf16.msra.mxu0 %v4268
    %4489 = vmatprep.subr.bf16.mxu0 %v4273
    %4490 = vmatpush1.bf16.msra.mxu0 %v4272
    %4491 = vmatprep.subr.bf16.mxu0 %v4277
    %4492 = vmatpush1.bf16.msra.mxu0 %v4276
    %4493 = vmatprep.subr.bf16.mxu0 %v4281
    %4494 = vmatpush1.bf16.msra.mxu0 %v4280
    %4495 = vmatprep.subr.bf16.mxu0 %v4285
    %4496 = vmatpush1.bf16.msra.mxu0 %v4284
    %4497 = vmatprep.subr.bf16.mxu0 %v4289
    %4498 = vmatpush1.bf16.msra.mxu0 %v4288
    %4499 = vmatprep.subr.bf16.mxu0 %v4293
    %4500 = vmatpush1.bf16.msra.mxu0 %v4292
    %4501 = vmatprep.subr.bf16.mxu0 %v4297
    %4502 = vmatpush1.bf16.msra.mxu0 %v4296
    %4503 = vmatprep.mubr.bf16.mxu0 %v3783
    %4504 = vmatmul.mubr.bf16.gmra.mrb[0].mxu0 %v3782
    %v4505 = vpop.f32.mrb[0].mxu0
    %v4506 = vadd.f32 %v4463, %v4505
    %v4507 = vpop.f32.mrb[0].mxu0
    %v4508 = vadd.f32 %v4465, %v4507
    %v4509 = vpop.f32.mrb[0].mxu0
    %v4510 = vadd.f32 %v4467, %v4509
    %v4511 = vpop.f32.mrb[0].mxu0
    %v4512 = vadd.f32 %v4469, %v4511
    %4513 = vdwg.mxu0
    %4514 = vmatprep.subr.bf16.mxu0 %v4175
    %4515 = vmatpush1.bf16.msra.mxu0 %v4174
    %4516 = vmatprep.subr.bf16.mxu0 %v4179
    %4517 = vmatpush1.bf16.msra.mxu0 %v4178
    %4518 = vmatprep.subr.bf16.mxu0 %v4183
    %4519 = vmatpush1.bf16.msra.mxu0 %v4182
    %4520 = vmatprep.subr.bf16.mxu0 %v4187
    %4521 = vmatpush1.bf16.msra.mxu0 %v4186
    %4522 = vmatprep.subr.bf16.mxu0 %v4191
    %4523 = vmatpush1.bf16.msra.mxu0 %v4190
    %4524 = vmatprep.subr.bf16.mxu0 %v4195
    %4525 = vmatpush1.bf16.msra.mxu0 %v4194
    %4526 = vmatprep.subr.bf16.mxu0 %v4199
    %4527 = vmatpush1.bf16.msra.mxu0 %v4198
    %4528 = vmatprep.subr.bf16.mxu0 %v4203
    %4529 = vmatpush1.bf16.msra.mxu0 %v4202
    %4530 = vmatprep.subr.bf16.mxu0 %v4207
    %4531 = vmatpush1.bf16.msra.mxu0 %v4206
    %4532 = vmatprep.subr.bf16.mxu0 %v4211
    %4533 = vmatpush1.bf16.msra.mxu0 %v4210
    %4534 = vmatprep.subr.bf16.mxu0 %v4215
    %4535 = vmatpush1.bf16.msra.mxu0 %v4214
    %4536 = vmatprep.subr.bf16.mxu0 %v4219
    %4537 = vmatpush1.bf16.msra.mxu0 %v4218
    %4538 = vmatprep.subr.bf16.mxu0 %v4223
    %4539 = vmatpush1.bf16.msra.mxu0 %v4222
    %4540 = vmatprep.subr.bf16.mxu0 %v4227
    %4541 = vmatpush1.bf16.msra.mxu0 %v4226
    %4542 = vmatprep.subr.bf16.mxu0 %v4231
    %4543 = vmatpush1.bf16.msra.mxu0 %v4230
    %4544 = vmatprep.subr.bf16.mxu0 %v4235
    %4545 = vmatpush1.bf16.msra.mxu0 %v4234
    %4546 = vmatprep.mubr.bf16.mxu0 %v3781
    %4547 = vmatmul.mubr.bf16.gmra.mrb[0].mxu0 %v3780
    %v4548 = vpop.f32.mrb[0].mxu0
    %v4549 = vadd.f32 0.0, %v4548
    %v4550 = vpop.f32.mrb[0].mxu0
    %v4551 = vadd.f32 0.0, %v4550
    %v4552 = vpop.f32.mrb[0].mxu0
    %v4553 = vadd.f32 0.0, %v4552
    %v4554 = vpop.f32.mrb[0].mxu0
    %v4555 = vadd.f32 0.0, %v4554
    %4556 = vdwg.mxu0
    %4557 = vmatprep.subr.bf16.mxu0 %v4239
    %4558 = vmatpush1.bf16.msra.mxu0 %v4238
    %4559 = vmatprep.subr.bf16.mxu0 %v4243
    %4560 = vmatpush1.bf16.msra.mxu0 %v4242
    %4561 = vmatprep.subr.bf16.mxu0 %v4247
    %4562 = vmatpush1.bf16.msra.mxu0 %v4246
    %4563 = vmatprep.subr.bf16.mxu0 %v4251
    %4564 = vmatpush1.bf16.msra.mxu0 %v4250
    %4565 = vmatprep.subr.bf16.mxu0 %v4255
    %4566 = vmatpush1.bf16.msra.mxu0 %v4254
    %4567 = vmatprep.subr.bf16.mxu0 %v4259
    %4568 = vmatpush1.bf16.msra.mxu0 %v4258
    %4569 = vmatprep.subr.bf16.mxu0 %v4263
    %4570 = vmatpush1.bf16.msra.mxu0 %v4262
    %4571 = vmatprep.subr.bf16.mxu0 %v4267
    %4572 = vmatpush1.bf16.msra.mxu0 %v4266
    %4573 = vmatprep.subr.bf16.mxu0 %v4271
    %4574 = vmatpush1.bf16.msra.mxu0 %v4270
    %4575 = vmatprep.subr.bf16.mxu0 %v4275
    %4576 = vmatpush1.bf16.msra.mxu0 %v4274
    %4577 = vmatprep.subr.bf16.mxu0 %v4279
    %4578 = vmatpush1.bf16.msra.mxu0 %v4278
    %4579 = vmatprep.subr.bf16.mxu0 %v4283
    %4580 = vmatpush1.bf16.msra.mxu0 %v4282
    %4581 = vmatprep.subr.bf16.mxu0 %v4287
    %4582 = vmatpush1.bf16.msra.mxu0 %v4286
    %4583 = vmatprep.subr.bf16.mxu0 %v4291
    %4584 = vmatpush1.bf16.msra.mxu0 %v4290
    %4585 = vmatprep.subr.bf16.mxu0 %v4295
    %4586 = vmatpush1.bf16.msra.mxu0 %v4294
    %4587 = vmatprep.subr.bf16.mxu0 %v4299
    %4588 = vmatpush1.bf16.msra.mxu0 %v4298
    %4589 = vmatprep.mubr.bf16.mxu0 %v3783
    %4590 = vmatmul.mubr.bf16.gmra.mrb[0].mxu0 %v3782
    %v4591 = vpop.f32.mrb[0].mxu0
    %v4592 = vadd.f32 %v4549, %v4591
    %v4593 = vpop.f32.mrb[0].mxu0
    %v4594 = vadd.f32 %v4551, %v4593
    %v4595 = vpop.f32.mrb[0].mxu0
    %v4596 = vadd.f32 %v4553, %v4595
    %v4597 = vpop.f32.mrb[0].mxu0
    %v4598 = vadd.f32 %v4555, %v4597
    %4599 = vdwg.mxu0
    %v4600 = vadd.f32 %v3530, %v4506
    %v4601 = vadd.f32 %v3532, %v4508
    %v4602 = vadd.f32 %v3616, %v4592
    %v4603 = vadd.f32 %v3618, %v4594
    %v4604 = vadd.f32 %v3534, %v4510
    %v4605 = vadd.f32 %v3536, %v4512
    %v4606 = vadd.f32 %v3620, %v4596
    %v4607 = vadd.f32 %v3622, %v4598
    %v4608 = vld [vmem:[#allocation14] sm:$0xf]
    %v4610 = vlaneseq
    %v4611 = vshrl.u32 %v4610, 7
    %v4612 = vsub.s32 0, %v4611
    %v4613 = vrot.slane %v4608, %v4612
    %v4614 = vlaneseq
    %v4615 = vshrl.u32 %v4614, 7
    %v4616 = vsub.s32 1, %v4615
    %v4617 = vrot.slane %v4608, %v4616
    %v4618 = vlaneseq
    %v4619 = vshrl.u32 %v4618, 7
    %v4620 = vsub.s32 2, %v4619
    %v4621 = vrot.slane %v4608, %v4620
    %v4622 = vlaneseq
    %v4623 = vshrl.u32 %v4622, 7
    %v4624 = vsub.s32 3, %v4623
    %v4625 = vrot.slane %v4608, %v4624
    %v4630 = vadd.f32 %v4600, %v4613
    %v4631 = vadd.f32 %v4601, %v4617
    %v4632 = vadd.f32 %v4602, %v4621
    %v4633 = vadd.f32 %v4603, %v4625
    %v4634 = vadd.f32 %v4604, %v4613
    %v4635 = vadd.f32 %v4605, %v4617
    %v4636 = vadd.f32 %v4606, %v4621
    %v4637 = vadd.f32 %v4607, %v4625
    %v4638 = vld [vmem:[#allocation18] sm:$0xff]
    %v4639 = vld [vmem:[#allocation18 + $0x8] sm:$0xff]
    %v4640 = vld [vmem:[#allocation18 + $0x10] sm:$0xff]
    %v4641 = vld [vmem:[#allocation18 + $0x18] sm:$0xff]
    %v4642 = vld [vmem:[#allocation18 + $0x20] sm:$0xff]
    %v4643 = vld [vmem:[#allocation18 + $0x28] sm:$0xff]
    %v4644 = vld [vmem:[#allocation18 + $0x30] sm:$0xff]
    %v4645 = vld [vmem:[#allocation18 + $0x38] sm:$0xff]
    %v4646 = vld [vmem:[#allocation18 + $0x40] sm:$0xff]
    %v4647 = vld [vmem:[#allocation18 + $0x48] sm:$0xff]
    %v4648 = vld [vmem:[#allocation18 + $0x50] sm:$0xff]
    %v4649 = vld [vmem:[#allocation18 + $0x58] sm:$0xff]
    %v4650 = vld [vmem:[#allocation18 + $0x60] sm:$0xff]
    %v4651 = vld [vmem:[#allocation18 + $0x68] sm:$0xff]
    %v4652 = vld [vmem:[#allocation18 + $0x70] sm:$0xff]
    %v4653 = vld [vmem:[#allocation18 + $0x78] sm:$0xff]
    %v4654 = vld [vmem:[#allocation18 + $0x80] sm:$0xff]
    %v4655 = vld [vmem:[#allocation18 + $0x88] sm:$0xff]
    %v4656 = vld [vmem:[#allocation18 + $0x90] sm:$0xff]
    %v4657 = vld [vmem:[#allocation18 + $0x98] sm:$0xff]
    %v4658 = vld [vmem:[#allocation18 + $0xa0] sm:$0xff]
    %v4659 = vld [vmem:[#allocation18 + $0xa8] sm:$0xff]
    %v4660 = vld [vmem:[#allocation18 + $0xb0] sm:$0xff]
    %v4661 = vld [vmem:[#allocation18 + $0xb8] sm:$0xff]
    %v4662 = vld [vmem:[#allocation18 + $0xc0] sm:$0xff]
    %v4663 = vld [vmem:[#allocation18 + $0xc8] sm:$0xff]
    %v4664 = vld [vmem:[#allocation18 + $0xd0] sm:$0xff]
    %v4665 = vld [vmem:[#allocation18 + $0xd8] sm:$0xff]
    %v4666 = vld [vmem:[#allocation18 + $0xe0] sm:$0xff]
    %v4667 = vld [vmem:[#allocation18 + $0xe8] sm:$0xff]
    %v4668 = vld [vmem:[#allocation18 + $0xf0] sm:$0xff]
    %v4669 = vld [vmem:[#allocation18 + $0xf8] sm:$0xff]
    %v4670 = vld [vmem:[#allocation18 + $0x100] sm:$0xff]
    %v4671 = vld [vmem:[#allocation18 + $0x108] sm:$0xff]
    %v4672 = vld [vmem:[#allocation18 + $0x110] sm:$0xff]
    %v4673 = vld [vmem:[#allocation18 + $0x118] sm:$0xff]
    %v4674 = vld [vmem:[#allocation18 + $0x120] sm:$0xff]
    %v4675 = vld [vmem:[#allocation18 + $0x128] sm:$0xff]
    %v4676 = vld [vmem:[#allocation18 + $0x130] sm:$0xff]
    %v4677 = vld [vmem:[#allocation18 + $0x138] sm:$0xff]
    %v4678 = vld [vmem:[#allocation18 + $0x140] sm:$0xff]
    %v4679 = vld [vmem:[#allocation18 + $0x148] sm:$0xff]
    %v4680 = vld [vmem:[#allocation18 + $0x150] sm:$0xff]
    %v4681 = vld [vmem:[#allocation18 + $0x158] sm:$0xff]
    %v4682 = vld [vmem:[#allocation18 + $0x160] sm:$0xff]
    %v4683 = vld [vmem:[#allocation18 + $0x168] sm:$0xff]
    %v4684 = vld [vmem:[#allocation18 + $0x170] sm:$0xff]
    %v4685 = vld [vmem:[#allocation18 + $0x178] sm:$0xff]
    %v4686 = vld [vmem:[#allocation18 + $0x180] sm:$0xff]
    %v4687 = vld [vmem:[#allocation18 + $0x188] sm:$0xff]
    %v4688 = vld [vmem:[#allocation18 + $0x190] sm:$0xff]
    %v4689 = vld [vmem:[#allocation18 + $0x198] sm:$0xff]
    %v4690 = vld [vmem:[#allocation18 + $0x1a0] sm:$0xff]
    %v4691 = vld [vmem:[#allocation18 + $0x1a8] sm:$0xff]
    %v4692 = vld [vmem:[#allocation18 + $0x1b0] sm:$0xff]
    %v4693 = vld [vmem:[#allocation18 + $0x1b8] sm:$0xff]
    %v4694 = vld [vmem:[#allocation18 + $0x1c0] sm:$0xff]
    %v4695 = vld [vmem:[#allocation18 + $0x1c8] sm:$0xff]
    %v4696 = vld [vmem:[#allocation18 + $0x1d0] sm:$0xff]
    %v4697 = vld [vmem:[#allocation18 + $0x1d8] sm:$0xff]
    %v4698 = vld [vmem:[#allocation18 + $0x1e0] sm:$0xff]
    %v4699 = vld [vmem:[#allocation18 + $0x1e8] sm:$0xff]
    %v4700 = vld [vmem:[#allocation18 + $0x1f0] sm:$0xff]
    %v4701 = vld [vmem:[#allocation18 + $0x1f8] sm:$0xff]
    %v4702 = vld [vmem:[#allocation18 + $0x200] sm:$0xff]
    %v4703 = vld [vmem:[#allocation18 + $0x208] sm:$0xff]
    %v4704 = vld [vmem:[#allocation18 + $0x210] sm:$0xff]
    %v4705 = vld [vmem:[#allocation18 + $0x218] sm:$0xff]
    %v4706 = vld [vmem:[#allocation18 + $0x220] sm:$0xff]
    %v4707 = vld [vmem:[#allocation18 + $0x228] sm:$0xff]
    %v4708 = vld [vmem:[#allocation18 + $0x230] sm:$0xff]
    %v4709 = vld [vmem:[#allocation18 + $0x238] sm:$0xff]
    %v4710 = vld [vmem:[#allocation18 + $0x240] sm:$0xff]
    %v4711 = vld [vmem:[#allocation18 + $0x248] sm:$0xff]
    %v4712 = vld [vmem:[#allocation18 + $0x250] sm:$0xff]
    %v4713 = vld [vmem:[#allocation18 + $0x258] sm:$0xff]
    %v4714 = vld [vmem:[#allocation18 + $0x260] sm:$0xff]
    %v4715 = vld [vmem:[#allocation18 + $0x268] sm:$0xff]
    %v4716 = vld [vmem:[#allocation18 + $0x270] sm:$0xff]
    %v4717 = vld [vmem:[#allocation18 + $0x278] sm:$0xff]
    %v4718 = vld [vmem:[#allocation18 + $0x280] sm:$0xff]
    %v4719 = vld [vmem:[#allocation18 + $0x288] sm:$0xff]
    %v4720 = vld [vmem:[#allocation18 + $0x290] sm:$0xff]
    %v4721 = vld [vmem:[#allocation18 + $0x298] sm:$0xff]
    %v4722 = vld [vmem:[#allocation18 + $0x2a0] sm:$0xff]
    %v4723 = vld [vmem:[#allocation18 + $0x2a8] sm:$0xff]
    %v4724 = vld [vmem:[#allocation18 + $0x2b0] sm:$0xff]
    %v4725 = vld [vmem:[#allocation18 + $0x2b8] sm:$0xff]
    %v4726 = vld [vmem:[#allocation18 + $0x2c0] sm:$0xff]
    %v4727 = vld [vmem:[#allocation18 + $0x2c8] sm:$0xff]
    %v4728 = vld [vmem:[#allocation18 + $0x2d0] sm:$0xff]
    %v4729 = vld [vmem:[#allocation18 + $0x2d8] sm:$0xff]
    %v4730 = vld [vmem:[#allocation18 + $0x2e0] sm:$0xff]
    %v4731 = vld [vmem:[#allocation18 + $0x2e8] sm:$0xff]
    %v4732 = vld [vmem:[#allocation18 + $0x2f0] sm:$0xff]
    %v4733 = vld [vmem:[#allocation18 + $0x2f8] sm:$0xff]
    %v4734 = vld [vmem:[#allocation18 + $0x300] sm:$0xff]
    %v4735 = vld [vmem:[#allocation18 + $0x308] sm:$0xff]
    %v4736 = vld [vmem:[#allocation18 + $0x310] sm:$0xff]
    %v4737 = vld [vmem:[#allocation18 + $0x318] sm:$0xff]
    %v4738 = vld [vmem:[#allocation18 + $0x320] sm:$0xff]
    %v4739 = vld [vmem:[#allocation18 + $0x328] sm:$0xff]
    %v4740 = vld [vmem:[#allocation18 + $0x330] sm:$0xff]
    %v4741 = vld [vmem:[#allocation18 + $0x338] sm:$0xff]
    %v4742 = vld [vmem:[#allocation18 + $0x340] sm:$0xff]
    %v4743 = vld [vmem:[#allocation18 + $0x348] sm:$0xff]
    %v4744 = vld [vmem:[#allocation18 + $0x350] sm:$0xff]
    %v4745 = vld [vmem:[#allocation18 + $0x358] sm:$0xff]
    %v4746 = vld [vmem:[#allocation18 + $0x360] sm:$0xff]
    %v4747 = vld [vmem:[#allocation18 + $0x368] sm:$0xff]
    %v4748 = vld [vmem:[#allocation18 + $0x370] sm:$0xff]
    %v4749 = vld [vmem:[#allocation18 + $0x378] sm:$0xff]
    %v4750 = vld [vmem:[#allocation18 + $0x380] sm:$0xff]
    %v4751 = vld [vmem:[#allocation18 + $0x388] sm:$0xff]
    %v4752 = vld [vmem:[#allocation18 + $0x390] sm:$0xff]
    %v4753 = vld [vmem:[#allocation18 + $0x398] sm:$0xff]
    %v4754 = vld [vmem:[#allocation18 + $0x3a0] sm:$0xff]
    %v4755 = vld [vmem:[#allocation18 + $0x3a8] sm:$0xff]
    %v4756 = vld [vmem:[#allocation18 + $0x3b0] sm:$0xff]
    %v4757 = vld [vmem:[#allocation18 + $0x3b8] sm:$0xff]
    %v4758 = vld [vmem:[#allocation18 + $0x3c0] sm:$0xff]
    %v4759 = vld [vmem:[#allocation18 + $0x3c8] sm:$0xff]
    %v4760 = vld [vmem:[#allocation18 + $0x3d0] sm:$0xff]
    %v4761 = vld [vmem:[#allocation18 + $0x3d8] sm:$0xff]
    %v4762 = vld [vmem:[#allocation18 + $0x3e0] sm:$0xff]
    %v4763 = vld [vmem:[#allocation18 + $0x3e8] sm:$0xff]
    %v4764 = vld [vmem:[#allocation18 + $0x3f0] sm:$0xff]
    %v4765 = vld [vmem:[#allocation18 + $0x3f8] sm:$0xff]
    %v4766 = vld [vmem:[#allocation18 + $0x400] sm:$0xff]
    %v4767 = vld [vmem:[#allocation18 + $0x408] sm:$0xff]
    %v4768 = vld [vmem:[#allocation18 + $0x410] sm:$0xff]
    %v4769 = vld [vmem:[#allocation18 + $0x418] sm:$0xff]
    %v4770 = vld [vmem:[#allocation18 + $0x420] sm:$0xff]
    %v4771 = vld [vmem:[#allocation18 + $0x428] sm:$0xff]
    %v4772 = vld [vmem:[#allocation18 + $0x430] sm:$0xff]
    %v4773 = vld [vmem:[#allocation18 + $0x438] sm:$0xff]
    %v4774 = vld [vmem:[#allocation18 + $0x440] sm:$0xff]
    %v4775 = vld [vmem:[#allocation18 + $0x448] sm:$0xff]
    %v4776 = vld [vmem:[#allocation18 + $0x450] sm:$0xff]
    %v4777 = vld [vmem:[#allocation18 + $0x458] sm:$0xff]
    %v4778 = vld [vmem:[#allocation18 + $0x460] sm:$0xff]
    %v4779 = vld [vmem:[#allocation18 + $0x468] sm:$0xff]
    %v4780 = vld [vmem:[#allocation18 + $0x470] sm:$0xff]
    %v4781 = vld [vmem:[#allocation18 + $0x478] sm:$0xff]
    %v4782 = vld [vmem:[#allocation18 + $0x480] sm:$0xff]
    %v4783 = vld [vmem:[#allocation18 + $0x488] sm:$0xff]
    %v4784 = vld [vmem:[#allocation18 + $0x490] sm:$0xff]
    %v4785 = vld [vmem:[#allocation18 + $0x498] sm:$0xff]
    %v4786 = vld [vmem:[#allocation18 + $0x4a0] sm:$0xff]
    %v4787 = vld [vmem:[#allocation18 + $0x4a8] sm:$0xff]
    %v4788 = vld [vmem:[#allocation18 + $0x4b0] sm:$0xff]
    %v4789 = vld [vmem:[#allocation18 + $0x4b8] sm:$0xff]
    %v4790 = vld [vmem:[#allocation18 + $0x4c0] sm:$0xff]
    %v4791 = vld [vmem:[#allocation18 + $0x4c8] sm:$0xff]
    %v4792 = vld [vmem:[#allocation18 + $0x4d0] sm:$0xff]
    %v4793 = vld [vmem:[#allocation18 + $0x4d8] sm:$0xff]
    %v4794 = vld [vmem:[#allocation18 + $0x4e0] sm:$0xff]
    %v4795 = vld [vmem:[#allocation18 + $0x4e8] sm:$0xff]
    %v4796 = vld [vmem:[#allocation18 + $0x4f0] sm:$0xff]
    %v4797 = vld [vmem:[#allocation18 + $0x4f8] sm:$0xff]
    %v4798 = vld [vmem:[#allocation18 + $0x500] sm:$0xff]
    %v4799 = vld [vmem:[#allocation18 + $0x508] sm:$0xff]
    %v4800 = vld [vmem:[#allocation18 + $0x510] sm:$0xff]
    %v4801 = vld [vmem:[#allocation18 + $0x518] sm:$0xff]
    %v4802 = vld [vmem:[#allocation18 + $0x520] sm:$0xff]
    %v4803 = vld [vmem:[#allocation18 + $0x528] sm:$0xff]
    %v4804 = vld [vmem:[#allocation18 + $0x530] sm:$0xff]
    %v4805 = vld [vmem:[#allocation18 + $0x538] sm:$0xff]
    %v4806 = vld [vmem:[#allocation18 + $0x540] sm:$0xff]
    %v4807 = vld [vmem:[#allocation18 + $0x548] sm:$0xff]
    %v4808 = vld [vmem:[#allocation18 + $0x550] sm:$0xff]
    %v4809 = vld [vmem:[#allocation18 + $0x558] sm:$0xff]
    %v4810 = vld [vmem:[#allocation18 + $0x560] sm:$0xff]
    %v4811 = vld [vmem:[#allocation18 + $0x568] sm:$0xff]
    %v4812 = vld [vmem:[#allocation18 + $0x570] sm:$0xff]
    %v4813 = vld [vmem:[#allocation18 + $0x578] sm:$0xff]
    %v4814 = vld [vmem:[#allocation18 + $0x580] sm:$0xff]
    %v4815 = vld [vmem:[#allocation18 + $0x588] sm:$0xff]
    %v4816 = vld [vmem:[#allocation18 + $0x590] sm:$0xff]
    %v4817 = vld [vmem:[#allocation18 + $0x598] sm:$0xff]
    %v4818 = vld [vmem:[#allocation18 + $0x5a0] sm:$0xff]
    %v4819 = vld [vmem:[#allocation18 + $0x5a8] sm:$0xff]
    %v4820 = vld [vmem:[#allocation18 + $0x5b0] sm:$0xff]
    %v4821 = vld [vmem:[#allocation18 + $0x5b8] sm:$0xff]
    %v4822 = vld [vmem:[#allocation18 + $0x5c0] sm:$0xff]
    %v4823 = vld [vmem:[#allocation18 + $0x5c8] sm:$0xff]
    %v4824 = vld [vmem:[#allocation18 + $0x5d0] sm:$0xff]
    %v4825 = vld [vmem:[#allocation18 + $0x5d8] sm:$0xff]
    %v4826 = vld [vmem:[#allocation18 + $0x5e0] sm:$0xff]
    %v4827 = vld [vmem:[#allocation18 + $0x5e8] sm:$0xff]
    %v4828 = vld [vmem:[#allocation18 + $0x5f0] sm:$0xff]
    %v4829 = vld [vmem:[#allocation18 + $0x5f8] sm:$0xff]
    %v4830 = vld [vmem:[#allocation18 + $0x600] sm:$0xff]
    %v4831 = vld [vmem:[#allocation18 + $0x608] sm:$0xff]
    %v4832 = vld [vmem:[#allocation18 + $0x610] sm:$0xff]
    %v4833 = vld [vmem:[#allocation18 + $0x618] sm:$0xff]
    %v4834 = vld [vmem:[#allocation18 + $0x620] sm:$0xff]
    %v4835 = vld [vmem:[#allocation18 + $0x628] sm:$0xff]
    %v4836 = vld [vmem:[#allocation18 + $0x630] sm:$0xff]
    %v4837 = vld [vmem:[#allocation18 + $0x638] sm:$0xff]
    %v4838 = vld [vmem:[#allocation18 + $0x640] sm:$0xff]
    %v4839 = vld [vmem:[#allocation18 + $0x648] sm:$0xff]
    %v4840 = vld [vmem:[#allocation18 + $0x650] sm:$0xff]
    %v4841 = vld [vmem:[#allocation18 + $0x658] sm:$0xff]
    %v4842 = vld [vmem:[#allocation18 + $0x660] sm:$0xff]
    %v4843 = vld [vmem:[#allocation18 + $0x668] sm:$0xff]
    %v4844 = vld [vmem:[#allocation18 + $0x670] sm:$0xff]
    %v4845 = vld [vmem:[#allocation18 + $0x678] sm:$0xff]
    %v4846 = vld [vmem:[#allocation18 + $0x680] sm:$0xff]
    %v4847 = vld [vmem:[#allocation18 + $0x688] sm:$0xff]
    %v4848 = vld [vmem:[#allocation18 + $0x690] sm:$0xff]
    %v4849 = vld [vmem:[#allocation18 + $0x698] sm:$0xff]
    %v4850 = vld [vmem:[#allocation18 + $0x6a0] sm:$0xff]
    %v4851 = vld [vmem:[#allocation18 + $0x6a8] sm:$0xff]
    %v4852 = vld [vmem:[#allocation18 + $0x6b0] sm:$0xff]
    %v4853 = vld [vmem:[#allocation18 + $0x6b8] sm:$0xff]
    %v4854 = vld [vmem:[#allocation18 + $0x6c0] sm:$0xff]
    %v4855 = vld [vmem:[#allocation18 + $0x6c8] sm:$0xff]
    %v4856 = vld [vmem:[#allocation18 + $0x6d0] sm:$0xff]
    %v4857 = vld [vmem:[#allocation18 + $0x6d8] sm:$0xff]
    %v4858 = vld [vmem:[#allocation18 + $0x6e0] sm:$0xff]
    %v4859 = vld [vmem:[#allocation18 + $0x6e8] sm:$0xff]
    %v4860 = vld [vmem:[#allocation18 + $0x6f0] sm:$0xff]
    %v4861 = vld [vmem:[#allocation18 + $0x6f8] sm:$0xff]
    %v4862 = vld [vmem:[#allocation18 + $0x700] sm:$0xff]
    %v4863 = vld [vmem:[#allocation18 + $0x708] sm:$0xff]
    %v4864 = vld [vmem:[#allocation18 + $0x710] sm:$0xff]
    %v4865 = vld [vmem:[#allocation18 + $0x718] sm:$0xff]
    %v4866 = vld [vmem:[#allocation18 + $0x720] sm:$0xff]
    %v4867 = vld [vmem:[#allocation18 + $0x728] sm:$0xff]
    %v4868 = vld [vmem:[#allocation18 + $0x730] sm:$0xff]
    %v4869 = vld [vmem:[#allocation18 + $0x738] sm:$0xff]
    %v4870 = vld [vmem:[#allocation18 + $0x740] sm:$0xff]
    %v4871 = vld [vmem:[#allocation18 + $0x748] sm:$0xff]
    %v4872 = vld [vmem:[#allocation18 + $0x750] sm:$0xff]
    %v4873 = vld [vmem:[#allocation18 + $0x758] sm:$0xff]
    %v4874 = vld [vmem:[#allocation18 + $0x760] sm:$0xff]
    %v4875 = vld [vmem:[#allocation18 + $0x768] sm:$0xff]
    %v4876 = vld [vmem:[#allocation18 + $0x770] sm:$0xff]
    %v4877 = vld [vmem:[#allocation18 + $0x778] sm:$0xff]
    %v4878 = vld [vmem:[#allocation18 + $0x780] sm:$0xff]
    %v4879 = vld [vmem:[#allocation18 + $0x788] sm:$0xff]
    %v4880 = vld [vmem:[#allocation18 + $0x790] sm:$0xff]
    %v4881 = vld [vmem:[#allocation18 + $0x798] sm:$0xff]
    %v4882 = vld [vmem:[#allocation18 + $0x7a0] sm:$0xff]
    %v4883 = vld [vmem:[#allocation18 + $0x7a8] sm:$0xff]
    %v4884 = vld [vmem:[#allocation18 + $0x7b0] sm:$0xff]
    %v4885 = vld [vmem:[#allocation18 + $0x7b8] sm:$0xff]
    %v4886 = vld [vmem:[#allocation18 + $0x7c0] sm:$0xff]
    %v4887 = vld [vmem:[#allocation18 + $0x7c8] sm:$0xff]
    %v4888 = vld [vmem:[#allocation18 + $0x7d0] sm:$0xff]
    %v4889 = vld [vmem:[#allocation18 + $0x7d8] sm:$0xff]
    %v4890 = vld [vmem:[#allocation18 + $0x7e0] sm:$0xff]
    %v4891 = vld [vmem:[#allocation18 + $0x7e8] sm:$0xff]
    %v4892 = vld [vmem:[#allocation18 + $0x7f0] sm:$0xff]
    %v4893 = vld [vmem:[#allocation18 + $0x7f8] sm:$0xff]
    %4894 = vmatprep.subr.mxu0 %v4639
    %4895 = vmatpush1.msra.mxu0 %v4638
    %4896 = vmatprep.subr.mxu0 %v4643
    %4897 = vmatpush1.msra.mxu0 %v4642
    %4898 = vmatprep.subr.mxu0 %v4647
    %4899 = vmatpush1.msra.mxu0 %v4646
    %4900 = vmatprep.subr.mxu0 %v4651
    %4901 = vmatpush1.msra.mxu0 %v4650
    %4902 = vmatprep.subr.mxu0 %v4655
    %4903 = vmatpush1.msra.mxu0 %v4654
    %4904 = vmatprep.subr.mxu0 %v4659
    %4905 = vmatpush1.msra.mxu0 %v4658
    %4906 = vmatprep.subr.mxu0 %v4663
    %4907 = vmatpush1.msra.mxu0 %v4662
    %4908 = vmatprep.subr.mxu0 %v4667
    %4909 = vmatpush1.msra.mxu0 %v4666
    %4910 = vmatprep.subr.mxu0 %v4671
    %4911 = vmatpush1.msra.mxu0 %v4670
    %4912 = vmatprep.subr.mxu0 %v4675
    %4913 = vmatpush1.msra.mxu0 %v4674
    %4914 = vmatprep.subr.mxu0 %v4679
    %4915 = vmatpush1.msra.mxu0 %v4678
    %4916 = vmatprep.subr.mxu0 %v4683
    %4917 = vmatpush1.msra.mxu0 %v4682
    %4918 = vmatprep.subr.mxu0 %v4687
    %4919 = vmatpush1.msra.mxu0 %v4686
    %4920 = vmatprep.subr.mxu0 %v4691
    %4921 = vmatpush1.msra.mxu0 %v4690
    %4922 = vmatprep.subr.mxu0 %v4695
    %4923 = vmatpush1.msra.mxu0 %v4694
    %4924 = vmatprep.subr.mxu0 %v4699
    %4925 = vmatpush1.msra.mxu0 %v4698
    %4926 = vmatprep.subr.mxu0 %v4703
    %4927 = vmatpush1.msra.mxu0 %v4702
    %4928 = vmatprep.subr.mxu0 %v4707
    %4929 = vmatpush1.msra.mxu0 %v4706
    %4930 = vmatprep.subr.mxu0 %v4711
    %4931 = vmatpush1.msra.mxu0 %v4710
    %4932 = vmatprep.subr.mxu0 %v4715
    %4933 = vmatpush1.msra.mxu0 %v4714
    %4934 = vmatprep.subr.mxu0 %v4719
    %4935 = vmatpush1.msra.mxu0 %v4718
    %4936 = vmatprep.subr.mxu0 %v4723
    %4937 = vmatpush1.msra.mxu0 %v4722
    %4938 = vmatprep.subr.mxu0 %v4727
    %4939 = vmatpush1.msra.mxu0 %v4726
    %4940 = vmatprep.subr.mxu0 %v4731
    %4941 = vmatpush1.msra.mxu0 %v4730
    %4942 = vmatprep.subr.mxu0 %v4735
    %4943 = vmatpush1.msra.mxu0 %v4734
    %4944 = vmatprep.subr.mxu0 %v4739
    %4945 = vmatpush1.msra.mxu0 %v4738
    %4946 = vmatprep.subr.mxu0 %v4743
    %4947 = vmatpush1.msra.mxu0 %v4742
    %4948 = vmatprep.subr.mxu0 %v4747
    %4949 = vmatpush1.msra.mxu0 %v4746
    %4950 = vmatprep.subr.mxu0 %v4751
    %4951 = vmatpush1.msra.mxu0 %v4750
    %4952 = vmatprep.subr.mxu0 %v4755
    %4953 = vmatpush1.msra.mxu0 %v4754
    %4954 = vmatprep.subr.mxu0 %v4759
    %4955 = vmatpush1.msra.mxu0 %v4758
    %4956 = vmatprep.subr.mxu0 %v4763
    %4957 = vmatpush1.msra.mxu0 %v4762
    %4958 = vmatprep.mubr.f32.mxu0 %v4631
    %4959 = vmatmul.mubr.f32.gmra.mrb[0].mxu0 %v4630
    %v4960 = vpop.f32.mrb[0].mxu0
    %v4961 = vadd.f32 0.0, %v4960
    %v4962 = vpop.f32.mrb[0].mxu0
    %v4963 = vadd.f32 0.0, %v4962
    %4964 = vmatprep.mubr.f32.mxu0 %v4635
    %4965 = vmatmul.mubr.f32.gmra.mrb[0].mxu0 %v4634
    %v4966 = vpop.f32.mrb[0].mxu0
    %v4967 = vadd.f32 0.0, %v4966
    %v4968 = vpop.f32.mrb[0].mxu0
    %v4969 = vadd.f32 0.0, %v4968
    %4970 = vdwg.mxu0
    %4971 = vmatprep.subr.mxu0 %v4767
    %4972 = vmatpush1.msra.mxu0 %v4766
    %4973 = vmatprep.subr.mxu0 %v4771
    %4974 = vmatpush1.msra.mxu0 %v4770
    %4975 = vmatprep.subr.mxu0 %v4775
    %4976 = vmatpush1.msra.mxu0 %v4774
    %4977 = vmatprep.subr.mxu0 %v4779
    %4978 = vmatpush1.msra.mxu0 %v4778
    %4979 = vmatprep.subr.mxu0 %v4783
    %4980 = vmatpush1.msra.mxu0 %v4782
    %4981 = vmatprep.subr.mxu0 %v4787
    %4982 = vmatpush1.msra.mxu0 %v4786
    %4983 = vmatprep.subr.mxu0 %v4791
    %4984 = vmatpush1.msra.mxu0 %v4790
    %4985 = vmatprep.subr.mxu0 %v4795
    %4986 = vmatpush1.msra.mxu0 %v4794
    %4987 = vmatprep.subr.mxu0 %v4799
    %4988 = vmatpush1.msra.mxu0 %v4798
    %4989 = vmatprep.subr.mxu0 %v4803
    %4990 = vmatpush1.msra.mxu0 %v4802
    %4991 = vmatprep.subr.mxu0 %v4807
    %4992 = vmatpush1.msra.mxu0 %v4806
    %4993 = vmatprep.subr.mxu0 %v4811
    %4994 = vmatpush1.msra.mxu0 %v4810
    %4995 = vmatprep.subr.mxu0 %v4815
    %4996 = vmatpush1.msra.mxu0 %v4814
    %4997 = vmatprep.subr.mxu0 %v4819
    %4998 = vmatpush1.msra.mxu0 %v4818
    %4999 = vmatprep.subr.mxu0 %v4823
    %5000 = vmatpush1.msra.mxu0 %v4822
    %5001 = vmatprep.subr.mxu0 %v4827
    %5002 = vmatpush1.msra.mxu0 %v4826
    %5003 = vmatprep.subr.mxu0 %v4831
    %5004 = vmatpush1.msra.mxu0 %v4830
    %5005 = vmatprep.subr.mxu0 %v4835
    %5006 = vmatpush1.msra.mxu0 %v4834
    %5007 = vmatprep.subr.mxu0 %v4839
    %5008 = vmatpush1.msra.mxu0 %v4838
    %5009 = vmatprep.subr.mxu0 %v4843
    %5010 = vmatpush1.msra.mxu0 %v4842
    %5011 = vmatprep.subr.mxu0 %v4847
    %5012 = vmatpush1.msra.mxu0 %v4846
    %5013 = vmatprep.subr.mxu0 %v4851
    %5014 = vmatpush1.msra.mxu0 %v4850
    %5015 = vmatprep.subr.mxu0 %v4855
    %5016 = vmatpush1.msra.mxu0 %v4854
    %5017 = vmatprep.subr.mxu0 %v4859
    %5018 = vmatpush1.msra.mxu0 %v4858
    %5019 = vmatprep.subr.mxu0 %v4863
    %5020 = vmatpush1.msra.mxu0 %v4862
    %5021 = vmatprep.subr.mxu0 %v4867
    %5022 = vmatpush1.msra.mxu0 %v4866
    %5023 = vmatprep.subr.mxu0 %v4871
    %5024 = vmatpush1.msra.mxu0 %v4870
    %5025 = vmatprep.subr.mxu0 %v4875
    %5026 = vmatpush1.msra.mxu0 %v4874
    %5027 = vmatprep.subr.mxu0 %v4879
    %5028 = vmatpush1.msra.mxu0 %v4878
    %5029 = vmatprep.subr.mxu0 %v4883
    %5030 = vmatpush1.msra.mxu0 %v4882
    %5031 = vmatprep.subr.mxu0 %v4887
    %5032 = vmatpush1.msra.mxu0 %v4886
    %5033 = vmatprep.subr.mxu0 %v4891
    %5034 = vmatpush1.msra.mxu0 %v4890
    %5035 = vmatprep.mubr.f32.mxu0 %v4633
    %5036 = vmatmul.mubr.f32.gmra.mrb[0].mxu0 %v4632
    %v5037 = vpop.f32.mrb[0].mxu0
    %v5038 = vadd.f32 %v4961, %v5037
    %v5039 = vpop.f32.mrb[0].mxu0
    %v5040 = vadd.f32 %v4963, %v5039
    %5041 = vmatprep.mubr.f32.mxu0 %v4637
    %5042 = vmatmul.mubr.f32.gmra.mrb[0].mxu0 %v4636
    %v5043 = vpop.f32.mrb[0].mxu0
    %v5044 = vadd.f32 %v4967, %v5043
    %v5045 = vpop.f32.mrb[0].mxu0
    %v5046 = vadd.f32 %v4969, %v5045
    %5047 = vdwg.mxu0
    %5048 = vmatprep.subr.mxu0 %v4641
    %5049 = vmatpush1.msra.mxu0 %v4640
    %5050 = vmatprep.subr.mxu0 %v4645
    %5051 = vmatpush1.msra.mxu0 %v4644
    %5052 = vmatprep.subr.mxu0 %v4649
    %5053 = vmatpush1.msra.mxu0 %v4648
    %5054 = vmatprep.subr.mxu0 %v4653
    %5055 = vmatpush1.msra.mxu0 %v4652
    %5056 = vmatprep.subr.mxu0 %v4657
    %5057 = vmatpush1.msra.mxu0 %v4656
    %5058 = vmatprep.subr.mxu0 %v4661
    %5059 = vmatpush1.msra.mxu0 %v4660
    %5060 = vmatprep.subr.mxu0 %v4665
    %5061 = vmatpush1.msra.mxu0 %v4664
    %5062 = vmatprep.subr.mxu0 %v4669
    %5063 = vmatpush1.msra.mxu0 %v4668
    %5064 = vmatprep.subr.mxu0 %v4673
    %5065 = vmatpush1.msra.mxu0 %v4672
    %5066 = vmatprep.subr.mxu0 %v4677
    %5067 = vmatpush1.msra.mxu0 %v4676
    %5068 = vmatprep.subr.mxu0 %v4681
    %5069 = vmatpush1.msra.mxu0 %v4680
    %5070 = vmatprep.subr.mxu0 %v4685
    %5071 = vmatpush1.msra.mxu0 %v4684
    %5072 = vmatprep.subr.mxu0 %v4689
    %5073 = vmatpush1.msra.mxu0 %v4688
    %5074 = vmatprep.subr.mxu0 %v4693
    %5075 = vmatpush1.msra.mxu0 %v4692
    %5076 = vmatprep.subr.mxu0 %v4697
    %5077 = vmatpush1.msra.mxu0 %v4696
    %5078 = vmatprep.subr.mxu0 %v4701
    %5079 = vmatpush1.msra.mxu0 %v4700
    %5080 = vmatprep.subr.mxu0 %v4705
    %5081 = vmatpush1.msra.mxu0 %v4704
    %5082 = vmatprep.subr.mxu0 %v4709
    %5083 = vmatpush1.msra.mxu0 %v4708
    %5084 = vmatprep.subr.mxu0 %v4713
    %5085 = vmatpush1.msra.mxu0 %v4712
    %5086 = vmatprep.subr.mxu0 %v4717
    %5087 = vmatpush1.msra.mxu0 %v4716
    %5088 = vmatprep.subr.mxu0 %v4721
    %5089 = vmatpush1.msra.mxu0 %v4720
    %5090 = vmatprep.subr.mxu0 %v4725
    %5091 = vmatpush1.msra.mxu0 %v4724
    %5092 = vmatprep.subr.mxu0 %v4729
    %5093 = vmatpush1.msra.mxu0 %v4728
    %5094 = vmatprep.subr.mxu0 %v4733
    %5095 = vmatpush1.msra.mxu0 %v4732
    %5096 = vmatprep.subr.mxu0 %v4737
    %5097 = vmatpush1.msra.mxu0 %v4736
    %5098 = vmatprep.subr.mxu0 %v4741
    %5099 = vmatpush1.msra.mxu0 %v4740
    %5100 = vmatprep.subr.mxu0 %v4745
    %5101 = vmatpush1.msra.mxu0 %v4744
    %5102 = vmatprep.subr.mxu0 %v4749
    %5103 = vmatpush1.msra.mxu0 %v4748
    %5104 = vmatprep.subr.mxu0 %v4753
    %5105 = vmatpush1.msra.mxu0 %v4752
    %5106 = vmatprep.subr.mxu0 %v4757
    %5107 = vmatpush1.msra.mxu0 %v4756
    %5108 = vmatprep.subr.mxu0 %v4761
    %5109 = vmatpush1.msra.mxu0 %v4760
    %5110 = vmatprep.subr.mxu0 %v4765
    %5111 = vmatpush1.msra.mxu0 %v4764
    %5112 = vmatprep.mubr.f32.mxu0 %v4631
    %5113 = vmatmul.mubr.f32.gmra.mrb[0].mxu0 %v4630
    %v5114 = vpop.f32.mrb[0].mxu0
    %v5115 = vadd.f32 0.0, %v5114
    %v5116 = vpop.f32.mrb[0].mxu0
    %v5117 = vadd.f32 0.0, %v5116
    %5118 = vmatprep.mubr.f32.mxu0 %v4635
    %5119 = vmatmul.mubr.f32.gmra.mrb[0].mxu0 %v4634
    %v5120 = vpop.f32.mrb[0].mxu0
    %v5121 = vadd.f32 0.0, %v5120
    %v5122 = vpop.f32.mrb[0].mxu0
    %v5123 = vadd.f32 0.0, %v5122
    %5124 = vdwg.mxu0
    %5125 = vmatprep.subr.mxu0 %v4769
    %5126 = vmatpush1.msra.mxu0 %v4768
    %5127 = vmatprep.subr.mxu0 %v4773
    %5128 = vmatpush1.msra.mxu0 %v4772
    %5129 = vmatprep.subr.mxu0 %v4777
    %5130 = vmatpush1.msra.mxu0 %v4776
    %5131 = vmatprep.subr.mxu0 %v4781
    %5132 = vmatpush1.msra.mxu0 %v4780
    %5133 = vmatprep.subr.mxu0 %v4785
    %5134 = vmatpush1.msra.mxu0 %v4784
    %5135 = vmatprep.subr.mxu0 %v4789
    %5136 = vmatpush1.msra.mxu0 %v4788
    %5137 = vmatprep.subr.mxu0 %v4793
    %5138 = vmatpush1.msra.mxu0 %v4792
    %5139 = vmatprep.subr.mxu0 %v4797
    %5140 = vmatpush1.msra.mxu0 %v4796
    %5141 = vmatprep.subr.mxu0 %v4801
    %5142 = vmatpush1.msra.mxu0 %v4800
    %5143 = vmatprep.subr.mxu0 %v4805
    %5144 = vmatpush1.msra.mxu0 %v4804
    %5145 = vmatprep.subr.mxu0 %v4809
    %5146 = vmatpush1.msra.mxu0 %v4808
    %5147 = vmatprep.subr.mxu0 %v4813
    %5148 = vmatpush1.msra.mxu0 %v4812
    %5149 = vmatprep.subr.mxu0 %v4817
    %5150 = vmatpush1.msra.mxu0 %v4816
    %5151 = vmatprep.subr.mxu0 %v4821
    %5152 = vmatpush1.msra.mxu0 %v4820
    %5153 = vmatprep.subr.mxu0 %v4825
    %5154 = vmatpush1.msra.mxu0 %v4824
    %5155 = vmatprep.subr.mxu0 %v4829
    %5156 = vmatpush1.msra.mxu0 %v4828
    %5157 = vmatprep.subr.mxu0 %v4833
    %5158 = vmatpush1.msra.mxu0 %v4832
    %5159 = vmatprep.subr.mxu0 %v4837
    %5160 = vmatpush1.msra.mxu0 %v4836
    %5161 = vmatprep.subr.mxu0 %v4841
    %5162 = vmatpush1.msra.mxu0 %v4840
    %5163 = vmatprep.subr.mxu0 %v4845
    %5164 = vmatpush1.msra.mxu0 %v4844
    %5165 = vmatprep.subr.mxu0 %v4849
    %5166 = vmatpush1.msra.mxu0 %v4848
    %5167 = vmatprep.subr.mxu0 %v4853
    %5168 = vmatpush1.msra.mxu0 %v4852
    %5169 = vmatprep.subr.mxu0 %v4857
    %5170 = vmatpush1.msra.mxu0 %v4856
    %5171 = vmatprep.subr.mxu0 %v4861
    %5172 = vmatpush1.msra.mxu0 %v4860
    %5173 = vmatprep.subr.mxu0 %v4865
    %5174 = vmatpush1.msra.mxu0 %v4864
    %5175 = vmatprep.subr.mxu0 %v4869
    %5176 = vmatpush1.msra.mxu0 %v4868
    %5177 = vmatprep.subr.mxu0 %v4873
    %5178 = vmatpush1.msra.mxu0 %v4872
    %5179 = vmatprep.subr.mxu0 %v4877
    %5180 = vmatpush1.msra.mxu0 %v4876
    %5181 = vmatprep.subr.mxu0 %v4881
    %5182 = vmatpush1.msra.mxu0 %v4880
    %5183 = vmatprep.subr.mxu0 %v4885
    %5184 = vmatpush1.msra.mxu0 %v4884
    %5185 = vmatprep.subr.mxu0 %v4889
    %5186 = vmatpush1.msra.mxu0 %v4888
    %5187 = vmatprep.subr.mxu0 %v4893
    %5188 = vmatpush1.msra.mxu0 %v4892
    %5189 = vmatprep.mubr.f32.mxu0 %v4633
    %5190 = vmatmul.mubr.f32.gmra.mrb[0].mxu0 %v4632
    %v5191 = vpop.f32.mrb[0].mxu0
    %v5192 = vadd.f32 %v5115, %v5191
    %v5193 = vpop.f32.mrb[0].mxu0
    %v5194 = vadd.f32 %v5117, %v5193
    %5195 = vmatprep.mubr.f32.mxu0 %v4637
    %5196 = vmatmul.mubr.f32.gmra.mrb[0].mxu0 %v4636
    %v5197 = vpop.f32.mrb[0].mxu0
    %v5198 = vadd.f32 %v5121, %v5197
    %v5199 = vpop.f32.mrb[0].mxu0
    %v5200 = vadd.f32 %v5123, %v5199
    %5201 = vdwg.mxu0
    %v5202 = vadd.f32 %v5038, %v5044
    %v5203 = vrot.slane %v5202, 4
    %v5204 = vadd.f32 %v5202, %v5203
    %v5205 = vrot.slane %v5204, 2
    %v5206 = vadd.f32 %v5204, %v5205
    %v5207 = vrot.slane %v5206, 1
    %v5208 = vadd.f32 %v5206, %v5207
    %v5209 = vadd.f32 %v5040, %v5046
    %v5210 = vrot.slane %v5209, 4
    %v5211 = vadd.f32 %v5209, %v5210
    %v5212 = vrot.slane %v5211, 2
    %v5213 = vadd.f32 %v5211, %v5212
    %v5214 = vrot.slane %v5213, 1
    %v5215 = vadd.f32 %v5213, %v5214
    %v5216 = vadd.f32 %v5192, %v5198
    %v5217 = vrot.slane %v5216, 4
    %v5218 = vadd.f32 %v5216, %v5217
    %v5219 = vrot.slane %v5218, 2
    %v5220 = vadd.f32 %v5218, %v5219
    %v5221 = vrot.slane %v5220, 1
    %v5222 = vadd.f32 %v5220, %v5221
    %v5223 = vadd.f32 %v5194, %v5200
    %v5224 = vrot.slane %v5223, 4
    %v5225 = vadd.f32 %v5223, %v5224
    %v5226 = vrot.slane %v5225, 2
    %v5227 = vadd.f32 %v5225, %v5226
    %v5228 = vrot.slane %v5227, 1
    %v5229 = vadd.f32 %v5227, %v5228
    %v5230 = vrcp.pop 256.0
    %v5231 = vmul.f32 %v5208, %v5230
    %v5232 = vmul.f32 %v5215, %v5230
    %v5233 = vmul.f32 %v5222, %v5230
    %v5234 = vmul.f32 %v5229, %v5230
    %v5235 = vsub.f32 %v4630, %v5231
    %v5236 = vsub.f32 %v4631, %v5232
    %v5237 = vsub.f32 %v4632, %v5233
    %v5238 = vsub.f32 %v4633, %v5234
    %v5239 = vsub.f32 %v4634, %v5231
    %v5240 = vsub.f32 %v4635, %v5232
    %v5241 = vsub.f32 %v4636, %v5233
    %v5242 = vsub.f32 %v4637, %v5234
    %v5243 = vmul.f32 %v5235, %v5235
    %v5244 = vmul.f32 %v5236, %v5236
    %v5245 = vmul.f32 %v5237, %v5237
    %v5246 = vmul.f32 %v5238, %v5238
    %v5247 = vmul.f32 %v5239, %v5239
    %v5248 = vmul.f32 %v5240, %v5240
    %v5249 = vmul.f32 %v5241, %v5241
    %v5250 = vmul.f32 %v5242, %v5242
    %5251 = vmatprep.subr.mxu0 %v4639
    %5252 = vmatpush1.msra.mxu0 %v4638
    %5253 = vmatprep.subr.mxu0 %v4643
    %5254 = vmatpush1.msra.mxu0 %v4642
    %5255 = vmatprep.subr.mxu0 %v4647
    %5256 = vmatpush1.msra.mxu0 %v4646
    %5257 = vmatprep.subr.mxu0 %v4651
    %5258 = vmatpush1.msra.mxu0 %v4650
    %5259 = vmatprep.subr.mxu0 %v4655
    %5260 = vmatpush1.msra.mxu0 %v4654
    %5261 = vmatprep.subr.mxu0 %v4659
    %5262 = vmatpush1.msra.mxu0 %v4658
    %5263 = vmatprep.subr.mxu0 %v4663
    %5264 = vmatpush1.msra.mxu0 %v4662
    %5265 = vmatprep.subr.mxu0 %v4667
    %5266 = vmatpush1.msra.mxu0 %v4666
    %5267 = vmatprep.subr.mxu0 %v4671
    %5268 = vmatpush1.msra.mxu0 %v4670
    %5269 = vmatprep.subr.mxu0 %v4675
    %5270 = vmatpush1.msra.mxu0 %v4674
    %5271 = vmatprep.subr.mxu0 %v4679
    %5272 = vmatpush1.msra.mxu0 %v4678
    %5273 = vmatprep.subr.mxu0 %v4683
    %5274 = vmatpush1.msra.mxu0 %v4682
    %5275 = vmatprep.subr.mxu0 %v4687
    %5276 = vmatpush1.msra.mxu0 %v4686
    %5277 = vmatprep.subr.mxu0 %v4691
    %5278 = vmatpush1.msra.mxu0 %v4690
    %5279 = vmatprep.subr.mxu0 %v4695
    %5280 = vmatpush1.msra.mxu0 %v4694
    %5281 = vmatprep.subr.mxu0 %v4699
    %5282 = vmatpush1.msra.mxu0 %v4698
    %5283 = vmatprep.subr.mxu0 %v4703
    %5284 = vmatpush1.msra.mxu0 %v4702
    %5285 = vmatprep.subr.mxu0 %v4707
    %5286 = vmatpush1.msra.mxu0 %v4706
    %5287 = vmatprep.subr.mxu0 %v4711
    %5288 = vmatpush1.msra.mxu0 %v4710
    %5289 = vmatprep.subr.mxu0 %v4715
    %5290 = vmatpush1.msra.mxu0 %v4714
    %5291 = vmatprep.subr.mxu0 %v4719
    %5292 = vmatpush1.msra.mxu0 %v4718
    %5293 = vmatprep.subr.mxu0 %v4723
    %5294 = vmatpush1.msra.mxu0 %v4722
    %5295 = vmatprep.subr.mxu0 %v4727
    %5296 = vmatpush1.msra.mxu0 %v4726
    %5297 = vmatprep.subr.mxu0 %v4731
    %5298 = vmatpush1.msra.mxu0 %v4730
    %5299 = vmatprep.subr.mxu0 %v4735
    %5300 = vmatpush1.msra.mxu0 %v4734
    %5301 = vmatprep.subr.mxu0 %v4739
    %5302 = vmatpush1.msra.mxu0 %v4738
    %5303 = vmatprep.subr.mxu0 %v4743
    %5304 = vmatpush1.msra.mxu0 %v4742
    %5305 = vmatprep.subr.mxu0 %v4747
    %5306 = vmatpush1.msra.mxu0 %v4746
    %5307 = vmatprep.subr.mxu0 %v4751
    %5308 = vmatpush1.msra.mxu0 %v4750
    %5309 = vmatprep.subr.mxu0 %v4755
    %5310 = vmatpush1.msra.mxu0 %v4754
    %5311 = vmatprep.subr.mxu0 %v4759
    %5312 = vmatpush1.msra.mxu0 %v4758
    %5313 = vmatprep.subr.mxu0 %v4763
    %5314 = vmatpush1.msra.mxu0 %v4762
    %5315 = vmatprep.mubr.f32.mxu0 %v5244
    %5316 = vmatmul.mubr.f32.gmra.mrb[0].mxu0 %v5243
    %v5317 = vpop.f32.mrb[0].mxu0
    %v5318 = vadd.f32 0.0, %v5317
    %v5319 = vpop.f32.mrb[0].mxu0
    %v5320 = vadd.f32 0.0, %v5319
    %5321 = vmatprep.mubr.f32.mxu0 %v5248
    %5322 = vmatmul.mubr.f32.gmra.mrb[0].mxu0 %v5247
    %v5323 = vpop.f32.mrb[0].mxu0
    %v5324 = vadd.f32 0.0, %v5323
    %v5325 = vpop.f32.mrb[0].mxu0
    %v5326 = vadd.f32 0.0, %v5325
    %5327 = vdwg.mxu0
    %5328 = vmatprep.subr.mxu0 %v4767
    %5329 = vmatpush1.msra.mxu0 %v4766
    %5330 = vmatprep.subr.mxu0 %v4771
    %5331 = vmatpush1.msra.mxu0 %v4770
    %5332 = vmatprep.subr.mxu0 %v4775
    %5333 = vmatpush1.msra.mxu0 %v4774
    %5334 = vmatprep.subr.mxu0 %v4779
    %5335 = vmatpush1.msra.mxu0 %v4778
    %5336 = vmatprep.subr.mxu0 %v4783
    %5337 = vmatpush1.msra.mxu0 %v4782
    %5338 = vmatprep.subr.mxu0 %v4787
    %5339 = vmatpush1.msra.mxu0 %v4786
    %5340 = vmatprep.subr.mxu0 %v4791
    %5341 = vmatpush1.msra.mxu0 %v4790
    %5342 = vmatprep.subr.mxu0 %v4795
    %5343 = vmatpush1.msra.mxu0 %v4794
    %5344 = vmatprep.subr.mxu0 %v4799
    %5345 = vmatpush1.msra.mxu0 %v4798
    %5346 = vmatprep.subr.mxu0 %v4803
    %5347 = vmatpush1.msra.mxu0 %v4802
    %5348 = vmatprep.subr.mxu0 %v4807
    %5349 = vmatpush1.msra.mxu0 %v4806
    %5350 = vmatprep.subr.mxu0 %v4811
    %5351 = vmatpush1.msra.mxu0 %v4810
    %5352 = vmatprep.subr.mxu0 %v4815
    %5353 = vmatpush1.msra.mxu0 %v4814
    %5354 = vmatprep.subr.mxu0 %v4819
    %5355 = vmatpush1.msra.mxu0 %v4818
    %5356 = vmatprep.subr.mxu0 %v4823
    %5357 = vmatpush1.msra.mxu0 %v4822
    %5358 = vmatprep.subr.mxu0 %v4827
    %5359 = vmatpush1.msra.mxu0 %v4826
    %5360 = vmatprep.subr.mxu0 %v4831
    %5361 = vmatpush1.msra.mxu0 %v4830
    %5362 = vmatprep.subr.mxu0 %v4835
    %5363 = vmatpush1.msra.mxu0 %v4834
    %5364 = vmatprep.subr.mxu0 %v4839
    %5365 = vmatpush1.msra.mxu0 %v4838
    %5366 = vmatprep.subr.mxu0 %v4843
    %5367 = vmatpush1.msra.mxu0 %v4842
    %5368 = vmatprep.subr.mxu0 %v4847
    %5369 = vmatpush1.msra.mxu0 %v4846
    %5370 = vmatprep.subr.mxu0 %v4851
    %5371 = vmatpush1.msra.mxu0 %v4850
    %5372 = vmatprep.subr.mxu0 %v4855
    %5373 = vmatpush1.msra.mxu0 %v4854
    %5374 = vmatprep.subr.mxu0 %v4859
    %5375 = vmatpush1.msra.mxu0 %v4858
    %5376 = vmatprep.subr.mxu0 %v4863
    %5377 = vmatpush1.msra.mxu0 %v4862
    %5378 = vmatprep.subr.mxu0 %v4867
    %5379 = vmatpush1.msra.mxu0 %v4866
    %5380 = vmatprep.subr.mxu0 %v4871
    %5381 = vmatpush1.msra.mxu0 %v4870
    %5382 = vmatprep.subr.mxu0 %v4875
    %5383 = vmatpush1.msra.mxu0 %v4874
    %5384 = vmatprep.subr.mxu0 %v4879
    %5385 = vmatpush1.msra.mxu0 %v4878
    %5386 = vmatprep.subr.mxu0 %v4883
    %5387 = vmatpush1.msra.mxu0 %v4882
    %5388 = vmatprep.subr.mxu0 %v4887
    %5389 = vmatpush1.msra.mxu0 %v4886
    %5390 = vmatprep.subr.mxu0 %v4891
    %5391 = vmatpush1.msra.mxu0 %v4890
    %5392 = vmatprep.mubr.f32.mxu0 %v5246
    %5393 = vmatmul.mubr.f32.gmra.mrb[0].mxu0 %v5245
    %v5394 = vpop.f32.mrb[0].mxu0
    %v5395 = vadd.f32 %v5318, %v5394
    %v5396 = vpop.f32.mrb[0].mxu0
    %v5397 = vadd.f32 %v5320, %v5396
    %5398 = vmatprep.mubr.f32.mxu0 %v5250
    %5399 = vmatmul.mubr.f32.gmra.mrb[0].mxu0 %v5249
    %v5400 = vpop.f32.mrb[0].mxu0
    %v5401 = vadd.f32 %v5324, %v5400
    %v5402 = vpop.f32.mrb[0].mxu0
    %v5403 = vadd.f32 %v5326, %v5402
    %5404 = vdwg.mxu0
    %5405 = vmatprep.subr.mxu0 %v4641
    %5406 = vmatpush1.msra.mxu0 %v4640
    %5407 = vmatprep.subr.mxu0 %v4645
    %5408 = vmatpush1.msra.mxu0 %v4644
    %5409 = vmatprep.subr.mxu0 %v4649
    %5410 = vmatpush1.msra.mxu0 %v4648
    %5411 = vmatprep.subr.mxu0 %v4653
    %5412 = vmatpush1.msra.mxu0 %v4652
    %5413 = vmatprep.subr.mxu0 %v4657
    %5414 = vmatpush1.msra.mxu0 %v4656
    %5415 = vmatprep.subr.mxu0 %v4661
    %5416 = vmatpush1.msra.mxu0 %v4660
    %5417 = vmatprep.subr.mxu0 %v4665
    %5418 = vmatpush1.msra.mxu0 %v4664
    %5419 = vmatprep.subr.mxu0 %v4669
    %5420 = vmatpush1.msra.mxu0 %v4668
    %5421 = vmatprep.subr.mxu0 %v4673
    %5422 = vmatpush1.msra.mxu0 %v4672
    %5423 = vmatprep.subr.mxu0 %v4677
    %5424 = vmatpush1.msra.mxu0 %v4676
    %5425 = vmatprep.subr.mxu0 %v4681
    %5426 = vmatpush1.msra.mxu0 %v4680
    %5427 = vmatprep.subr.mxu0 %v4685
    %5428 = vmatpush1.msra.mxu0 %v4684
    %5429 = vmatprep.subr.mxu0 %v4689
    %5430 = vmatpush1.msra.mxu0 %v4688
    %5431 = vmatprep.subr.mxu0 %v4693
    %5432 = vmatpush1.msra.mxu0 %v4692
    %5433 = vmatprep.subr.mxu0 %v4697
    %5434 = vmatpush1.msra.mxu0 %v4696
    %5435 = vmatprep.subr.mxu0 %v4701
    %5436 = vmatpush1.msra.mxu0 %v4700
    %5437 = vmatprep.subr.mxu0 %v4705
    %5438 = vmatpush1.msra.mxu0 %v4704
    %5439 = vmatprep.subr.mxu0 %v4709
    %5440 = vmatpush1.msra.mxu0 %v4708
    %5441 = vmatprep.subr.mxu0 %v4713
    %5442 = vmatpush1.msra.mxu0 %v4712
    %5443 = vmatprep.subr.mxu0 %v4717
    %5444 = vmatpush1.msra.mxu0 %v4716
    %5445 = vmatprep.subr.mxu0 %v4721
    %5446 = vmatpush1.msra.mxu0 %v4720
    %5447 = vmatprep.subr.mxu0 %v4725
    %5448 = vmatpush1.msra.mxu0 %v4724
    %5449 = vmatprep.subr.mxu0 %v4729
    %5450 = vmatpush1.msra.mxu0 %v4728
    %5451 = vmatprep.subr.mxu0 %v4733
    %5452 = vmatpush1.msra.mxu0 %v4732
    %5453 = vmatprep.subr.mxu0 %v4737
    %5454 = vmatpush1.msra.mxu0 %v4736
    %5455 = vmatprep.subr.mxu0 %v4741
    %5456 = vmatpush1.msra.mxu0 %v4740
    %5457 = vmatprep.subr.mxu0 %v4745
    %5458 = vmatpush1.msra.mxu0 %v4744
    %5459 = vmatprep.subr.mxu0 %v4749
    %5460 = vmatpush1.msra.mxu0 %v4748
    %5461 = vmatprep.subr.mxu0 %v4753
    %5462 = vmatpush1.msra.mxu0 %v4752
    %5463 = vmatprep.subr.mxu0 %v4757
    %5464 = vmatpush1.msra.mxu0 %v4756
    %5465 = vmatprep.subr.mxu0 %v4761
    %5466 = vmatpush1.msra.mxu0 %v4760
    %5467 = vmatprep.subr.mxu0 %v4765
    %5468 = vmatpush1.msra.mxu0 %v4764
    %5469 = vmatprep.mubr.f32.mxu0 %v5244
    %5470 = vmatmul.mubr.f32.gmra.mrb[0].mxu0 %v5243
    %v5471 = vpop.f32.mrb[0].mxu0
    %v5472 = vadd.f32 0.0, %v5471
    %v5473 = vpop.f32.mrb[0].mxu0
    %v5474 = vadd.f32 0.0, %v5473
    %5475 = vmatprep.mubr.f32.mxu0 %v5248
    %5476 = vmatmul.mubr.f32.gmra.mrb[0].mxu0 %v5247
    %v5477 = vpop.f32.mrb[0].mxu0
    %v5478 = vadd.f32 0.0, %v5477
    %v5479 = vpop.f32.mrb[0].mxu0
    %v5480 = vadd.f32 0.0, %v5479
    %5481 = vdwg.mxu0
    %5482 = vmatprep.subr.mxu0 %v4769
    %5483 = vmatpush1.msra.mxu0 %v4768
    %5484 = vmatprep.subr.mxu0 %v4773
    %5485 = vmatpush1.msra.mxu0 %v4772
    %5486 = vmatprep.subr.mxu0 %v4777
    %5487 = vmatpush1.msra.mxu0 %v4776
    %5488 = vmatprep.subr.mxu0 %v4781
    %5489 = vmatpush1.msra.mxu0 %v4780
    %5490 = vmatprep.subr.mxu0 %v4785
    %5491 = vmatpush1.msra.mxu0 %v4784
    %5492 = vmatprep.subr.mxu0 %v4789
    %5493 = vmatpush1.msra.mxu0 %v4788
    %5494 = vmatprep.subr.mxu0 %v4793
    %5495 = vmatpush1.msra.mxu0 %v4792
    %5496 = vmatprep.subr.mxu0 %v4797
    %5497 = vmatpush1.msra.mxu0 %v4796
    %5498 = vmatprep.subr.mxu0 %v4801
    %5499 = vmatpush1.msra.mxu0 %v4800
    %5500 = vmatprep.subr.mxu0 %v4805
    %5501 = vmatpush1.msra.mxu0 %v4804
    %5502 = vmatprep.subr.mxu0 %v4809
    %5503 = vmatpush1.msra.mxu0 %v4808
    %5504 = vmatprep.subr.mxu0 %v4813
    %5505 = vmatpush1.msra.mxu0 %v4812
    %5506 = vmatprep.subr.mxu0 %v4817
    %5507 = vmatpush1.msra.mxu0 %v4816
    %5508 = vmatprep.subr.mxu0 %v4821
    %5509 = vmatpush1.msra.mxu0 %v4820
    %5510 = vmatprep.subr.mxu0 %v4825
    %5511 = vmatpush1.msra.mxu0 %v4824
    %5512 = vmatprep.subr.mxu0 %v4829
    %5513 = vmatpush1.msra.mxu0 %v4828
    %5514 = vmatprep.subr.mxu0 %v4833
    %5515 = vmatpush1.msra.mxu0 %v4832
    %5516 = vmatprep.subr.mxu0 %v4837
    %5517 = vmatpush1.msra.mxu0 %v4836
    %5518 = vmatprep.subr.mxu0 %v4841
    %5519 = vmatpush1.msra.mxu0 %v4840
    %5520 = vmatprep.subr.mxu0 %v4845
    %5521 = vmatpush1.msra.mxu0 %v4844
    %5522 = vmatprep.subr.mxu0 %v4849
    %5523 = vmatpush1.msra.mxu0 %v4848
    %5524 = vmatprep.subr.mxu0 %v4853
    %5525 = vmatpush1.msra.mxu0 %v4852
    %5526 = vmatprep.subr.mxu0 %v4857
    %5527 = vmatpush1.msra.mxu0 %v4856
    %5528 = vmatprep.subr.mxu0 %v4861
    %5529 = vmatpush1.msra.mxu0 %v4860
    %5530 = vmatprep.subr.mxu0 %v4865
    %5531 = vmatpush1.msra.mxu0 %v4864
    %5532 = vmatprep.subr.mxu0 %v4869
    %5533 = vmatpush1.msra.mxu0 %v4868
    %5534 = vmatprep.subr.mxu0 %v4873
    %5535 = vmatpush1.msra.mxu0 %v4872
    %5536 = vmatprep.subr.mxu0 %v4877
    %5537 = vmatpush1.msra.mxu0 %v4876
    %5538 = vmatprep.subr.mxu0 %v4881
    %5539 = vmatpush1.msra.mxu0 %v4880
    %5540 = vmatprep.subr.mxu0 %v4885
    %5541 = vmatpush1.msra.mxu0 %v4884
    %5542 = vmatprep.subr.mxu0 %v4889
    %5543 = vmatpush1.msra.mxu0 %v4888
    %5544 = vmatprep.subr.mxu0 %v4893
    %5545 = vmatpush1.msra.mxu0 %v4892
    %5546 = vmatprep.mubr.f32.mxu0 %v5246
    %5547 = vmatmul.mubr.f32.gmra.mrb[0].mxu0 %v5245
    %v5548 = vpop.f32.mrb[0].mxu0
    %v5549 = vadd.f32 %v5472, %v5548
    %v5550 = vpop.f32.mrb[0].mxu0
    %v5551 = vadd.f32 %v5474, %v5550
    %5552 = vmatprep.mubr.f32.mxu0 %v5250
    %5553 = vmatmul.mubr.f32.gmra.mrb[0].mxu0 %v5249
    %v5554 = vpop.f32.mrb[0].mxu0
    %v5555 = vadd.f32 %v5478, %v5554
    %v5556 = vpop.f32.mrb[0].mxu0
    %v5557 = vadd.f32 %v5480, %v5556
    %5558 = vdwg.mxu0
    %v5559 = vadd.f32 %v5395, %v5401
    %v5560 = vrot.slane %v5559, 4
    %v5561 = vadd.f32 %v5559, %v5560
    %v5562 = vrot.slane %v5561, 2
    %v5563 = vadd.f32 %v5561, %v5562
    %v5564 = vrot.slane %v5563, 1
    %v5565 = vadd.f32 %v5563, %v5564
    %v5566 = vadd.f32 %v5397, %v5403
    %v5567 = vrot.slane %v5566, 4
    %v5568 = vadd.f32 %v5566, %v5567
    %v5569 = vrot.slane %v5568, 2
    %v5570 = vadd.f32 %v5568, %v5569
    %v5571 = vrot.slane %v5570, 1
    %v5572 = vadd.f32 %v5570, %v5571
    %v5573 = vadd.f32 %v5549, %v5555
    %v5574 = vrot.slane %v5573, 4
    %v5575 = vadd.f32 %v5573, %v5574
    %v5576 = vrot.slane %v5575, 2
    %v5577 = vadd.f32 %v5575, %v5576
    %v5578 = vrot.slane %v5577, 1
    %v5579 = vadd.f32 %v5577, %v5578
    %v5580 = vadd.f32 %v5551, %v5557
    %v5581 = vrot.slane %v5580, 4
    %v5582 = vadd.f32 %v5580, %v5581
    %v5583 = vrot.slane %v5582, 2
    %v5584 = vadd.f32 %v5582, %v5583
    %v5585 = vrot.slane %v5584, 1
    %v5586 = vadd.f32 %v5584, %v5585
    %v5587 = vmul.f32 %v5565, %v5230
    %v5588 = vmul.f32 %v5572, %v5230
    %v5589 = vmul.f32 %v5579, %v5230
    %v5590 = vmul.f32 %v5586, %v5230
    %v5591 = vadd.f32 %v5587, 1e-05
    %v5592 = vadd.f32 %v5588, 1e-05
    %v5593 = vadd.f32 %v5589, 1e-05
    %v5594 = vadd.f32 %v5590, 1e-05
    %v5595 = vrsqrt.pop %v5591
    %v5596 = vrsqrt.pop %v5592
    %v5597 = vrsqrt.pop %v5593
    %v5598 = vrsqrt.pop %v5594
    %v5599 = vmul.f32 %v5235, %v5595
    %v5600 = vmul.f32 %v5236, %v5596
    %v5601 = vmul.f32 %v5237, %v5597
    %v5602 = vmul.f32 %v5238, %v5598
    %v5603 = vmul.f32 %v5239, %v5595
    %v5604 = vmul.f32 %v5240, %v5596
    %v5605 = vmul.f32 %v5241, %v5597
    %v5606 = vmul.f32 %v5242, %v5598
    %v5607 = vld [vmem:[#allocation15] sm:$0xf]
    %v5609 = vlaneseq
    %v5610 = vshrl.u32 %v5609, 7
    %v5611 = vsub.s32 0, %v5610
    %v5612 = vrot.slane %v5607, %v5611
    %v5613 = vlaneseq
    %v5614 = vshrl.u32 %v5613, 7
    %v5615 = vsub.s32 1, %v5614
    %v5616 = vrot.slane %v5607, %v5615
    %v5617 = vlaneseq
    %v5618 = vshrl.u32 %v5617, 7
    %v5619 = vsub.s32 2, %v5618
    %v5620 = vrot.slane %v5607, %v5619
    %v5621 = vlaneseq
    %v5622 = vshrl.u32 %v5621, 7
    %v5623 = vsub.s32 3, %v5622
    %v5624 = vrot.slane %v5607, %v5623
    %v5629 = vmul.f32 %v5599, %v5612
    %v5630 = vmul.f32 %v5600, %v5616
    %v5631 = vmul.f32 %v5601, %v5620
    %v5632 = vmul.f32 %v5602, %v5624
    %v5633 = vmul.f32 %v5603, %v5612
    %v5634 = vmul.f32 %v5604, %v5616
    %v5635 = vmul.f32 %v5605, %v5620
    %v5636 = vmul.f32 %v5606, %v5624
    %v5637 = vld [vmem:[#allocation17] sm:$0xf]
    %v5639 = vlaneseq
    %v5640 = vshrl.u32 %v5639, 7
    %v5641 = vsub.s32 0, %v5640
    %v5642 = vrot.slane %v5637, %v5641
    %v5643 = vlaneseq
    %v5644 = vshrl.u32 %v5643, 7
    %v5645 = vsub.s32 1, %v5644
    %v5646 = vrot.slane %v5637, %v5645
    %v5647 = vlaneseq
    %v5648 = vshrl.u32 %v5647, 7
    %v5649 = vsub.s32 2, %v5648
    %v5650 = vrot.slane %v5637, %v5649
    %v5651 = vlaneseq
    %v5652 = vshrl.u32 %v5651, 7
    %v5653 = vsub.s32 3, %v5652
    %v5654 = vrot.slane %v5637, %v5653
    %v5659 = vadd.f32 %v5629, %v5642
    %v5660 = vadd.f32 %v5630, %v5646
    %v5661 = vadd.f32 %v5631, %v5650
    %v5662 = vadd.f32 %v5632, %v5654
    %v5663 = vadd.f32 %v5633, %v5642
    %v5664 = vadd.f32 %v5634, %v5646
    %v5665 = vadd.f32 %v5635, %v5650
    %v5666 = vadd.f32 %v5636, %v5654
    %v5667 = vmax.f32 %v5659, 0.0
    %v5668 = vmax.f32 %v5660, 0.0
    %v5669 = vmax.f32 %v5661, 0.0
    %v5670 = vmax.f32 %v5662, 0.0
    %v5671 = vmax.f32 %v5663, 0.0
    %v5672 = vmax.f32 %v5664, 0.0
    %v5673 = vmax.f32 %v5665, 0.0
    %v5674 = vmax.f32 %v5666, 0.0
    %5675 = vst [vmem:[#allocation20] sm:$0xff] %v5667
    %5676 = vst [vmem:[#allocation20 + $0x8] sm:$0xff] %v5668
    %5677 = vst [vmem:[#allocation20 + $0x10] sm:$0xff] %v5669
    %5678 = vst [vmem:[#allocation20 + $0x18] sm:$0xff] %v5670
    %5679 = vst [vmem:[#allocation20 + $0x20] sm:$0xff] %v5671
    %5680 = vst [vmem:[#allocation20 + $0x28] sm:$0xff] %v5672
    %5681 = vst [vmem:[#allocation20 + $0x30] sm:$0xff] %v5673
    %5682 = vst [vmem:[#allocation20 + $0x38] sm:$0xff] %v5674
    // Predicated region
    $region82: #{tpu_custom_call.1} parent=1 // pred_check
      _
    $region83: #{tpu_custom_call.1} parent=1 // pred_check_branch
      %5684 = sbr.rel (0) target = $region85
    $region84: #{tpu_custom_call.1} parent=1 // pred_region
      %s5686 = ssub.s32 1024, 1024
      %5687 = vsyncadd [#allocation5], %s5686
      %s5688 = sshll.u32 [#allocation20], 4
      %s5689 = int_to_ptr.vmem [resolvable:$true] %s5688
      %5694 = dma.vmem_to_hbm [thread:$0]  %s5689, 1024, %s10, [#allocation5], 512, 512, 32
    $region85: #{tpu_custom_call.1} parent=1 // pred_fallthru
      _
    // Predicated region
    $region86: #{tpu_custom_call.1} parent=1 // pred_check
      _
    $region87: #{tpu_custom_call.1} parent=1 // pred_check_branch
      %5696 = sbr.rel (0) target = $region89
    $region88: #{tpu_custom_call.1} parent=1 // pred_region
      %5697 = dma.done [#allocation5], 1024
    $region89: #{tpu_custom_call.1} parent=1 // pred_fallthru
      _
    %5698 = vsyncpa [#allocation4], 1
    %5699 = vsyncpa [#allocation7], 1
    %5700 = vsyncpa [#allocation10], 1
    %5701 = vsyncpa [#allocation13], 1
    %5702 = vsyncpa [#allocation16], 1
    %5703 = vsyncpa [#allocation19], 1
    %5704 = vsyncpa [#allocation5], 1

</llo_original>
